<compile_context>
chip_gen: v5e
topology: v5e:2x2
jax: 0.10.0
libtpu: 0.0.40
codegen_flags: <defaults>
</compile_context>

<pallas_src>
import functools

import numpy as np

import jax
import jax.numpy as jnp
from jax.experimental import pallas as pl
from jax.experimental.pallas import tpu as pltpu


# --------------------------------------------------------------------------
# Kernel 1: separable bilinear x2 upsample + 1x1 conv + BN + ReLU
#           (two matmuls, lane-dense flattened (rows, W*C) layout)
# --------------------------------------------------------------------------
def _upsample_kernel(x_ref, ah_ref, m_ref, sc_ref, sh_ref, o_ref):
    # x_ref : (1, H, W*Cin)      NHWC input with (W, Cin) flattened into lanes
    # ah    : (2H, H)            1-D bilinear interp along H (align_corners=True)
    # m     : (W*Cin, 2W*Cout)   kron(A_w^T, w_1x1): width interp + 1x1 conv
    # sc/sh : (1, 2W*Cout)       folded BatchNorm scale/shift, tiled over W
    # o_ref : (1, 2H, 2W*Cout)   NHWC output with (W, Cout) flattened into lanes
    x2 = x_ref[...][0]                                                  # (H, W*Cin)
    t = jnp.dot(ah_ref[...], x2, preferred_element_type=jnp.float32)    # (2H, W*Cin)
    y = jnp.dot(t, m_ref[...], preferred_element_type=jnp.float32)      # (2H, 2W*Cout)
    y = jnp.maximum(y * sc_ref[...] + sh_ref[...], 0.0)                 # lane-dense
    o_ref[...] = y.reshape(1, *y.shape)


def upsample_conv1x1_bn_relu(x_nhwc, a_h, m, scale_t, shift_t):
    n, h, w, cin = x_nhwc.shape
    ho = a_h.shape[0]
    wocout = m.shape[1]
    x2 = x_nhwc.reshape(n, h, w * cin)          # contiguous reshape: free in XLA
    return pl.pallas_call(
        _upsample_kernel,
        out_shape=jax.ShapeDtypeStruct((n, ho, wocout), jnp.float32),
        grid=(n,),
        in_specs=[
            pl.BlockSpec((1, h, w * cin), lambda i: (i, 0, 0)),
            pl.BlockSpec((ho, h), lambda i: (0, 0)),
            pl.BlockSpec((w * cin, wocout), lambda i: (0, 0)),
            pl.BlockSpec((1, wocout), lambda i: (0, 0)),
            pl.BlockSpec((1, wocout), lambda i: (0, 0)),
        ],
        out_specs=pl.BlockSpec((1, ho, wocout), lambda i: (i, 0, 0)),
        compiler_params=pltpu.CompilerParams(dimension_semantics=("parallel",)),
    )(x2, a_h, m, scale_t, shift_t)


# --------------------------------------------------------------------------
# Kernel 2: crop + concat + [3x3 conv -> BN -> ReLU] x2, fully fused.
#           Each conv is a single im2col matmul with K = 9 * Cin.
# --------------------------------------------------------------------------
def _pad1_hw(v):
    """Zero-pad a (H, W, C) value by 1 on both spatial dims (in-register)."""
    h, w, c = v.shape
    zcol = jnp.zeros((h, 1, c), v.dtype)
    v = jnp.concatenate([zcol, v, zcol], axis=1)
    zrow = jnp.zeros((1, w + 2, c), v.dtype)
    return jnp.concatenate([zrow, v, zrow], axis=0)


def _im2col_3x3(vpad):
    """(H+2, W+2, C) zero-padded value -> (H*W, 9*C) im2col patches.

    Column order is (dy, dx, c) with c fastest, matching w.reshape(9*C, Cout)
    of an HWIO (3, 3, C, Cout) weight.
    """
    hp, wp, c = vpad.shape
    h, w = hp - 2, wp - 2
    cols = [vpad[dy:dy + h, dx:dx + w, :] for dy in range(3) for dx in range(3)]
    pat = jnp.concatenate(cols, axis=-1)         # (H, W, 9*C)
    return pat.reshape(h * w, 9 * c)             # leading-dim merge only


def _convs_kernel(u_ref, s_ref, w0_ref, s0_ref, b0_ref, w1_ref, s1_ref, b1_ref,
                  o_ref, *, ht, wt, uy, ux, sy, sx):
    # u_ref : (1, Hu, Wu, C)    upsampled activations (kernel 1 output, NHWC)
    # s_ref : (1, Hs, Ws, C)    skip connection, full / un-cropped (NHWC)
    # w0    : (9*2C, C)         conv3_0 HWIO weight with taps folded into K
    # w1    : (9*C, Cf)         conv3_1 HWIO weight with taps folded into K
    # s*/b* : (1, C) / (1, Cf)  folded BatchNorm scale / shift
    # o_ref : (1, ht, wt, Cf)
    u = u_ref[...][0, uy:uy + ht, ux:ux + wt, :]     # center crop, static offsets
    s = s_ref[...][0, sy:sy + ht, sx:sx + wt, :]

    # conv3_0: concat(x, skip) done in-register, pad=1 halo in-register,
    # one matmul with K = 9 * 2C.
    cat = jnp.concatenate([u, s], axis=-1)           # (ht, wt, 2C): never hits HBM
    p0 = _im2col_3x3(_pad1_hw(cat))                  # (ht*wt, 18C)
    y0 = jnp.dot(p0, w0_ref[...], preferred_element_type=jnp.float32)
    y0 = jnp.maximum(y0 * s0_ref[...] + b0_ref[...], 0.0)

    # conv3_1: one matmul with K = 9 * C.
    c0 = s0_ref.shape[1]
    p1 = _im2col_3x3(_pad1_hw(y0.reshape(ht, wt, c0)))
    y1 = jnp.dot(p1, w1_ref[...], preferred_element_type=jnp.float32)
    y1 = jnp.maximum(y1 * s1_ref[...] + b1_ref[...], 0.0)

    cf = s1_ref.shape[1]
    o_ref[...] = y1.reshape(1, ht, wt, cf)


def fused_crop_concat_convs(u, skip, w0, s0, b0, w1, s1, b1):
    n, hu, wu, c = u.shape
    _, hs, ws, cs = skip.shape
    ht, wt = min(hu, hs), min(wu, ws)
    uy, ux = (hu - ht) // 2, (wu - wt) // 2
    sy, sx = (hs - ht) // 2, (ws - wt) // 2
    cf = w1.shape[1]
    kern = functools.partial(_convs_kernel, ht=ht, wt=wt,
                             uy=uy, ux=ux, sy=sy, sx=sx)
    return pl.pallas_call(
        kern,
        out_shape=jax.ShapeDtypeStruct((n, ht, wt, cf), jnp.float32),
        grid=(n,),
        in_specs=[
            pl.BlockSpec((1, hu, wu, c), lambda i: (i, 0, 0, 0)),
            pl.BlockSpec((1, hs, ws, cs), lambda i: (i, 0, 0, 0)),
            pl.BlockSpec(w0.shape, lambda i: (0, 0)),
            pl.BlockSpec(s0.shape, lambda i: (0, 0)),
            pl.BlockSpec(b0.shape, lambda i: (0, 0)),
            pl.BlockSpec(w1.shape, lambda i: (0, 0)),
            pl.BlockSpec(s1.shape, lambda i: (0, 0)),
            pl.BlockSpec(b1.shape, lambda i: (0, 0)),
        ],
        out_specs=pl.BlockSpec((1, ht, wt, cf), lambda i: (i, 0, 0, 0)),
        compiler_params=pltpu.CompilerParams(dimension_semantics=("parallel",)),
    )(u, skip, w0, s0, b0, w1, s1, b1)


# --------------------------------------------------------------------------
# Glue: interp matrices (trace-time constants), BN folding, params, forward
# --------------------------------------------------------------------------
def _bilinear_matrix_np(n_in, n_out):
    """(n_out, n_in) 1-D linear-interp matrix, align_corners=True (numpy const)."""
    a = np.zeros((n_out, n_in), np.float32)
    for i in range(n_out):
        src = i * (n_in - 1) / (n_out - 1) if n_out > 1 else 0.0
        lo = min(max(int(np.floor(src)), 0), n_in - 1)
        hi = min(lo + 1, n_in - 1)
        frac = src - lo
        a[i, lo] += 1.0 - frac
        a[i, hi] += frac
    return a


def _fold_bn(gamma, beta, rmean, rvar, eps=1e-5):
    scale = gamma / jnp.sqrt(rvar + eps)
    shift = beta - rmean * scale
    return scale, shift                              # (C,)


def init_up_block_params(key, in_channels, out_channels, shrink=True):
    c_out = out_channels
    c_fin = out_channels // 2 if shrink else out_channels
    ks = jax.random.split(key, 16)

    def normal(k, shape, s=0.1):
        return s * jax.random.normal(k, shape, dtype=jnp.float32)

    params = {}
    # upsampler: 1x1 conv (Cin, Cout) + BN
    params["w_up"] = normal(ks[0], (in_channels, c_out))
    params["up_scale"], params["up_shift"] = _fold_bn(
        1.0 + normal(ks[1], (c_out,)), normal(ks[2], (c_out,)),
        normal(ks[3], (c_out,)), 1.0 + jnp.abs(normal(ks[4], (c_out,))))
    # conv3_0: 3x3 (2*Cout -> Cout) HWIO (In order = [x-ch, skip-ch]) + BN
    params["w0"] = normal(ks[5], (3, 3, 2 * c_out, c_out))
    params["s0"], params["b0"] = _fold_bn(
        1.0 + normal(ks[6], (c_out,)), normal(ks[7], (c_out,)),
        normal(ks[8], (c_out,)), 1.0 + jnp.abs(normal(ks[9], (c_out,))))
    # conv3_1: 3x3 (Cout -> Cfin) HWIO + BN
    params["w1"] = normal(ks[10], (3, 3, c_out, c_fin))
    params["s1"], params["b1"] = _fold_bn(
        1.0 + normal(ks[11], (c_fin,)), normal(ks[12], (c_fin,)),
        normal(ks[13], (c_fin,)), 1.0 + jnp.abs(normal(ks[14], (c_fin,))))
    return params


def up_block_forward(params, x_nchw, skip_nchw):
    # boundary: NCHW (PyTorch convention) -> NHWC (kernel layout)
    x = jnp.transpose(x_nchw, (0, 2, 3, 1)).astype(jnp.float32)
    skip = jnp.transpose(skip_nchw, (0, 2, 3, 1)).astype(jnp.float32)

    n, h, w, cin = x.shape
    cout = params["w_up"].shape[1]
    ho, wo = 2 * h, 2 * w

    # Separable bilinear (align_corners=True) interp matrices, built on host at
    # trace time.  Width interp is fused with the 1x1 conv via a Kronecker
    # product: (W*Cin, 2W*Cout) -- small (O(W^2 * Cin * Cout)), not O((HW)^2).
    a_h = jnp.asarray(_bilinear_matrix_np(h, ho))                 # (2H, H)
    a_w = _bilinear_matrix_np(w, wo)                              # (2W, W) numpy
    m = jnp.kron(jnp.asarray(a_w.T), params["w_up"])              # (W*Cin, 2W*Cout)
    scale_t = jnp.tile(params["up_scale"], wo)[None, :]           # (1, 2W*Cout)
    shift_t = jnp.tile(params["up_shift"], wo)[None, :]

    u_flat = upsample_conv1x1_bn_relu(x, a_h, m, scale_t, shift_t)  # (N,2H,2W*Cout)
    u = u_flat.reshape(n, ho, wo, cout)                             # free reshape

    out_nhwc = fused_crop_concat_convs(
        u, skip,
        params["w0"].reshape(9 * 2 * cout, cout),
        params["s0"][None, :], params["b0"][None, :],
        params["w1"].reshape(9 * cout, -1),
        params["s1"][None, :], params["b1"][None, :])

    # back to NCHW to match the PyTorch module's output convention
    return jnp.transpose(out_nhwc, (0, 3, 1, 2))


if __name__ == "__main__":
    key = jax.random.PRNGKey(0)
    k_p, k_x, k_s = jax.random.split(key, 3)

    in_channels, out_channels = 8, 8
    N, H, W = 2, 8, 8                         # x spatial 8 -> upsampled to 16
    x = jax.random.normal(k_x, (N, in_channels, H, W), dtype=jnp.float32)
    skip = jax.random.normal(k_s, (N, out_channels, 2 * H, 2 * W), dtype=jnp.float32)

    params = init_up_block_params(k_p, in_channels, out_channels, shrink=True)

    fwd = jax.jit(functools.partial(up_block_forward, params))
    out = jax.block_until_ready(fwd(x, skip))

    expected = (N, out_channels // 2, 2 * H, 2 * W)
    assert out.shape == expected, (out.shape, expected)
    assert bool(jnp.all(jnp.isfinite(out)))
    print("KERNEL_OK")
</pallas_src>

<mosaic_0001>
module attributes {stable_mosaic.version = 11 : i64} {
  func.func @_upsample_kernel(%arg0: i32, %arg1: memref<1x8x64xf32, #tpu.memory_space<vmem>>, %arg2: memref<16x8xf32, #tpu.memory_space<vmem>>, %arg3: memref<64x128xf32, #tpu.memory_space<vmem>>, %arg4: memref<1x128xf32, #tpu.memory_space<vmem>>, %arg5: memref<1x128xf32, #tpu.memory_space<vmem>>, %arg6: memref<1x16x128xf32, #tpu.memory_space<vmem>>) attributes {dimension_semantics = [#tpu.dimension_semantics<parallel>], iteration_bounds = array<i64: 2>, scalar_prefetch = 0 : i64, scratch_operands = 0 : i64, tpu.core_type = #tpu.core_type<tc>, window_params = [{transform_indices = @transform_0, window_bounds = array<i64: 1, 8, 64>}, {pipeline_mode = #tpu.pipeline_mode<synchronous>, transform_indices = @transform_1, window_bounds = array<i64: 16, 8>}, {pipeline_mode = #tpu.pipeline_mode<synchronous>, transform_indices = @transform_2, window_bounds = array<i64: 64, 128>}, {pipeline_mode = #tpu.pipeline_mode<synchronous>, transform_indices = @transform_3, window_bounds = array<i64: 1, 128>}, {pipeline_mode = #tpu.pipeline_mode<synchronous>, transform_indices = @transform_4, window_bounds = array<i64: 1, 128>}, {transform_indices = @transform_5, window_bounds = array<i64: 1, 16, 128>}]} {
    %c0 = arith.constant 0 : index
    %c0_0 = arith.constant 0 : index
    %c0_1 = arith.constant 0 : index
    %0 = vector.load %arg1[%c0, %c0_0, %c0_1] : memref<1x8x64xf32, #tpu.memory_space<vmem>>, vector<1x8x64xf32>
    %1 = vector.shape_cast %0 : vector<1x8x64xf32> to vector<8x64xf32>
    %c0_2 = arith.constant 0 : index
    %c0_3 = arith.constant 0 : index
    %2 = vector.load %arg2[%c0_2, %c0_3] : memref<16x8xf32, #tpu.memory_space<vmem>>, vector<16x8xf32>
    %cst = arith.constant dense<0.000000e+00> : vector<16x64xf32>
    %3 = tpu.matmul %2, %1, %cst {dimension_numbers = #tpu.dot_dimension_numbers<[1], [0], [0], [1], [0, 0, 1, 1], [], []>} : vector<16x8xf32>, vector<8x64xf32>, vector<16x64xf32> -> vector<16x64xf32>
    %c0_4 = arith.constant 0 : index
    %c0_5 = arith.constant 0 : index
    %4 = vector.load %arg3[%c0_4, %c0_5] : memref<64x128xf32, #tpu.memory_space<vmem>>, vector<64x128xf32>
    %cst_6 = arith.constant dense<0.000000e+00> : vector<16x128xf32>
    %5 = tpu.matmul %3, %4, %cst_6 {dimension_numbers = #tpu.dot_dimension_numbers<[1], [0], [0], [1], [0, 0, 1, 1], [], []>} : vector<16x64xf32>, vector<64x128xf32>, vector<16x128xf32> -> vector<16x128xf32>
    %c0_7 = arith.constant 0 : index
    %c0_8 = arith.constant 0 : index
    %6 = vector.load %arg4[%c0_7, %c0_8] : memref<1x128xf32, #tpu.memory_space<vmem>>, vector<1x128xf32>
    %7 = vector.broadcast %6 : vector<1x128xf32> to vector<16x128xf32>
    %8 = arith.mulf %5, %7 : vector<16x128xf32>
    %c0_9 = arith.constant 0 : index
    %c0_10 = arith.constant 0 : index
    %9 = vector.load %arg5[%c0_9, %c0_10] : memref<1x128xf32, #tpu.memory_space<vmem>>, vector<1x128xf32>
    %10 = vector.broadcast %9 : vector<1x128xf32> to vector<16x128xf32>
    %11 = arith.addf %8, %10 : vector<16x128xf32>
    %cst_11 = arith.constant 0.000000e+00 : f32
    %12 = vector.broadcast %cst_11 : f32 to vector<16x128xf32>
    %13 = arith.maximumf %11, %12 : vector<16x128xf32>
    %14 = vector.shape_cast %13 : vector<16x128xf32> to vector<1x16x128xf32>
    %c0_12 = arith.constant 0 : index
    %c0_13 = arith.constant 0 : index
    %c0_14 = arith.constant 0 : index
    %15 = vector.load %arg6[%c0_12, %c0_13, %c0_14] : memref<1x16x128xf32, #tpu.memory_space<vmem>>, vector<1x16x128xf32>
    tpu.vector_store %arg6[%c0_12, %c0_13, %c0_14], %14 {strides = array<i32>} : memref<1x16x128xf32, #tpu.memory_space<vmem>>, vector<1x16x128xf32>,
    return
  }
  func.func @transform_0(%arg0: i32) -> (i32, i32, i32) {
    %c0_i32 = arith.constant 0 : i32
    %c0_i32_0 = arith.constant 0 : i32
    %c0_i32_1 = arith.constant 0 : i32
    return %arg0, %c0_i32, %c0_i32_0 : i32, i32, i32
  }
  func.func @transform_1(%arg0: i32) -> (i32, i32) {
    %c0_i32 = arith.constant 0 : i32
    %c0_i32_0 = arith.constant 0 : i32
    %c0_i32_1 = arith.constant 0 : i32
    return %c0_i32, %c0_i32_0 : i32, i32
  }
  func.func @transform_2(%arg0: i32) -> (i32, i32) {
    %c0_i32 = arith.constant 0 : i32
    %c0_i32_0 = arith.constant 0 : i32
    %c0_i32_1 = arith.constant 0 : i32
    return %c0_i32, %c0_i32_0 : i32, i32
  }
  func.func @transform_3(%arg0: i32) -> (i32, i32) {
    %c0_i32 = arith.constant 0 : i32
    %c0_i32_0 = arith.constant 0 : i32
    %c0_i32_1 = arith.constant 0 : i32
    return %c0_i32, %c0_i32_0 : i32, i32
  }
  func.func @transform_4(%arg0: i32) -> (i32, i32) {
    %c0_i32 = arith.constant 0 : i32
    %c0_i32_0 = arith.constant 0 : i32
    %c0_i32_1 = arith.constant 0 : i32
    return %c0_i32, %c0_i32_0 : i32, i32
  }
  func.func @transform_5(%arg0: i32) -> (i32, i32, i32) {
    %c0_i32 = arith.constant 0 : i32
    %c0_i32_0 = arith.constant 0 : i32
    %c0_i32_1 = arith.constant 0 : i32
    return %arg0, %c0_i32, %c0_i32_0 : i32, i32, i32
  }
}

module attributes {stable_mosaic.version = 11 : i64} {
  func.func @_convs_kernel(%arg0: i32, %arg1: memref<1x16x16x8xf32, #tpu.memory_space<vmem>>, %arg2: memref<1x16x16x8xf32, #tpu.memory_space<vmem>>, %arg3: memref<144x8xf32, #tpu.memory_space<vmem>>, %arg4: memref<1x8xf32, #tpu.memory_space<vmem>>, %arg5: memref<1x8xf32, #tpu.memory_space<vmem>>, %arg6: memref<72x4xf32, #tpu.memory_space<vmem>>, %arg7: memref<1x4xf32, #tpu.memory_space<vmem>>, %arg8: memref<1x4xf32, #tpu.memory_space<vmem>>, %arg9: memref<1x16x16x4xf32, #tpu.memory_space<vmem>>) attributes {dimension_semantics = [#tpu.dimension_semantics<parallel>], iteration_bounds = array<i64: 2>, scalar_prefetch = 0 : i64, scratch_operands = 0 : i64, tpu.core_type = #tpu.core_type<tc>, window_params = [{transform_indices = @transform_0, window_bounds = array<i64: 1, 16, 16, 8>}, {transform_indices = @transform_1, window_bounds = array<i64: 1, 16, 16, 8>}, {pipeline_mode = #tpu.pipeline_mode<synchronous>, transform_indices = @transform_2, window_bounds = array<i64: 144, 8>}, {pipeline_mode = #tpu.pipeline_mode<synchronous>, transform_indices = @transform_3, window_bounds = array<i64: 1, 8>}, {pipeline_mode = #tpu.pipeline_mode<synchronous>, transform_indices = @transform_4, window_bounds = array<i64: 1, 8>}, {pipeline_mode = #tpu.pipeline_mode<synchronous>, transform_indices = @transform_5, window_bounds = array<i64: 72, 4>}, {pipeline_mode = #tpu.pipeline_mode<synchronous>, transform_indices = @transform_6, window_bounds = array<i64: 1, 4>}, {pipeline_mode = #tpu.pipeline_mode<synchronous>, transform_indices = @transform_7, window_bounds = array<i64: 1, 4>}, {transform_indices = @transform_8, window_bounds = array<i64: 1, 16, 16, 4>}]} {
    %c0 = arith.constant 0 : index
    %c0_0 = arith.constant 0 : index
    %c0_1 = arith.constant 0 : index
    %c0_2 = arith.constant 0 : index
    %0 = vector.load %arg1[%c0, %c0_0, %c0_1, %c0_2] : memref<1x16x16x8xf32, #tpu.memory_space<vmem>>, vector<1x16x16x8xf32>
    %1 = vector.shape_cast %0 : vector<1x16x16x8xf32> to vector<16x16x8xf32>
    %c0_3 = arith.constant 0 : index
    %c0_4 = arith.constant 0 : index
    %c0_5 = arith.constant 0 : index
    %c0_6 = arith.constant 0 : index
    %2 = vector.load %arg2[%c0_3, %c0_4, %c0_5, %c0_6] : memref<1x16x16x8xf32, #tpu.memory_space<vmem>>, vector<1x16x16x8xf32>
    %3 = vector.shape_cast %2 : vector<1x16x16x8xf32> to vector<16x16x8xf32>
    %4 = tpu.concatenate %1, %3 in 2 : vector<16x16x8xf32>, vector<16x16x8xf32> -> vector<16x16x16xf32>
    %cst = arith.constant 0.000000e+00 : f32
    %5 = vector.broadcast %cst : f32 to vector<16x1x16xf32>
    %6 = tpu.concatenate %5, %4, %5 in 1 : vector<16x1x16xf32>, vector<16x16x16xf32>, vector<16x1x16xf32> -> vector<16x18x16xf32>
    %cst_7 = arith.constant 0.000000e+00 : f32
    %7 = vector.broadcast %cst_7 : f32 to vector<1x18x16xf32>
    %8 = tpu.concatenate %7, %6, %7 in 0 : vector<1x18x16xf32>, vector<16x18x16xf32>, vector<1x18x16xf32> -> vector<18x18x16xf32>
    %9 = vector.extract_strided_slice %8 {offsets = [0, 0, 0], sizes = [16, 16, 16], strides = [1, 1, 1]} : vector<18x18x16xf32> to vector<16x16x16xf32>
    %10 = vector.extract_strided_slice %8 {offsets = [0, 1, 0], sizes = [16, 16, 16], strides = [1, 1, 1]} : vector<18x18x16xf32> to vector<16x16x16xf32>
    %11 = vector.extract_strided_slice %8 {offsets = [0, 2, 0], sizes = [16, 16, 16], strides = [1, 1, 1]} : vector<18x18x16xf32> to vector<16x16x16xf32>
    %12 = vector.extract_strided_slice %8 {offsets = [1, 0, 0], sizes = [16, 16, 16], strides = [1, 1, 1]} : vector<18x18x16xf32> to vector<16x16x16xf32>
    %13 = vector.extract_strided_slice %8 {offsets = [1, 1, 0], sizes = [16, 16, 16], strides = [1, 1, 1]} : vector<18x18x16xf32> to vector<16x16x16xf32>
    %14 = vector.extract_strided_slice %8 {offsets = [1, 2, 0], sizes = [16, 16, 16], strides = [1, 1, 1]} : vector<18x18x16xf32> to vector<16x16x16xf32>
    %15 = vector.extract_strided_slice %8 {offsets = [2, 0, 0], sizes = [16, 16, 16], strides = [1, 1, 1]} : vector<18x18x16xf32> to vector<16x16x16xf32>
    %16 = vector.extract_strided_slice %8 {offsets = [2, 1, 0], sizes = [16, 16, 16], strides = [1, 1, 1]} : vector<18x18x16xf32> to vector<16x16x16xf32>
    %17 = vector.extract_strided_slice %8 {offsets = [2, 2, 0], sizes = [16, 16, 16], strides = [1, 1, 1]} : vector<18x18x16xf32> to vector<16x16x16xf32>
    %18 = tpu.concatenate %9, %10, %11, %12, %13, %14, %15, %16, %17 in 2 : vector<16x16x16xf32>, vector<16x16x16xf32>, vector<16x16x16xf32>, vector<16x16x16xf32>, vector<16x16x16xf32>, vector<16x16x16xf32>, vector<16x16x16xf32>, vector<16x16x16xf32>, vector<16x16x16xf32> -> vector<16x16x144xf32>
    %19 = vector.shape_cast %18 : vector<16x16x144xf32> to vector<256x144xf32>
    %c0_8 = arith.constant 0 : index
    %c0_9 = arith.constant 0 : index
    %20 = vector.load %arg3[%c0_8, %c0_9] : memref<144x8xf32, #tpu.memory_space<vmem>>, vector<144x8xf32>
    %cst_10 = arith.constant dense<0.000000e+00> : vector<256x8xf32>
    %21 = tpu.matmul %19, %20, %cst_10 {dimension_numbers = #tpu.dot_dimension_numbers<[1], [0], [0], [1], [0, 0, 1, 1], [], []>} : vector<256x144xf32>, vector<144x8xf32>, vector<256x8xf32> -> vector<256x8xf32>
    %c0_11 = arith.constant 0 : index
    %c0_12 = arith.constant 0 : index
    %22 = vector.load %arg4[%c0_11, %c0_12] : memref<1x8xf32, #tpu.memory_space<vmem>>, vector<1x8xf32>
    %23 = vector.broadcast %22 : vector<1x8xf32> to vector<256x8xf32>
    %24 = arith.mulf %21, %23 : vector<256x8xf32>
    %c0_13 = arith.constant 0 : index
    %c0_14 = arith.constant 0 : index
    %25 = vector.load %arg5[%c0_13, %c0_14] : memref<1x8xf32, #tpu.memory_space<vmem>>, vector<1x8xf32>
    %26 = vector.broadcast %25 : vector<1x8xf32> to vector<256x8xf32>
    %27 = arith.addf %24, %26 : vector<256x8xf32>
    %cst_15 = arith.constant 0.000000e+00 : f32
    %28 = vector.broadcast %cst_15 : f32 to vector<256x8xf32>
    %29 = arith.maximumf %27, %28 : vector<256x8xf32>
    %30 = vector.shape_cast %29 : vector<256x8xf32> to vector<16x16x8xf32>
    %cst_16 = arith.constant 0.000000e+00 : f32
    %31 = vector.broadcast %cst_16 : f32 to vector<16x1x8xf32>
    %32 = tpu.concatenate %31, %30, %31 in 1 : vector<16x1x8xf32>, vector<16x16x8xf32>, vector<16x1x8xf32> -> vector<16x18x8xf32>
    %cst_17 = arith.constant 0.000000e+00 : f32
    %33 = vector.broadcast %cst_17 : f32 to vector<1x18x8xf32>
    %34 = tpu.concatenate %33, %32, %33 in 0 : vector<1x18x8xf32>, vector<16x18x8xf32>, vector<1x18x8xf32> -> vector<18x18x8xf32>
    %35 = vector.extract_strided_slice %34 {offsets = [0, 0, 0], sizes = [16, 16, 8], strides = [1, 1, 1]} : vector<18x18x8xf32> to vector<16x16x8xf32>
    %36 = vector.extract_strided_slice %34 {offsets = [0, 1, 0], sizes = [16, 16, 8], strides = [1, 1, 1]} : vector<18x18x8xf32> to vector<16x16x8xf32>
    %37 = vector.extract_strided_slice %34 {offsets = [0, 2, 0], sizes = [16, 16, 8], strides = [1, 1, 1]} : vector<18x18x8xf32> to vector<16x16x8xf32>
    %38 = vector.extract_strided_slice %34 {offsets = [1, 0, 0], sizes = [16, 16, 8], strides = [1, 1, 1]} : vector<18x18x8xf32> to vector<16x16x8xf32>
    %39 = vector.extract_strided_slice %34 {offsets = [1, 1, 0], sizes = [16, 16, 8], strides = [1, 1, 1]} : vector<18x18x8xf32> to vector<16x16x8xf32>
    %40 = vector.extract_strided_slice %34 {offsets = [1, 2, 0], sizes = [16, 16, 8], strides = [1, 1, 1]} : vector<18x18x8xf32> to vector<16x16x8xf32>
    %41 = vector.extract_strided_slice %34 {offsets = [2, 0, 0], sizes = [16, 16, 8], strides = [1, 1, 1]} : vector<18x18x8xf32> to vector<16x16x8xf32>
    %42 = vector.extract_strided_slice %34 {offsets = [2, 1, 0], sizes = [16, 16, 8], strides = [1, 1, 1]} : vector<18x18x8xf32> to vector<16x16x8xf32>
    %43 = vector.extract_strided_slice %34 {offsets = [2, 2, 0], sizes = [16, 16, 8], strides = [1, 1, 1]} : vector<18x18x8xf32> to vector<16x16x8xf32>
    %44 = tpu.concatenate %35, %36, %37, %38, %39, %40, %41, %42, %43 in 2 : vector<16x16x8xf32>, vector<16x16x8xf32>, vector<16x16x8xf32>, vector<16x16x8xf32>, vector<16x16x8xf32>, vector<16x16x8xf32>, vector<16x16x8xf32>, vector<16x16x8xf32>, vector<16x16x8xf32> -> vector<16x16x72xf32>
    %45 = vector.shape_cast %44 : vector<16x16x72xf32> to vector<256x72xf32>
    %c0_18 = arith.constant 0 : index
    %c0_19 = arith.constant 0 : index
    %46 = vector.load %arg6[%c0_18, %c0_19] : memref<72x4xf32, #tpu.memory_space<vmem>>, vector<72x4xf32>
    %cst_20 = arith.constant dense<0.000000e+00> : vector<256x4xf32>
    %47 = tpu.matmul %45, %46, %cst_20 {dimension_numbers = #tpu.dot_dimension_numbers<[1], [0], [0], [1], [0, 0, 1, 1], [], []>} : vector<256x72xf32>, vector<72x4xf32>, vector<256x4xf32> -> vector<256x4xf32>
    %c0_21 = arith.constant 0 : index
    %c0_22 = arith.constant 0 : index
    %48 = vector.load %arg7[%c0_21, %c0_22] : memref<1x4xf32, #tpu.memory_space<vmem>>, vector<1x4xf32>
    %49 = vector.broadcast %48 : vector<1x4xf32> to vector<256x4xf32>
    %50 = arith.mulf %47, %49 : vector<256x4xf32>
    %c0_23 = arith.constant 0 : index
    %c0_24 = arith.constant 0 : index
    %51 = vector.load %arg8[%c0_23, %c0_24] : memref<1x4xf32, #tpu.memory_space<vmem>>, vector<1x4xf32>
    %52 = vector.broadcast %51 : vector<1x4xf32> to vector<256x4xf32>
    %53 = arith.addf %50, %52 : vector<256x4xf32>
    %cst_25 = arith.constant 0.000000e+00 : f32
    %54 = vector.broadcast %cst_25 : f32 to vector<256x4xf32>
    %55 = arith.maximumf %53, %54 : vector<256x4xf32>
    %56 = vector.shape_cast %55 : vector<256x4xf32> to vector<1x16x16x4xf32>
    %c0_26 = arith.constant 0 : index
    %c0_27 = arith.constant 0 : index
    %c0_28 = arith.constant 0 : index
    %c0_29 = arith.constant 0 : index
    %57 = vector.load %arg9[%c0_26, %c0_27, %c0_28, %c0_29] : memref<1x16x16x4xf32, #tpu.memory_space<vmem>>, vector<1x16x16x4xf32>
    tpu.vector_store %arg9[%c0_26, %c0_27, %c0_28, %c0_29], %56 {strides = array<i32>} : memref<1x16x16x4xf32, #tpu.memory_space<vmem>>, vector<1x16x16x4xf32>,
    return
  }
  func.func @transform_0(%arg0: i32) -> (i32, i32, i32, i32) {
    %c0_i32 = arith.constant 0 : i32
    %c0_i32_0 = arith.constant 0 : i32
    %c0_i32_1 = arith.constant 0 : i32
    %c0_i32_2 = arith.constant 0 : i32
    return %arg0, %c0_i32, %c0_i32_0, %c0_i32_1 : i32, i32, i32, i32
  }
  func.func @transform_1(%arg0: i32) -> (i32, i32, i32, i32) {
    %c0_i32 = arith.constant 0 : i32
    %c0_i32_0 = arith.constant 0 : i32
    %c0_i32_1 = arith.constant 0 : i32
    %c0_i32_2 = arith.constant 0 : i32
    return %arg0, %c0_i32, %c0_i32_0, %c0_i32_1 : i32, i32, i32, i32
  }
  func.func @transform_2(%arg0: i32) -> (i32, i32) {
    %c0_i32 = arith.constant 0 : i32
    %c0_i32_0 = arith.constant 0 : i32
    %c0_i32_1 = arith.constant 0 : i32
    return %c0_i32, %c0_i32_0 : i32, i32
  }
  func.func @transform_3(%arg0: i32) -> (i32, i32) {
    %c0_i32 = arith.constant 0 : i32
    %c0_i32_0 = arith.constant 0 : i32
    %c0_i32_1 = arith.constant 0 : i32
    return %c0_i32, %c0_i32_0 : i32, i32
  }
  func.func @transform_4(%arg0: i32) -> (i32, i32) {
    %c0_i32 = arith.constant 0 : i32
    %c0_i32_0 = arith.constant 0 : i32
    %c0_i32_1 = arith.constant 0 : i32
    return %c0_i32, %c0_i32_0 : i32, i32
  }
  func.func @transform_5(%arg0: i32) -> (i32, i32) {
    %c0_i32 = arith.constant 0 : i32
    %c0_i32_0 = arith.constant 0 : i32
    %c0_i32_1 = arith.constant 0 : i32
    return %c0_i32, %c0_i32_0 : i32, i32
  }
  func.func @transform_6(%arg0: i32) -> (i32, i32) {
    %c0_i32 = arith.constant 0 : i32
    %c0_i32_0 = arith.constant 0 : i32
    %c0_i32_1 = arith.constant 0 : i32
    return %c0_i32, %c0_i32_0 : i32, i32
  }
  func.func @transform_7(%arg0: i32) -> (i32, i32) {
    %c0_i32 = arith.constant 0 : i32
    %c0_i32_0 = arith.constant 0 : i32
    %c0_i32_1 = arith.constant 0 : i32
    return %c0_i32, %c0_i32_0 : i32, i32
  }
  func.func @transform_8(%arg0: i32) -> (i32, i32, i32, i32) {
    %c0_i32 = arith.constant 0 : i32
    %c0_i32_0 = arith.constant 0 : i32
    %c0_i32_1 = arith.constant 0 : i32
    %c0_i32_2 = arith.constant 0 : i32
    return %arg0, %c0_i32, %c0_i32_0, %c0_i32_1 : i32, i32, i32, i32
  }
}

</mosaic_0001>

<llo_original>
// kernel: tile.10
$region0: #{tile.10}
  #allocation0 [shape = 's32[1]{0}', space=sflag, size = 0x4, scoped, tag = 'scoped memory for tile.10']
  %s0 = inlined_call_operand.vmem [shape: f32[8], index: 0, kind: input, shape index: {}]
  %s1 = inlined_call_operand.vmem [shape: f32[16,8], index: 1, kind: output, shape index: {}]
  // Predicated region
  $region2: #{tile.10} parent=0 // pred_check
    _
  $region3: #{tile.10} parent=0 // pred_check_branch
    %3 = sbr.rel (0) target = $region5
  $region4: #{tile.10} parent=0 // pred_region
    _
  $region5: #{tile.10} parent=0 // pred_fallthru
    _
  %v4 = vld [vmem:[%s0] ss:$0 sm:$0xff]
  %5 = vst [vmem:[%s1] sm:$0xff] %v4
  %s6 = scalar_lea.vmem %s1, 8
  %7 = vst [vmem:[%s6] sm:$0xff] %v4

// kernel: tile.11
$region0: #{tile.11}
  %s0 = inlined_call_operand.vmem [shape: f32[16,8], index: 0, kind: input, shape index: {}]
  %s1 = inlined_call_operand.vmem [shape: f32[1,128], index: 1, kind: output, shape index: {}]
  $region1: #{tile.11} parent=0
    #allocation0 [shape = 'u8[4096]{0}', space=vmem, size = 0x1000, scoped, tag = 'scoped mem for output reshape']
    %v2 = vld [vmem:[%s0] sm:$0x1]
    %vm3 = vcmask 64512
    %4 = vst.msk [vmem:[#allocation0] sm:$0x1] %vm3, %v2
    %s5 = scalar_lea.vmem %s0, 15
    %v6 = vld [vmem:[%s5] sm:$0x1]
    %7 = vrot.lane.b32.xlu0 %v6, 120
    %v8 = vpop.permute.xlu0 %7
    %vm9 = vcmask 1048512
    %10 = vst.msk [vmem:[#allocation0] sm:$0x1] %vm9, %v8
    %s11 = scalar_lea.vmem %s0, 14
    %v12 = vld [vmem:[%s11] sm:$0x1]
    %13 = vrot.lane.b32.xlu0 %v12, 112
    %v14 = vpop.permute.xlu0 %13
    %vm15 = vcmask 982912
    %16 = vst.msk [vmem:[#allocation0] sm:$0x1] %vm15, %v14
    %s17 = scalar_lea.vmem %s0, 13
    %v18 = vld [vmem:[%s17] sm:$0x1]
    %19 = vrot.lane.b32.xlu0 %v18, 104
    %v20 = vpop.permute.xlu0 %19
    %vm21 = vcmask 917312
    %22 = vst.msk [vmem:[#allocation0] sm:$0x1] %vm21, %v20
    %s23 = scalar_lea.vmem %s0, 12
    %v24 = vld [vmem:[%s23] sm:$0x1]
    %25 = vrot.lane.b32.xlu0 %v24, 96
    %v26 = vpop.permute.xlu0 %25
    %vm27 = vcmask 851712
    %28 = vst.msk [vmem:[#allocation0] sm:$0x1] %vm27, %v26
    %s29 = scalar_lea.vmem %s0, 11
    %v30 = vld [vmem:[%s29] sm:$0x1]
    %31 = vrot.lane.b32.xlu0 %v30, 88
    %v32 = vpop.permute.xlu0 %31
    %vm33 = vcmask 786112
    %34 = vst.msk [vmem:[#allocation0] sm:$0x1] %vm33, %v32
    %s35 = scalar_lea.vmem %s0, 10
    %v36 = vld [vmem:[%s35] sm:$0x1]
    %37 = vrot.lane.b32.xlu0 %v36, 80
    %v38 = vpop.permute.xlu0 %37
    %vm39 = vcmask 720512
    %40 = vst.msk [vmem:[#allocation0] sm:$0x1] %vm39, %v38
    %s41 = scalar_lea.vmem %s0, 9
    %v42 = vld [vmem:[%s41] sm:$0x1]
    %43 = vrot.lane.b32.xlu0 %v42, 72
    %v44 = vpop.permute.xlu0 %43
    %vm45 = vcmask 654912
    %46 = vst.msk [vmem:[#allocation0] sm:$0x1] %vm45, %v44
    %s47 = scalar_lea.vmem %s0, 8
    %v48 = vld [vmem:[%s47] sm:$0x1]
    %49 = vrot.lane.b32.xlu0 %v48, 64
    %v50 = vpop.permute.xlu0 %49
    %vm51 = vcmask 589312
    %52 = vst.msk [vmem:[#allocation0] sm:$0x1] %vm51, %v50
    %s53 = scalar_lea.vmem %s0, 7
    %v54 = vld [vmem:[%s53] sm:$0x1]
    %55 = vrot.lane.b32.xlu0 %v54, 56
    %v56 = vpop.permute.xlu0 %55
    %vm57 = vcmask 523712
    %58 = vst.msk [vmem:[#allocation0] sm:$0x1] %vm57, %v56
    %s59 = scalar_lea.vmem %s0, 6
    %v60 = vld [vmem:[%s59] sm:$0x1]
    %61 = vrot.lane.b32.xlu0 %v60, 48
    %v62 = vpop.permute.xlu0 %61
    %vm63 = vcmask 458112
    %64 = vst.msk [vmem:[#allocation0] sm:$0x1] %vm63, %v62
    %s65 = scalar_lea.vmem %s0, 5
    %v66 = vld [vmem:[%s65] sm:$0x1]
    %67 = vrot.lane.b32.xlu0 %v66, 40
    %v68 = vpop.permute.xlu0 %67
    %vm69 = vcmask 392512
    %70 = vst.msk [vmem:[#allocation0] sm:$0x1] %vm69, %v68
    %s71 = scalar_lea.vmem %s0, 4
    %v72 = vld [vmem:[%s71] sm:$0x1]
    %73 = vrot.lane.b32.xlu0 %v72, 32
    %v74 = vpop.permute.xlu0 %73
    %vm75 = vcmask 326912
    %76 = vst.msk [vmem:[#allocation0] sm:$0x1] %vm75, %v74
    %s77 = scalar_lea.vmem %s0, 3
    %v78 = vld [vmem:[%s77] sm:$0x1]
    %79 = vrot.lane.b32.xlu0 %v78, 24
    %v80 = vpop.permute.xlu0 %79
    %vm81 = vcmask 261312
    %82 = vst.msk [vmem:[#allocation0] sm:$0x1] %vm81, %v80
    %s83 = scalar_lea.vmem %s0, 2
    %v84 = vld [vmem:[%s83] sm:$0x1]
    %85 = vrot.lane.b32.xlu0 %v84, 16
    %v86 = vpop.permute.xlu0 %85
    %vm87 = vcmask 195712
    %88 = vst.msk [vmem:[#allocation0] sm:$0x1] %vm87, %v86
    %s89 = scalar_lea.vmem %s0, 1
    %v90 = vld [vmem:[%s89] sm:$0x1]
    %91 = vrot.lane.b32.xlu0 %v90, 8
    %v92 = vpop.permute.xlu0 %91
    %vm93 = vcmask 130112
    %94 = vst.msk [vmem:[#allocation0] sm:$0x1] %vm93, %v92
    %s96 = ssub.s32 2, 1
    %v97 = vld [vmem:[#allocation0] sm:%s96]
    %s99 = ssub.s32 2, 1
    %100 = vst [vmem:[%s1] sm:%s99] %v97

// kernel: up_block_forward.2
$region0: #{up_block_forward.2}
  #allocation0 [shape = 'u32[]', space=smem, size = 0x4, offset = 0x4, fixed_abs, tag = 'smem constant byte address 0x4 - core index']
  #allocation1 [shape = 'u32[72,128]{1,0:T(1,128)}', space=vmem, size = 0x9000, scoped, tag = 'internal scratch']
  %s0 = inlined_call_operand.vmem [shape: f32[2,8,64], index: 0, kind: input, shape index: {}]
  %s1 = inlined_call_operand.vmem [shape: f32[16,8], index: 1, kind: input, shape index: {}]
  %s2 = inlined_call_operand.vmem [shape: f32[64,128], index: 2, kind: input, shape index: {}]
  %s3 = inlined_call_operand.vmem [shape: f32[1,128], index: 3, kind: input, shape index: {}]
  %s4 = inlined_call_operand.vmem [shape: f32[1,128], index: 4, kind: input, shape index: {}]
  %s5 = inlined_call_operand.vmem [shape: f32[2,16,128], index: 5, kind: output, shape index: {}]
  %s6 = sld [smem:[#allocation0]]
  $region53: #{up_block_forward.2} parent=0
    _
  %s8 = ssub.s32 1, %s6
  %s9 = scalar_select 0, %s8, %s6
  loop: start=0, step=1, limit=4
  $region2: #{up_block_forward.2} parent=0 // loop_pre_header
    _
  $region3: #{up_block_forward.2} parent=0 // loop_header
    %s11 = sphi 0, %s15
    %p12 = scmp.ge.s32.totalorder %s11, 4
    %s21 = sphi 0, %s23
    %s24 = sphi 0, %s21
    %s25 = sphi 0, %s24
    %s41 = sphi 0, %s25
    %s45 = sphi 0, %s45
    %s47 = sphi 0, %s45
    %s48 = sphi 0, %s47
    %s62 = sphi 0, %s48
    %s66 = sphi 0, %s66
    %s68 = sphi 0, %s66
    %s69 = sphi 0, %s68
    %s83 = sphi 0, %s69
    %s87 = sphi 0, %s87
    %s89 = sphi 0, %s87
    %s90 = sphi 0, %s89
    %s104 = sphi 0, %s90
    %s108 = sphi 0, %s108
    %s110 = sphi 0, %s108
    %s111 = sphi 0, %s110
    %s125 = sphi 0, %s111
    %s131 = sphi 0, %s133
    %s134 = sphi 0, %s131
    %s135 = sphi 0, %s134
    %s151 = sphi 0, %s135
  $region4: #{up_block_forward.2} parent=0 // loop_header_branch
    %14 = sbr.rel (%p12) target = $region8
  $region5: #{up_block_forward.2} parent=0 // loop_body
    %s16 = ssub.s32 %s11, 1
    %s17 = ssub.s32 %s11, 2
    %s18 = sadd.s32 %s11, 1
    %s19 = ssub.s32 %s11, %s18
    %p20 = scmp.eq.s32.totalorder %s19, 0
    %s22 = sadd.s32 %s21, 1
    %s23 = scalar_select %p20, %s21, %s22
    %p26 = pneg %p20
    %p27 = scmp.eq.s32.totalorder %s11, 1
    %p28 = por %p26, %p27
    %p29 = scmp.ne.s32.totalorder %s21, %s24
    %p30 = scmp.eq.s32.totalorder %s11, 0
    %p31 = por %p29, %p30
    %p32 = scmp.ne.s32.totalorder %s21, %s24
    %p33 = scmp.eq.s32.totalorder %s16, 1
    %p34 = por %p32, %p33
    %p35 = scmp.ne.s32.totalorder %s24, %s25
    %p36 = scmp.eq.s32.totalorder %s16, 0
    %p37 = por %p35, %p36
    %p38 = scmp.ne.s32.totalorder %s24, %s25
    %p39 = scmp.eq.s32.totalorder %s17, 1
    %p40 = por %p38, %p39
    %p42 = scmp.ne.s32.totalorder %s25, %s41
    %p43 = scmp.eq.s32.totalorder %s17, 0
    %p44 = por %p42, %p43
    %s46 = sadd.s32 %s45, 1
    %p49 = scmp.eq.s32.totalorder %s11, 1
    %p50 = scmp.ne.s32.totalorder %s45, %s47
    %p51 = scmp.eq.s32.totalorder %s11, 0
    %p52 = por %p50, %p51
    %p53 = scmp.ne.s32.totalorder %s45, %s47
    %p54 = scmp.eq.s32.totalorder %s16, 1
    %p55 = por %p53, %p54
    %p56 = scmp.ne.s32.totalorder %s47, %s48
    %p57 = scmp.eq.s32.totalorder %s16, 0
    %p58 = por %p56, %p57
    %p59 = scmp.ne.s32.totalorder %s47, %s48
    %p60 = scmp.eq.s32.totalorder %s17, 1
    %p61 = por %p59, %p60
    %p63 = scmp.ne.s32.totalorder %s48, %s62
    %p64 = scmp.eq.s32.totalorder %s17, 0
    %p65 = por %p63, %p64
    %s67 = sadd.s32 %s66, 1
    %p70 = scmp.eq.s32.totalorder %s11, 1
    %p71 = scmp.ne.s32.totalorder %s66, %s68
    %p72 = scmp.eq.s32.totalorder %s11, 0
    %p73 = por %p71, %p72
    %p74 = scmp.ne.s32.totalorder %s66, %s68
    %p75 = scmp.eq.s32.totalorder %s16, 1
    %p76 = por %p74, %p75
    %p77 = scmp.ne.s32.totalorder %s68, %s69
    %p78 = scmp.eq.s32.totalorder %s16, 0
    %p79 = por %p77, %p78
    %p80 = scmp.ne.s32.totalorder %s68, %s69
    %p81 = scmp.eq.s32.totalorder %s17, 1
    %p82 = por %p80, %p81
    %p84 = scmp.ne.s32.totalorder %s69, %s83
    %p85 = scmp.eq.s32.totalorder %s17, 0
    %p86 = por %p84, %p85
    %s88 = sadd.s32 %s87, 1
    %p91 = scmp.eq.s32.totalorder %s11, 1
    %p92 = scmp.ne.s32.totalorder %s87, %s89
    %p93 = scmp.eq.s32.totalorder %s11, 0
    %p94 = por %p92, %p93
    %p95 = scmp.ne.s32.totalorder %s87, %s89
    %p96 = scmp.eq.s32.totalorder %s16, 1
    %p97 = por %p95, %p96
    %p98 = scmp.ne.s32.totalorder %s89, %s90
    %p99 = scmp.eq.s32.totalorder %s16, 0
    %p100 = por %p98, %p99
    %p101 = scmp.ne.s32.totalorder %s89, %s90
    %p102 = scmp.eq.s32.totalorder %s17, 1
    %p103 = por %p101, %p102
    %p105 = scmp.ne.s32.totalorder %s90, %s104
    %p106 = scmp.eq.s32.totalorder %s17, 0
    %p107 = por %p105, %p106
    %s109 = sadd.s32 %s108, 1
    %p112 = scmp.eq.s32.totalorder %s11, 1
    %p113 = scmp.ne.s32.totalorder %s108, %s110
    %p114 = scmp.eq.s32.totalorder %s11, 0
    %p115 = por %p113, %p114
    %p116 = scmp.ne.s32.totalorder %s108, %s110
    %p117 = scmp.eq.s32.totalorder %s16, 1
    %p118 = por %p116, %p117
    %p119 = scmp.ne.s32.totalorder %s110, %s111
    %p120 = scmp.eq.s32.totalorder %s16, 0
    %p121 = por %p119, %p120
    %p122 = scmp.ne.s32.totalorder %s110, %s111
    %p123 = scmp.eq.s32.totalorder %s17, 1
    %p124 = por %p122, %p123
    %p126 = scmp.ne.s32.totalorder %s111, %s125
    %p127 = scmp.eq.s32.totalorder %s17, 0
    %p128 = por %p126, %p127
    %s129 = ssub.s32 %s11, %s18
    %p130 = scmp.eq.s32.totalorder %s129, 0
    %s132 = sadd.s32 %s131, 1
    %s133 = scalar_select %p130, %s131, %s132
    %p136 = pneg %p130
    %p137 = scmp.eq.s32.totalorder %s11, 1
    %p138 = por %p136, %p137
    %p139 = scmp.ne.s32.totalorder %s131, %s134
    %p140 = scmp.eq.s32.totalorder %s11, 0
    %p141 = por %p139, %p140
    %p142 = scmp.ne.s32.totalorder %s131, %s134
    %p143 = scmp.eq.s32.totalorder %s16, 1
    %p144 = por %p142, %p143
    %p145 = scmp.ne.s32.totalorder %s134, %s135
    %p146 = scmp.eq.s32.totalorder %s16, 0
    %p147 = por %p145, %p146
    %p148 = scmp.ne.s32.totalorder %s134, %s135
    %p149 = scmp.eq.s32.totalorder %s17, 1
    %p150 = por %p148, %p149
    %p152 = scmp.ne.s32.totalorder %s135, %s151
    %p153 = scmp.eq.s32.totalorder %s17, 0
    %p154 = por %p152, %p153
    %p155 = scmp.le.s32.totalorder 1, %s11
    %p156 = scmp.lt.s32.totalorder %s11, 3
    %p157 = pnand %p155, %p156
    %p158 = pneg %p157
    // Predicated region
    $region9: #{up_block_forward.2} parent=5 // pred_check
      _
    $region10: #{up_block_forward.2} parent=5 // pred_check_branch
      %160 = sbr.rel (%p157) target = $region12
    $region11: #{up_block_forward.2} parent=5 // pred_region
      %s161 = ssub.s32 %s11, 1
      // Predicated region
      $region13: #{up_block_forward.2} parent=11 // pred_check
        %p162 = pneg %p58
      $region14: #{up_block_forward.2} parent=11 // pred_check_branch
        %164 = sbr.rel (%p162) target = $region16
      $region15: #{up_block_forward.2} parent=11 // pred_region
        _
      $region16: #{up_block_forward.2} parent=11 // pred_fallthru
        _
      // Predicated region
      $region17: #{up_block_forward.2} parent=11 // pred_check
        %p165 = pneg %p79
      $region18: #{up_block_forward.2} parent=11 // pred_check_branch
        %167 = sbr.rel (%p165) target = $region20
      $region19: #{up_block_forward.2} parent=11 // pred_region
        _
      $region20: #{up_block_forward.2} parent=11 // pred_fallthru
        _
      // Predicated region
      $region21: #{up_block_forward.2} parent=11 // pred_check
        %p168 = pneg %p100
      $region22: #{up_block_forward.2} parent=11 // pred_check_branch
        %170 = sbr.rel (%p168) target = $region24
      $region23: #{up_block_forward.2} parent=11 // pred_region
        _
      $region24: #{up_block_forward.2} parent=11 // pred_fallthru
        _
      // Predicated region
      $region25: #{up_block_forward.2} parent=11 // pred_check
        %p171 = pneg %p121
      $region26: #{up_block_forward.2} parent=11 // pred_check_branch
        %173 = sbr.rel (%p171) target = $region28
      $region27: #{up_block_forward.2} parent=11 // pred_region
        _
      $region28: #{up_block_forward.2} parent=11 // pred_fallthru
        _
    $region12: #{up_block_forward.2} parent=5 // pred_fallthru
      _
    %p174 = scmp.lt.s32.totalorder %s11, 2
    // Predicated region
    $region29: #{up_block_forward.2} parent=5 // pred_check
      %p175 = pneg %p174
    $region30: #{up_block_forward.2} parent=5 // pred_check_branch
      %177 = sbr.rel (%p175) target = $region32
    $region31: #{up_block_forward.2} parent=5 // pred_region
      // Predicated region
      $region33: #{up_block_forward.2} parent=31 // pred_check
        %p178 = pneg %p31
      $region34: #{up_block_forward.2} parent=31 // pred_check_branch
        %180 = sbr.rel (%p178) target = $region36
      $region35: #{up_block_forward.2} parent=31 // pred_region
        %p181 = scmp.lt.s32.totalorder %s11, 1
        %s182 = scalar_select %p181, %s11, 1
        %s183 = smul.addr %s182, 8
        %s184 = scalar_lea.vmem %s0, %s183
      $region36: #{up_block_forward.2} parent=31 // pred_fallthru
        _
    $region32: #{up_block_forward.2} parent=5 // pred_fallthru
      _
    %p185 = scmp.le.s32.totalorder 1, %s11
    %p186 = scmp.lt.s32.totalorder %s11, 3
    %p187 = pnand %p185, %p186
    %p188 = pneg %p187
    // Predicated region
    $region37: #{up_block_forward.2} parent=5 // pred_check
      _
    $region38: #{up_block_forward.2} parent=5 // pred_check_branch
      %190 = sbr.rel (%p187) target = $region40
    $region39: #{up_block_forward.2} parent=5 // pred_region
      %s191 = ssub.s32 %s11, 1
      %p192 = scmp.lt.s32.totalorder %s16, 1
      %s193 = scalar_select %p192, %s16, 1
      %s194 = smul.addr %s193, 8
      %s195 = scalar_lea.vmem %s0, %s194
      %p196 = pneg %p37
      %p197 = pneg %p34
      %p198 = pneg %p58
      %p199 = pneg %p55
      %p200 = pneg %p79
      %p201 = pneg %p76
      %p202 = pneg %p100
      %p203 = pneg %p97
      %p204 = pneg %p121
      %p205 = pneg %p118
      %p206 = pneg %p147
      %p207 = pneg %p144
      %p208 = scmp.lt.s32.totalorder %s16, 1
      %s209 = scalar_select %p208, %s16, 1
      %s210 = smul.addr %s209, 2
      %s211 = smul.addr %s210, 8
      %s212 = scalar_lea.vmem %s5, %s211
      %p213 = scmp.lt.s32.totalorder %s16, 1
      %s214 = scalar_select %p213, %s16, 1
      %s215 = smul.addr %s214, 8
      %s216 = scalar_lea.vmem %s0, %s215
      %p217 = scmp.lt.s32.totalorder %s16, 1
      %s218 = scalar_select %p217, %s16, 1
      %s219 = smul.addr %s218, 2
      %s220 = smul.addr %s219, 8
      %s221 = scalar_lea.vmem %s5, %s220
      %v222 = vld [vmem:[%s216] sm:$0xff]
      %v223 = vld [vmem:[%s1] sm:$0xff]
      %v224 = vld [vmem:[%s1 + $0x8] sm:$0xff]
      %vm225 = vcmask 64512
      %v227 = vsel %vm225, %v223, 0
      %v230 = vsel %vm225, %v224, 0
      %232 = vmatpush.msra.mxu0 0.0
      %233 = vmatpush.msra.mxu0 0.0
      %234 = vmatpush.msra.mxu0 0.0
      %235 = vmatpush.msra.mxu0 0.0
      %236 = vmatpush.msra.mxu0 0.0
      %237 = vmatpush.msra.mxu0 0.0
      %238 = vmatpush.msra.mxu0 0.0
      %239 = vmatpush.msra.mxu0 0.0
      %240 = vmatpush.msra.mxu0 0.0
      %241 = vmatpush.msra.mxu0 0.0
      %242 = vmatpush.msra.mxu0 0.0
      %243 = vmatpush.msra.mxu0 0.0
      %244 = vmatpush.msra.mxu0 0.0
      %245 = vmatpush.msra.mxu0 0.0
      %246 = vmatpush.msra.mxu0 0.0
      %247 = vmatpush.msra.mxu0 %v222
      %248 = vmatmul.f32.gmra.mxu0 %v227
      %v249 = vpop.f32.mrf.mxu0
      %v250 = vadd.f32 0.0, %v249
      %251 = vmatmul.f32.gmra.mxu0 %v230
      %v252 = vpop.f32.mrf.mxu0
      %v253 = vadd.f32 0.0, %v252
      %254 = vdwg.mxu0
      %v255 = vld [vmem:[%s2] sm:$0xff]
      %v256 = vld [vmem:[%s2 + $0x8] sm:$0xff]
      %v257 = vld [vmem:[%s2 + $0x10] sm:$0xff]
      %v258 = vld [vmem:[%s2 + $0x18] sm:$0xff]
      %v259 = vld [vmem:[%s2 + $0x20] sm:$0xff]
      %v260 = vld [vmem:[%s2 + $0x28] sm:$0xff]
      %v261 = vld [vmem:[%s2 + $0x30] sm:$0xff]
      %v262 = vld [vmem:[%s2 + $0x38] sm:$0xff]
      %vm263 = vcmask 523264
      %v265 = vsel %vm263, %v250, 0
      %v268 = vsel %vm263, %v253, 0
      %270 = vmatpush.msra.mxu0 0.0
      %271 = vmatpush.msra.mxu0 0.0
      %272 = vmatpush.msra.mxu0 0.0
      %273 = vmatpush.msra.mxu0 0.0
      %274 = vmatpush.msra.mxu0 0.0
      %275 = vmatpush.msra.mxu0 0.0
      %276 = vmatpush.msra.mxu0 0.0
      %277 = vmatpush.msra.mxu0 0.0
      %278 = vmatpush.msra.mxu0 %v262
      %279 = vmatpush.msra.mxu0 %v261
      %280 = vmatpush.msra.mxu0 %v260
      %281 = vmatpush.msra.mxu0 %v259
      %282 = vmatpush.msra.mxu0 %v258
      %283 = vmatpush.msra.mxu0 %v257
      %284 = vmatpush.msra.mxu0 %v256
      %285 = vmatpush.msra.mxu0 %v255
      %286 = vmatmul.f32.gmra.mxu0 %v265
      %v287 = vpop.f32.mrf.mxu0
      %v288 = vadd.f32 0.0, %v287
      %289 = vmatmul.f32.gmra.mxu0 %v268
      %v290 = vpop.f32.mrf.mxu0
      %v291 = vadd.f32 0.0, %v290
      %292 = vdwg.mxu0
      %v293 = vld [vmem:[%s3] sm:$0x1]
      %v295 = vperm.slane %v293, 0
      %v297 = vmul.f32 %v288, %v295
      %v298 = vmul.f32 %v291, %v295
      %v299 = vld [vmem:[%s4] sm:$0x1]
      %v301 = vperm.slane %v299, 0
      %v303 = vadd.f32 %v297, %v301
      %v304 = vadd.f32 %v298, %v301
      %v305 = vmax.f32 %v303, 0.0
      %v306 = vmax.f32 %v304, 0.0
      %307 = vst [vmem:[%s221] sm:$0xff] %v305
      %308 = vst [vmem:[%s221 + $0x8] sm:$0xff] %v306
      %p309 = scmp.lt.s32.totalorder %s16, 1
      %s310 = scalar_select %p309, %s16, 1
      %s311 = smul.addr %s310, 2
      %s312 = smul.addr %s311, 8
      %s313 = scalar_lea.vmem %s5, %s312
      // Predicated region
      $region41: #{up_block_forward.2} parent=39 // pred_check
        %p314 = pneg %p144
      $region42: #{up_block_forward.2} parent=39 // pred_check_branch
        %316 = sbr.rel (%p314) target = $region44
      $region43: #{up_block_forward.2} parent=39 // pred_region
        _
      $region44: #{up_block_forward.2} parent=39 // pred_fallthru
        _
    $region40: #{up_block_forward.2} parent=5 // pred_fallthru
      _
    %p317 = scmp.le.s32.totalorder 2, %s11
    // Predicated region
    $region45: #{up_block_forward.2} parent=5 // pred_check
      %p318 = pneg %p317
    $region46: #{up_block_forward.2} parent=5 // pred_check_branch
      %320 = sbr.rel (%p318) target = $region48
    $region47: #{up_block_forward.2} parent=5 // pred_region
      %s321 = ssub.s32 %s11, 2
      // Predicated region
      $region49: #{up_block_forward.2} parent=47 // pred_check
        %p322 = pneg %p150
      $region50: #{up_block_forward.2} parent=47 // pred_check_branch
        %324 = sbr.rel (%p322) target = $region52
      $region51: #{up_block_forward.2} parent=47 // pred_region
        %p325 = scmp.lt.s32.totalorder %s17, 1
        %s326 = scalar_select %p325, %s17, 1
        %s327 = smul.addr %s326, 2
        %s328 = smul.addr %s327, 8
        %s329 = scalar_lea.vmem %s5, %s328
      $region52: #{up_block_forward.2} parent=47 // pred_fallthru
        _
    $region48: #{up_block_forward.2} parent=5 // pred_fallthru
      _
  $region6: #{up_block_forward.2} parent=0 // loop_footer
    %s15 = sadd.s32 1, %s11
  $region7: #{up_block_forward.2} parent=0 // loop_footer_branch
    %10 = sbr.rel target = $region3
  $region8: #{up_block_forward.2} parent=0 // loop_exit
    _

// kernel: up_block_forward.3
$region0: #{up_block_forward.3}
  #allocation0 [shape = 'u32[]', space=smem, size = 0x4, offset = 0x4, fixed_abs, tag = 'smem constant byte address 0x4 - core index']
  #allocation1 [shape = 'u32[72,128]{1,0:T(1,128)}', space=vmem, size = 0x9000, scoped, tag = 'internal scratch']
  %s0 = inlined_call_operand.vmem [shape: f32[2,16,16,8], index: 0, kind: input, shape index: {}]
  %s1 = inlined_call_operand.vmem [shape: f32[2,16,16,8], index: 1, kind: input, shape index: {}]
  %s2 = inlined_call_operand.vmem [shape: f32[144,8], index: 2, kind: input, shape index: {}]
  %s3 = inlined_call_operand.vmem [shape: f32[1,8], index: 3, kind: input, shape index: {}]
  %s4 = inlined_call_operand.vmem [shape: f32[1,8], index: 4, kind: input, shape index: {}]
  %s5 = inlined_call_operand.vmem [shape: f32[72,4], index: 5, kind: input, shape index: {}]
  %s6 = inlined_call_operand.vmem [shape: f32[1,4], index: 6, kind: input, shape index: {}]
  %s7 = inlined_call_operand.vmem [shape: f32[1,4], index: 7, kind: input, shape index: {}]
  %s8 = inlined_call_operand.vmem [shape: f32[2,16,16,4], index: 8, kind: output, shape index: {}]
  %s9 = sld [smem:[#allocation0]]
  $region65: #{up_block_forward.3} parent=0
    _
  %s11 = ssub.s32 1, %s9
  %s12 = scalar_select 0, %s11, %s9
  loop: start=0, step=1, limit=4
  $region2: #{up_block_forward.3} parent=0 // loop_pre_header
    _
  $region3: #{up_block_forward.3} parent=0 // loop_header
    %s14 = sphi 0, %s18
    %p15 = scmp.ge.s32.totalorder %s14, 4
    %s24 = sphi 0, %s26
    %s27 = sphi 0, %s24
    %s28 = sphi 0, %s27
    %s44 = sphi 0, %s28
    %s50 = sphi 0, %s52
    %s53 = sphi 0, %s50
    %s54 = sphi 0, %s53
    %s70 = sphi 0, %s54
    %s74 = sphi 0, %s74
    %s76 = sphi 0, %s74
    %s77 = sphi 0, %s76
    %s91 = sphi 0, %s77
    %s95 = sphi 0, %s95
    %s97 = sphi 0, %s95
    %s98 = sphi 0, %s97
    %s112 = sphi 0, %s98
    %s116 = sphi 0, %s116
    %s118 = sphi 0, %s116
    %s119 = sphi 0, %s118
    %s133 = sphi 0, %s119
    %s137 = sphi 0, %s137
    %s139 = sphi 0, %s137
    %s140 = sphi 0, %s139
    %s154 = sphi 0, %s140
    %s158 = sphi 0, %s158
    %s160 = sphi 0, %s158
    %s161 = sphi 0, %s160
    %s175 = sphi 0, %s161
    %s179 = sphi 0, %s179
    %s181 = sphi 0, %s179
    %s182 = sphi 0, %s181
    %s196 = sphi 0, %s182
    %s202 = sphi 0, %s204
    %s205 = sphi 0, %s202
    %s206 = sphi 0, %s205
    %s222 = sphi 0, %s206
  $region4: #{up_block_forward.3} parent=0 // loop_header_branch
    %17 = sbr.rel (%p15) target = $region8
  $region5: #{up_block_forward.3} parent=0 // loop_body
    %s19 = ssub.s32 %s14, 1
    %s20 = ssub.s32 %s14, 2
    %s21 = sadd.s32 %s14, 1
    %s22 = ssub.s32 %s14, %s21
    %p23 = scmp.eq.s32.totalorder %s22, 0
    %s25 = sadd.s32 %s24, 1
    %s26 = scalar_select %p23, %s24, %s25
    %p29 = pneg %p23
    %p30 = scmp.eq.s32.totalorder %s14, 1
    %p31 = por %p29, %p30
    %p32 = scmp.ne.s32.totalorder %s24, %s27
    %p33 = scmp.eq.s32.totalorder %s14, 0
    %p34 = por %p32, %p33
    %p35 = scmp.ne.s32.totalorder %s24, %s27
    %p36 = scmp.eq.s32.totalorder %s19, 1
    %p37 = por %p35, %p36
    %p38 = scmp.ne.s32.totalorder %s27, %s28
    %p39 = scmp.eq.s32.totalorder %s19, 0
    %p40 = por %p38, %p39
    %p41 = scmp.ne.s32.totalorder %s27, %s28
    %p42 = scmp.eq.s32.totalorder %s20, 1
    %p43 = por %p41, %p42
    %p45 = scmp.ne.s32.totalorder %s28, %s44
    %p46 = scmp.eq.s32.totalorder %s20, 0
    %p47 = por %p45, %p46
    %s48 = ssub.s32 %s14, %s21
    %p49 = scmp.eq.s32.totalorder %s48, 0
    %s51 = sadd.s32 %s50, 1
    %s52 = scalar_select %p49, %s50, %s51
    %p55 = pneg %p49
    %p56 = scmp.eq.s32.totalorder %s14, 1
    %p57 = por %p55, %p56
    %p58 = scmp.ne.s32.totalorder %s50, %s53
    %p59 = scmp.eq.s32.totalorder %s14, 0
    %p60 = por %p58, %p59
    %p61 = scmp.ne.s32.totalorder %s50, %s53
    %p62 = scmp.eq.s32.totalorder %s19, 1
    %p63 = por %p61, %p62
    %p64 = scmp.ne.s32.totalorder %s53, %s54
    %p65 = scmp.eq.s32.totalorder %s19, 0
    %p66 = por %p64, %p65
    %p67 = scmp.ne.s32.totalorder %s53, %s54
    %p68 = scmp.eq.s32.totalorder %s20, 1
    %p69 = por %p67, %p68
    %p71 = scmp.ne.s32.totalorder %s54, %s70
    %p72 = scmp.eq.s32.totalorder %s20, 0
    %p73 = por %p71, %p72
    %s75 = sadd.s32 %s74, 1
    %p78 = scmp.eq.s32.totalorder %s14, 1
    %p79 = scmp.ne.s32.totalorder %s74, %s76
    %p80 = scmp.eq.s32.totalorder %s14, 0
    %p81 = por %p79, %p80
    %p82 = scmp.ne.s32.totalorder %s74, %s76
    %p83 = scmp.eq.s32.totalorder %s19, 1
    %p84 = por %p82, %p83
    %p85 = scmp.ne.s32.totalorder %s76, %s77
    %p86 = scmp.eq.s32.totalorder %s19, 0
    %p87 = por %p85, %p86
    %p88 = scmp.ne.s32.totalorder %s76, %s77
    %p89 = scmp.eq.s32.totalorder %s20, 1
    %p90 = por %p88, %p89
    %p92 = scmp.ne.s32.totalorder %s77, %s91
    %p93 = scmp.eq.s32.totalorder %s20, 0
    %p94 = por %p92, %p93
    %s96 = sadd.s32 %s95, 1
    %p99 = scmp.eq.s32.totalorder %s14, 1
    %p100 = scmp.ne.s32.totalorder %s95, %s97
    %p101 = scmp.eq.s32.totalorder %s14, 0
    %p102 = por %p100, %p101
    %p103 = scmp.ne.s32.totalorder %s95, %s97
    %p104 = scmp.eq.s32.totalorder %s19, 1
    %p105 = por %p103, %p104
    %p106 = scmp.ne.s32.totalorder %s97, %s98
    %p107 = scmp.eq.s32.totalorder %s19, 0
    %p108 = por %p106, %p107
    %p109 = scmp.ne.s32.totalorder %s97, %s98
    %p110 = scmp.eq.s32.totalorder %s20, 1
    %p111 = por %p109, %p110
    %p113 = scmp.ne.s32.totalorder %s98, %s112
    %p114 = scmp.eq.s32.totalorder %s20, 0
    %p115 = por %p113, %p114
    %s117 = sadd.s32 %s116, 1
    %p120 = scmp.eq.s32.totalorder %s14, 1
    %p121 = scmp.ne.s32.totalorder %s116, %s118
    %p122 = scmp.eq.s32.totalorder %s14, 0
    %p123 = por %p121, %p122
    %p124 = scmp.ne.s32.totalorder %s116, %s118
    %p125 = scmp.eq.s32.totalorder %s19, 1
    %p126 = por %p124, %p125
    %p127 = scmp.ne.s32.totalorder %s118, %s119
    %p128 = scmp.eq.s32.totalorder %s19, 0
    %p129 = por %p127, %p128
    %p130 = scmp.ne.s32.totalorder %s118, %s119
    %p131 = scmp.eq.s32.totalorder %s20, 1
    %p132 = por %p130, %p131
    %p134 = scmp.ne.s32.totalorder %s119, %s133
    %p135 = scmp.eq.s32.totalorder %s20, 0
    %p136 = por %p134, %p135
    %s138 = sadd.s32 %s137, 1
    %p141 = scmp.eq.s32.totalorder %s14, 1
    %p142 = scmp.ne.s32.totalorder %s137, %s139
    %p143 = scmp.eq.s32.totalorder %s14, 0
    %p144 = por %p142, %p143
    %p145 = scmp.ne.s32.totalorder %s137, %s139
    %p146 = scmp.eq.s32.totalorder %s19, 1
    %p147 = por %p145, %p146
    %p148 = scmp.ne.s32.totalorder %s139, %s140
    %p149 = scmp.eq.s32.totalorder %s19, 0
    %p150 = por %p148, %p149
    %p151 = scmp.ne.s32.totalorder %s139, %s140
    %p152 = scmp.eq.s32.totalorder %s20, 1
    %p153 = por %p151, %p152
    %p155 = scmp.ne.s32.totalorder %s140, %s154
    %p156 = scmp.eq.s32.totalorder %s20, 0
    %p157 = por %p155, %p156
    %s159 = sadd.s32 %s158, 1
    %p162 = scmp.eq.s32.totalorder %s14, 1
    %p163 = scmp.ne.s32.totalorder %s158, %s160
    %p164 = scmp.eq.s32.totalorder %s14, 0
    %p165 = por %p163, %p164
    %p166 = scmp.ne.s32.totalorder %s158, %s160
    %p167 = scmp.eq.s32.totalorder %s19, 1
    %p168 = por %p166, %p167
    %p169 = scmp.ne.s32.totalorder %s160, %s161
    %p170 = scmp.eq.s32.totalorder %s19, 0
    %p171 = por %p169, %p170
    %p172 = scmp.ne.s32.totalorder %s160, %s161
    %p173 = scmp.eq.s32.totalorder %s20, 1
    %p174 = por %p172, %p173
    %p176 = scmp.ne.s32.totalorder %s161, %s175
    %p177 = scmp.eq.s32.totalorder %s20, 0
    %p178 = por %p176, %p177
    %s180 = sadd.s32 %s179, 1
    %p183 = scmp.eq.s32.totalorder %s14, 1
    %p184 = scmp.ne.s32.totalorder %s179, %s181
    %p185 = scmp.eq.s32.totalorder %s14, 0
    %p186 = por %p184, %p185
    %p187 = scmp.ne.s32.totalorder %s179, %s181
    %p188 = scmp.eq.s32.totalorder %s19, 1
    %p189 = por %p187, %p188
    %p190 = scmp.ne.s32.totalorder %s181, %s182
    %p191 = scmp.eq.s32.totalorder %s19, 0
    %p192 = por %p190, %p191
    %p193 = scmp.ne.s32.totalorder %s181, %s182
    %p194 = scmp.eq.s32.totalorder %s20, 1
    %p195 = por %p193, %p194
    %p197 = scmp.ne.s32.totalorder %s182, %s196
    %p198 = scmp.eq.s32.totalorder %s20, 0
    %p199 = por %p197, %p198
    %s200 = ssub.s32 %s14, %s21
    %p201 = scmp.eq.s32.totalorder %s200, 0
    %s203 = sadd.s32 %s202, 1
    %s204 = scalar_select %p201, %s202, %s203
    %p207 = pneg %p201
    %p208 = scmp.eq.s32.totalorder %s14, 1
    %p209 = por %p207, %p208
    %p210 = scmp.ne.s32.totalorder %s202, %s205
    %p211 = scmp.eq.s32.totalorder %s14, 0
    %p212 = por %p210, %p211
    %p213 = scmp.ne.s32.totalorder %s202, %s205
    %p214 = scmp.eq.s32.totalorder %s19, 1
    %p215 = por %p213, %p214
    %p216 = scmp.ne.s32.totalorder %s205, %s206
    %p217 = scmp.eq.s32.totalorder %s19, 0
    %p218 = por %p216, %p217
    %p219 = scmp.ne.s32.totalorder %s205, %s206
    %p220 = scmp.eq.s32.totalorder %s20, 1
    %p221 = por %p219, %p220
    %p223 = scmp.ne.s32.totalorder %s206, %s222
    %p224 = scmp.eq.s32.totalorder %s20, 0
    %p225 = por %p223, %p224
    %p226 = scmp.le.s32.totalorder 1, %s14
    %p227 = scmp.lt.s32.totalorder %s14, 3
    %p228 = pnand %p226, %p227
    %p229 = pneg %p228
    // Predicated region
    $region9: #{up_block_forward.3} parent=5 // pred_check
      _
    $region10: #{up_block_forward.3} parent=5 // pred_check_branch
      %231 = sbr.rel (%p228) target = $region12
    $region11: #{up_block_forward.3} parent=5 // pred_region
      %s232 = ssub.s32 %s14, 1
      // Predicated region
      $region13: #{up_block_forward.3} parent=11 // pred_check
        %p233 = pneg %p87
      $region14: #{up_block_forward.3} parent=11 // pred_check_branch
        %235 = sbr.rel (%p233) target = $region16
      $region15: #{up_block_forward.3} parent=11 // pred_region
        _
      $region16: #{up_block_forward.3} parent=11 // pred_fallthru
        _
      // Predicated region
      $region17: #{up_block_forward.3} parent=11 // pred_check
        %p236 = pneg %p108
      $region18: #{up_block_forward.3} parent=11 // pred_check_branch
        %238 = sbr.rel (%p236) target = $region20
      $region19: #{up_block_forward.3} parent=11 // pred_region
        _
      $region20: #{up_block_forward.3} parent=11 // pred_fallthru
        _
      // Predicated region
      $region21: #{up_block_forward.3} parent=11 // pred_check
        %p239 = pneg %p129
      $region22: #{up_block_forward.3} parent=11 // pred_check_branch
        %241 = sbr.rel (%p239) target = $region24
      $region23: #{up_block_forward.3} parent=11 // pred_region
        _
      $region24: #{up_block_forward.3} parent=11 // pred_fallthru
        _
      // Predicated region
      $region25: #{up_block_forward.3} parent=11 // pred_check
        %p242 = pneg %p150
      $region26: #{up_block_forward.3} parent=11 // pred_check_branch
        %244 = sbr.rel (%p242) target = $region28
      $region27: #{up_block_forward.3} parent=11 // pred_region
        _
      $region28: #{up_block_forward.3} parent=11 // pred_fallthru
        _
      // Predicated region
      $region29: #{up_block_forward.3} parent=11 // pred_check
        %p245 = pneg %p171
      $region30: #{up_block_forward.3} parent=11 // pred_check_branch
        %247 = sbr.rel (%p245) target = $region32
      $region31: #{up_block_forward.3} parent=11 // pred_region
        _
      $region32: #{up_block_forward.3} parent=11 // pred_fallthru
        _
      // Predicated region
      $region33: #{up_block_forward.3} parent=11 // pred_check
        %p248 = pneg %p192
      $region34: #{up_block_forward.3} parent=11 // pred_check_branch
        %250 = sbr.rel (%p248) target = $region36
      $region35: #{up_block_forward.3} parent=11 // pred_region
        _
      $region36: #{up_block_forward.3} parent=11 // pred_fallthru
        _
    $region12: #{up_block_forward.3} parent=5 // pred_fallthru
      _
    %p251 = scmp.lt.s32.totalorder %s14, 2
    // Predicated region
    $region37: #{up_block_forward.3} parent=5 // pred_check
      %p252 = pneg %p251
    $region38: #{up_block_forward.3} parent=5 // pred_check_branch
      %254 = sbr.rel (%p252) target = $region40
    $region39: #{up_block_forward.3} parent=5 // pred_region
      // Predicated region
      $region41: #{up_block_forward.3} parent=39 // pred_check
        %p255 = pneg %p34
      $region42: #{up_block_forward.3} parent=39 // pred_check_branch
        %257 = sbr.rel (%p255) target = $region44
      $region43: #{up_block_forward.3} parent=39 // pred_region
        %p258 = scmp.lt.s32.totalorder %s14, 1
        %s259 = scalar_select %p258, %s14, 1
        %s260 = smul.addr %s259, 32
        %s261 = smul.addr %s260, 8
        %s262 = scalar_lea.vmem %s0, %s261
      $region44: #{up_block_forward.3} parent=39 // pred_fallthru
        _
      // Predicated region
      $region45: #{up_block_forward.3} parent=39 // pred_check
        %p263 = pneg %p60
      $region46: #{up_block_forward.3} parent=39 // pred_check_branch
        %265 = sbr.rel (%p263) target = $region48
      $region47: #{up_block_forward.3} parent=39 // pred_region
        %p266 = scmp.lt.s32.totalorder %s14, 1
        %s267 = scalar_select %p266, %s14, 1
        %s268 = smul.addr %s267, 32
        %s269 = smul.addr %s268, 8
        %s270 = scalar_lea.vmem %s1, %s269
      $region48: #{up_block_forward.3} parent=39 // pred_fallthru
        _
    $region40: #{up_block_forward.3} parent=5 // pred_fallthru
      _
    %p271 = scmp.le.s32.totalorder 1, %s14
    %p272 = scmp.lt.s32.totalorder %s14, 3
    %p273 = pnand %p271, %p272
    %p274 = pneg %p273
    // Predicated region
    $region49: #{up_block_forward.3} parent=5 // pred_check
      _
    $region50: #{up_block_forward.3} parent=5 // pred_check_branch
      %276 = sbr.rel (%p273) target = $region52
    $region51: #{up_block_forward.3} parent=5 // pred_region
      %s277 = ssub.s32 %s14, 1
      %p278 = scmp.lt.s32.totalorder %s19, 1
      %s279 = scalar_select %p278, %s19, 1
      %s280 = smul.addr %s279, 32
      %s281 = smul.addr %s280, 8
      %s282 = scalar_lea.vmem %s0, %s281
      %p283 = pneg %p40
      %p284 = pneg %p37
      %p285 = scmp.lt.s32.totalorder %s19, 1
      %s286 = scalar_select %p285, %s19, 1
      %s287 = smul.addr %s286, 32
      %s288 = smul.addr %s287, 8
      %s289 = scalar_lea.vmem %s1, %s288
      %p290 = pneg %p66
      %p291 = pneg %p63
      %p292 = pneg %p87
      %p293 = pneg %p84
      %p294 = pneg %p108
      %p295 = pneg %p105
      %p296 = pneg %p129
      %p297 = pneg %p126
      %p298 = pneg %p150
      %p299 = pneg %p147
      %p300 = pneg %p171
      %p301 = pneg %p168
      %p302 = pneg %p192
      %p303 = pneg %p189
      %p304 = pneg %p218
      %p305 = pneg %p215
      %p306 = scmp.lt.s32.totalorder %s19, 1
      %s307 = scalar_select %p306, %s19, 1
      %s308 = smul.addr %s307, 32
      %s309 = smul.addr %s308, 8
      %s310 = scalar_lea.vmem %s8, %s309
      %p311 = scmp.lt.s32.totalorder %s19, 1
      %s312 = scalar_select %p311, %s19, 1
      %s313 = smul.addr %s312, 32
      %s314 = smul.addr %s313, 8
      %s315 = scalar_lea.vmem %s0, %s314
      %p316 = scmp.lt.s32.totalorder %s19, 1
      %s317 = scalar_select %p316, %s19, 1
      %s318 = smul.addr %s317, 32
      %s319 = smul.addr %s318, 8
      %s320 = scalar_lea.vmem %s1, %s319
      %p321 = scmp.lt.s32.totalorder %s19, 1
      %s322 = scalar_select %p321, %s19, 1
      %s323 = smul.addr %s322, 32
      %s324 = smul.addr %s323, 8
      %s325 = scalar_lea.vmem %s8, %s324
      %v326 = vld [vmem:[%s315] sm:$0xff]
      %v327 = vld [vmem:[%s315 + $0x8] sm:$0xff]
      %v328 = vld [vmem:[%s315 + $0x10] sm:$0xff]
      %v329 = vld [vmem:[%s315 + $0x18] sm:$0xff]
      %v330 = vld [vmem:[%s315 + $0x20] sm:$0xff]
      %v331 = vld [vmem:[%s315 + $0x28] sm:$0xff]
      %v332 = vld [vmem:[%s315 + $0x30] sm:$0xff]
      %v333 = vld [vmem:[%s315 + $0x38] sm:$0xff]
      %v334 = vld [vmem:[%s315 + $0x40] sm:$0xff]
      %v335 = vld [vmem:[%s315 + $0x48] sm:$0xff]
      %v336 = vld [vmem:[%s315 + $0x50] sm:$0xff]
      %v337 = vld [vmem:[%s315 + $0x58] sm:$0xff]
      %v338 = vld [vmem:[%s315 + $0x60] sm:$0xff]
      %v339 = vld [vmem:[%s315 + $0x68] sm:$0xff]
      %v340 = vld [vmem:[%s315 + $0x70] sm:$0xff]
      %v341 = vld [vmem:[%s315 + $0x78] sm:$0xff]
      %v342 = vld [vmem:[%s315 + $0x80] sm:$0xff]
      %v343 = vld [vmem:[%s315 + $0x88] sm:$0xff]
      %v344 = vld [vmem:[%s315 + $0x90] sm:$0xff]
      %v345 = vld [vmem:[%s315 + $0x98] sm:$0xff]
      %v346 = vld [vmem:[%s315 + $0xa0] sm:$0xff]
      %v347 = vld [vmem:[%s315 + $0xa8] sm:$0xff]
      %v348 = vld [vmem:[%s315 + $0xb0] sm:$0xff]
      %v349 = vld [vmem:[%s315 + $0xb8] sm:$0xff]
      %v350 = vld [vmem:[%s315 + $0xc0] sm:$0xff]
      %v351 = vld [vmem:[%s315 + $0xc8] sm:$0xff]
      %v352 = vld [vmem:[%s315 + $0xd0] sm:$0xff]
      %v353 = vld [vmem:[%s315 + $0xd8] sm:$0xff]
      %v354 = vld [vmem:[%s315 + $0xe0] sm:$0xff]
      %v355 = vld [vmem:[%s315 + $0xe8] sm:$0xff]
      %v356 = vld [vmem:[%s315 + $0xf0] sm:$0xff]
      %v357 = vld [vmem:[%s315 + $0xf8] sm:$0xff]
      %v358 = vld [vmem:[%s320] sm:$0xff]
      %v359 = vld [vmem:[%s320 + $0x8] sm:$0xff]
      %v360 = vld [vmem:[%s320 + $0x10] sm:$0xff]
      %v361 = vld [vmem:[%s320 + $0x18] sm:$0xff]
      %v362 = vld [vmem:[%s320 + $0x20] sm:$0xff]
      %v363 = vld [vmem:[%s320 + $0x28] sm:$0xff]
      %v364 = vld [vmem:[%s320 + $0x30] sm:$0xff]
      %v365 = vld [vmem:[%s320 + $0x38] sm:$0xff]
      %v366 = vld [vmem:[%s320 + $0x40] sm:$0xff]
      %v367 = vld [vmem:[%s320 + $0x48] sm:$0xff]
      %v368 = vld [vmem:[%s320 + $0x50] sm:$0xff]
      %v369 = vld [vmem:[%s320 + $0x58] sm:$0xff]
      %v370 = vld [vmem:[%s320 + $0x60] sm:$0xff]
      %v371 = vld [vmem:[%s320 + $0x68] sm:$0xff]
      %v372 = vld [vmem:[%s320 + $0x70] sm:$0xff]
      %v373 = vld [vmem:[%s320 + $0x78] sm:$0xff]
      %v374 = vld [vmem:[%s320 + $0x80] sm:$0xff]
      %v375 = vld [vmem:[%s320 + $0x88] sm:$0xff]
      %v376 = vld [vmem:[%s320 + $0x90] sm:$0xff]
      %v377 = vld [vmem:[%s320 + $0x98] sm:$0xff]
      %v378 = vld [vmem:[%s320 + $0xa0] sm:$0xff]
      %v379 = vld [vmem:[%s320 + $0xa8] sm:$0xff]
      %v380 = vld [vmem:[%s320 + $0xb0] sm:$0xff]
      %v381 = vld [vmem:[%s320 + $0xb8] sm:$0xff]
      %v382 = vld [vmem:[%s320 + $0xc0] sm:$0xff]
      %v383 = vld [vmem:[%s320 + $0xc8] sm:$0xff]
      %v384 = vld [vmem:[%s320 + $0xd0] sm:$0xff]
      %v385 = vld [vmem:[%s320 + $0xd8] sm:$0xff]
      %v386 = vld [vmem:[%s320 + $0xe0] sm:$0xff]
      %v387 = vld [vmem:[%s320 + $0xe8] sm:$0xff]
      %v388 = vld [vmem:[%s320 + $0xf0] sm:$0xff]
      %v389 = vld [vmem:[%s320 + $0xf8] sm:$0xff]
      %422 = vrot.lane.b32.xlu0 %v358, 8
      %v423 = vpop.permute.xlu0 %422
      %424 = vrot.lane.b32.xlu0 %v359, 8
      %v425 = vpop.permute.xlu0 %424
      %426 = vrot.lane.b32.xlu0 %v360, 8
      %v427 = vpop.permute.xlu0 %426
      %428 = vrot.lane.b32.xlu0 %v361, 8
      %v429 = vpop.permute.xlu0 %428
      %430 = vrot.lane.b32.xlu0 %v362, 8
      %v431 = vpop.permute.xlu0 %430
      %432 = vrot.lane.b32.xlu0 %v363, 8
      %v433 = vpop.permute.xlu0 %432
      %434 = vrot.lane.b32.xlu0 %v364, 8
      %v435 = vpop.permute.xlu0 %434
      %436 = vrot.lane.b32.xlu0 %v365, 8
      %v437 = vpop.permute.xlu0 %436
      %438 = vrot.lane.b32.xlu0 %v366, 8
      %v439 = vpop.permute.xlu0 %438
      %440 = vrot.lane.b32.xlu0 %v367, 8
      %v441 = vpop.permute.xlu0 %440
      %442 = vrot.lane.b32.xlu0 %v368, 8
      %v443 = vpop.permute.xlu0 %442
      %444 = vrot.lane.b32.xlu0 %v369, 8
      %v445 = vpop.permute.xlu0 %444
      %446 = vrot.lane.b32.xlu0 %v370, 8
      %v447 = vpop.permute.xlu0 %446
      %448 = vrot.lane.b32.xlu0 %v371, 8
      %v449 = vpop.permute.xlu0 %448
      %450 = vrot.lane.b32.xlu0 %v372, 8
      %v451 = vpop.permute.xlu0 %450
      %452 = vrot.lane.b32.xlu0 %v373, 8
      %v453 = vpop.permute.xlu0 %452
      %454 = vrot.lane.b32.xlu0 %v374, 8
      %v455 = vpop.permute.xlu0 %454
      %456 = vrot.lane.b32.xlu0 %v375, 8
      %v457 = vpop.permute.xlu0 %456
      %458 = vrot.lane.b32.xlu0 %v376, 8
      %v459 = vpop.permute.xlu0 %458
      %460 = vrot.lane.b32.xlu0 %v377, 8
      %v461 = vpop.permute.xlu0 %460
      %462 = vrot.lane.b32.xlu0 %v378, 8
      %v463 = vpop.permute.xlu0 %462
      %464 = vrot.lane.b32.xlu0 %v379, 8
      %v465 = vpop.permute.xlu0 %464
      %466 = vrot.lane.b32.xlu0 %v380, 8
      %v467 = vpop.permute.xlu0 %466
      %468 = vrot.lane.b32.xlu0 %v381, 8
      %v469 = vpop.permute.xlu0 %468
      %470 = vrot.lane.b32.xlu0 %v382, 8
      %v471 = vpop.permute.xlu0 %470
      %472 = vrot.lane.b32.xlu0 %v383, 8
      %v473 = vpop.permute.xlu0 %472
      %474 = vrot.lane.b32.xlu0 %v384, 8
      %v475 = vpop.permute.xlu0 %474
      %476 = vrot.lane.b32.xlu0 %v385, 8
      %v477 = vpop.permute.xlu0 %476
      %478 = vrot.lane.b32.xlu0 %v386, 8
      %v479 = vpop.permute.xlu0 %478
      %480 = vrot.lane.b32.xlu0 %v387, 8
      %v481 = vpop.permute.xlu0 %480
      %482 = vrot.lane.b32.xlu0 %v388, 8
      %v483 = vpop.permute.xlu0 %482
      %484 = vrot.lane.b32.xlu0 %v389, 8
      %v485 = vpop.permute.xlu0 %484
      %vm518 = vcmask 64512
      %v519 = vsel %vm518, %v326, %v423
      %v520 = vsel %vm518, %v327, %v425
      %v521 = vsel %vm518, %v328, %v427
      %v522 = vsel %vm518, %v329, %v429
      %v523 = vsel %vm518, %v330, %v431
      %v524 = vsel %vm518, %v331, %v433
      %v525 = vsel %vm518, %v332, %v435
      %v526 = vsel %vm518, %v333, %v437
      %v527 = vsel %vm518, %v334, %v439
      %v528 = vsel %vm518, %v335, %v441
      %v529 = vsel %vm518, %v336, %v443
      %v530 = vsel %vm518, %v337, %v445
      %v531 = vsel %vm518, %v338, %v447
      %v532 = vsel %vm518, %v339, %v449
      %v533 = vsel %vm518, %v340, %v451
      %v534 = vsel %vm518, %v341, %v453
      %v535 = vsel %vm518, %v342, %v455
      %v536 = vsel %vm518, %v343, %v457
      %v537 = vsel %vm518, %v344, %v459
      %v538 = vsel %vm518, %v345, %v461
      %v539 = vsel %vm518, %v346, %v463
      %v540 = vsel %vm518, %v347, %v465
      %v541 = vsel %vm518, %v348, %v467
      %v542 = vsel %vm518, %v349, %v469
      %v543 = vsel %vm518, %v350, %v471
      %v544 = vsel %vm518, %v351, %v473
      %v545 = vsel %vm518, %v352, %v475
      %v546 = vsel %vm518, %v353, %v477
      %v547 = vsel %vm518, %v354, %v479
      %v548 = vsel %vm518, %v355, %v481
      %v549 = vsel %vm518, %v356, %v483
      %v550 = vsel %vm518, %v357, %v485
      %vm583 = vcmask 1040384
      %v584 = vrot.slane %v519, 7
      %v585 = vrot.slane %v520, 7
      %v586 = vsel %vm583, %v584, %v585
      %v587 = vrot.slane %v521, 7
      %v588 = vrot.slane %v522, 7
      %v589 = vsel %vm583, %v587, %v588
      %v590 = vrot.slane %v523, 7
      %v591 = vrot.slane %v524, 7
      %v592 = vsel %vm583, %v590, %v591
      %v593 = vrot.slane %v525, 7
      %v594 = vrot.slane %v526, 7
      %v595 = vsel %vm583, %v593, %v594
      %v596 = vrot.slane %v527, 7
      %v597 = vrot.slane %v528, 7
      %v598 = vsel %vm583, %v596, %v597
      %v599 = vrot.slane %v529, 7
      %v600 = vrot.slane %v530, 7
      %v601 = vsel %vm583, %v599, %v600
      %v602 = vrot.slane %v531, 7
      %v603 = vrot.slane %v532, 7
      %v604 = vsel %vm583, %v602, %v603
      %v605 = vrot.slane %v533, 7
      %v606 = vrot.slane %v534, 7
      %v607 = vsel %vm583, %v605, %v606
      %v608 = vrot.slane %v535, 7
      %v609 = vrot.slane %v536, 7
      %v610 = vsel %vm583, %v608, %v609
      %v611 = vrot.slane %v537, 7
      %v612 = vrot.slane %v538, 7
      %v613 = vsel %vm583, %v611, %v612
      %v614 = vrot.slane %v539, 7
      %v615 = vrot.slane %v540, 7
      %v616 = vsel %vm583, %v614, %v615
      %v617 = vrot.slane %v541, 7
      %v618 = vrot.slane %v542, 7
      %v619 = vsel %vm583, %v617, %v618
      %v620 = vrot.slane %v543, 7
      %v621 = vrot.slane %v544, 7
      %v622 = vsel %vm583, %v620, %v621
      %v623 = vrot.slane %v545, 7
      %v624 = vrot.slane %v546, 7
      %v625 = vsel %vm583, %v623, %v624
      %v626 = vrot.slane %v547, 7
      %v627 = vrot.slane %v548, 7
      %v628 = vsel %vm583, %v626, %v627
      %v629 = vrot.slane %v549, 7
      %v630 = vrot.slane %v550, 7
      %v631 = vsel %vm583, %v629, %v630
      %v679 = vsel %vm583, 0.0, %v584
      %v680 = vsel %vm583, 0.0, %v587
      %v681 = vsel %vm583, 0.0, %v590
      %v682 = vsel %vm583, 0.0, %v593
      %v683 = vsel %vm583, 0.0, %v596
      %v684 = vsel %vm583, 0.0, %v599
      %v685 = vsel %vm583, 0.0, %v602
      %v686 = vsel %vm583, 0.0, %v605
      %v687 = vsel %vm583, 0.0, %v608
      %v688 = vsel %vm583, 0.0, %v611
      %v689 = vsel %vm583, 0.0, %v614
      %v690 = vsel %vm583, 0.0, %v617
      %v691 = vsel %vm583, 0.0, %v620
      %v692 = vsel %vm583, 0.0, %v623
      %v693 = vsel %vm583, 0.0, %v626
      %v694 = vsel %vm583, 0.0, %v629
      %v695 = vsel %vm583, %v585, 0.0
      %v696 = vsel %vm583, %v588, 0.0
      %v697 = vsel %vm583, %v591, 0.0
      %v698 = vsel %vm583, %v594, 0.0
      %v699 = vsel %vm583, %v597, 0.0
      %v700 = vsel %vm583, %v600, 0.0
      %v701 = vsel %vm583, %v603, 0.0
      %v702 = vsel %vm583, %v606, 0.0
      %v703 = vsel %vm583, %v609, 0.0
      %v704 = vsel %vm583, %v612, 0.0
      %v705 = vsel %vm583, %v615, 0.0
      %v706 = vsel %vm583, %v618, 0.0
      %v707 = vsel %vm583, %v621, 0.0
      %v708 = vsel %vm583, %v624, 0.0
      %v709 = vsel %vm583, %v627, 0.0
      %v710 = vsel %vm583, %v630, 0.0
      %vm742 = vcmask 1046528
      %v743 = vrot.slane 0.0, 1
      %v744 = vsel %vm742, %v743, %v743
      %v745 = vrot.slane %v679, 1
      %v746 = vrot.slane %v586, 1
      %v747 = vsel %vm742, %v745, %v746
      %v748 = vrot.slane %v695, 1
      %v749 = vsel %vm742, %v746, %v748
      %v750 = vrot.slane %v680, 1
      %v751 = vrot.slane %v589, 1
      %v752 = vsel %vm742, %v750, %v751
      %v753 = vrot.slane %v696, 1
      %v754 = vsel %vm742, %v751, %v753
      %v755 = vrot.slane %v681, 1
      %v756 = vrot.slane %v592, 1
      %v757 = vsel %vm742, %v755, %v756
      %v758 = vrot.slane %v697, 1
      %v759 = vsel %vm742, %v756, %v758
      %v760 = vrot.slane %v682, 1
      %v761 = vrot.slane %v595, 1
      %v762 = vsel %vm742, %v760, %v761
      %v763 = vrot.slane %v698, 1
      %v764 = vsel %vm742, %v761, %v763
      %v765 = vrot.slane %v683, 1
      %v766 = vrot.slane %v598, 1
      %v767 = vsel %vm742, %v765, %v766
      %v768 = vrot.slane %v699, 1
      %v769 = vsel %vm742, %v766, %v768
      %v770 = vrot.slane %v684, 1
      %v771 = vrot.slane %v601, 1
      %v772 = vsel %vm742, %v770, %v771
      %v773 = vrot.slane %v700, 1
      %v774 = vsel %vm742, %v771, %v773
      %v775 = vrot.slane %v685, 1
      %v776 = vrot.slane %v604, 1
      %v777 = vsel %vm742, %v775, %v776
      %v778 = vrot.slane %v701, 1
      %v779 = vsel %vm742, %v776, %v778
      %v780 = vrot.slane %v686, 1
      %v781 = vrot.slane %v607, 1
      %v782 = vsel %vm742, %v780, %v781
      %v783 = vrot.slane %v702, 1
      %v784 = vsel %vm742, %v781, %v783
      %v785 = vrot.slane %v687, 1
      %v786 = vrot.slane %v610, 1
      %v787 = vsel %vm742, %v785, %v786
      %v788 = vrot.slane %v703, 1
      %v789 = vsel %vm742, %v786, %v788
      %v790 = vrot.slane %v688, 1
      %v791 = vrot.slane %v613, 1
      %v792 = vsel %vm742, %v790, %v791
      %v793 = vrot.slane %v704, 1
      %v794 = vsel %vm742, %v791, %v793
      %v795 = vrot.slane %v689, 1
      %v796 = vrot.slane %v616, 1
      %v797 = vsel %vm742, %v795, %v796
      %v798 = vrot.slane %v705, 1
      %v799 = vsel %vm742, %v796, %v798
      %v800 = vrot.slane %v690, 1
      %v801 = vrot.slane %v619, 1
      %v802 = vsel %vm742, %v800, %v801
      %v803 = vrot.slane %v706, 1
      %v804 = vsel %vm742, %v801, %v803
      %v805 = vrot.slane %v691, 1
      %v806 = vrot.slane %v622, 1
      %v807 = vsel %vm742, %v805, %v806
      %v808 = vrot.slane %v707, 1
      %v809 = vsel %vm742, %v806, %v808
      %v810 = vrot.slane %v692, 1
      %v811 = vrot.slane %v625, 1
      %v812 = vsel %vm742, %v810, %v811
      %v813 = vrot.slane %v708, 1
      %v814 = vsel %vm742, %v811, %v813
      %v815 = vrot.slane %v693, 1
      %v816 = vrot.slane %v628, 1
      %v817 = vsel %vm742, %v815, %v816
      %v818 = vrot.slane %v709, 1
      %v819 = vsel %vm742, %v816, %v818
      %820 = vrot.lane.b32.xlu0 %v744, 16
      %v821 = vpop.permute.xlu0 %820
      %822 = vrot.lane.b32.xlu0 %v747, 16
      %v823 = vpop.permute.xlu0 %822
      %824 = vrot.lane.b32.xlu0 %v749, 16
      %v825 = vpop.permute.xlu0 %824
      %826 = vrot.lane.b32.xlu0 %v752, 16
      %v827 = vpop.permute.xlu0 %826
      %828 = vrot.lane.b32.xlu0 %v754, 16
      %v829 = vpop.permute.xlu0 %828
      %830 = vrot.lane.b32.xlu0 %v757, 16
      %v831 = vpop.permute.xlu0 %830
      %832 = vrot.lane.b32.xlu0 %v759, 16
      %v833 = vpop.permute.xlu0 %832
      %834 = vrot.lane.b32.xlu0 %v762, 16
      %v835 = vpop.permute.xlu0 %834
      %836 = vrot.lane.b32.xlu0 %v764, 16
      %v837 = vpop.permute.xlu0 %836
      %838 = vrot.lane.b32.xlu0 %v767, 16
      %v839 = vpop.permute.xlu0 %838
      %840 = vrot.lane.b32.xlu0 %v769, 16
      %v841 = vpop.permute.xlu0 %840
      %842 = vrot.lane.b32.xlu0 %v772, 16
      %v843 = vpop.permute.xlu0 %842
      %844 = vrot.lane.b32.xlu0 %v774, 16
      %v845 = vpop.permute.xlu0 %844
      %846 = vrot.lane.b32.xlu0 %v777, 16
      %v847 = vpop.permute.xlu0 %846
      %848 = vrot.lane.b32.xlu0 %v779, 16
      %v849 = vpop.permute.xlu0 %848
      %850 = vrot.lane.b32.xlu0 %v782, 16
      %v851 = vpop.permute.xlu0 %850
      %852 = vrot.lane.b32.xlu0 %v784, 16
      %v853 = vpop.permute.xlu0 %852
      %854 = vrot.lane.b32.xlu0 %v787, 16
      %v855 = vpop.permute.xlu0 %854
      %856 = vrot.lane.b32.xlu0 %v789, 16
      %v857 = vpop.permute.xlu0 %856
      %858 = vrot.lane.b32.xlu0 %v792, 16
      %v859 = vpop.permute.xlu0 %858
      %860 = vrot.lane.b32.xlu0 %v794, 16
      %v861 = vpop.permute.xlu0 %860
      %862 = vrot.lane.b32.xlu0 %v797, 16
      %v863 = vpop.permute.xlu0 %862
      %864 = vrot.lane.b32.xlu0 %v799, 16
      %v865 = vpop.permute.xlu0 %864
      %866 = vrot.lane.b32.xlu0 %v802, 16
      %v867 = vpop.permute.xlu0 %866
      %868 = vrot.lane.b32.xlu0 %v804, 16
      %v869 = vpop.permute.xlu0 %868
      %870 = vrot.lane.b32.xlu0 %v807, 16
      %v871 = vpop.permute.xlu0 %870
      %872 = vrot.lane.b32.xlu0 %v809, 16
      %v873 = vpop.permute.xlu0 %872
      %874 = vrot.lane.b32.xlu0 %v812, 16
      %v875 = vpop.permute.xlu0 %874
      %876 = vrot.lane.b32.xlu0 %v814, 16
      %v877 = vpop.permute.xlu0 %876
      %878 = vrot.lane.b32.xlu0 %v817, 16
      %v879 = vpop.permute.xlu0 %878
      %880 = vrot.lane.b32.xlu0 %v819, 16
      %v881 = vpop.permute.xlu0 %880
      %vm913 = vcmask 1045504
      %v914 = vrot.slane 0.0, 2
      %v915 = vsel %vm913, %v914, %v914
      %v916 = vrot.slane %v679, 2
      %v917 = vrot.slane %v586, 2
      %v918 = vsel %vm913, %v916, %v917
      %v919 = vrot.slane %v695, 2
      %v920 = vsel %vm913, %v917, %v919
      %v921 = vrot.slane %v680, 2
      %v922 = vrot.slane %v589, 2
      %v923 = vsel %vm913, %v921, %v922
      %v924 = vrot.slane %v696, 2
      %v925 = vsel %vm913, %v922, %v924
      %v926 = vrot.slane %v681, 2
      %v927 = vrot.slane %v592, 2
      %v928 = vsel %vm913, %v926, %v927
      %v929 = vrot.slane %v697, 2
      %v930 = vsel %vm913, %v927, %v929
      %v931 = vrot.slane %v682, 2
      %v932 = vrot.slane %v595, 2
      %v933 = vsel %vm913, %v931, %v932
      %v934 = vrot.slane %v698, 2
      %v935 = vsel %vm913, %v932, %v934
      %v936 = vrot.slane %v683, 2
      %v937 = vrot.slane %v598, 2
      %v938 = vsel %vm913, %v936, %v937
      %v939 = vrot.slane %v699, 2
      %v940 = vsel %vm913, %v937, %v939
      %v941 = vrot.slane %v684, 2
      %v942 = vrot.slane %v601, 2
      %v943 = vsel %vm913, %v941, %v942
      %v944 = vrot.slane %v700, 2
      %v945 = vsel %vm913, %v942, %v944
      %v946 = vrot.slane %v685, 2
      %v947 = vrot.slane %v604, 2
      %v948 = vsel %vm913, %v946, %v947
      %v949 = vrot.slane %v701, 2
      %v950 = vsel %vm913, %v947, %v949
      %v951 = vrot.slane %v686, 2
      %v952 = vrot.slane %v607, 2
      %v953 = vsel %vm913, %v951, %v952
      %v954 = vrot.slane %v702, 2
      %v955 = vsel %vm913, %v952, %v954
      %v956 = vrot.slane %v687, 2
      %v957 = vrot.slane %v610, 2
      %v958 = vsel %vm913, %v956, %v957
      %v959 = vrot.slane %v703, 2
      %v960 = vsel %vm913, %v957, %v959
      %v961 = vrot.slane %v688, 2
      %v962 = vrot.slane %v613, 2
      %v963 = vsel %vm913, %v961, %v962
      %v964 = vrot.slane %v704, 2
      %v965 = vsel %vm913, %v962, %v964
      %v966 = vrot.slane %v689, 2
      %v967 = vrot.slane %v616, 2
      %v968 = vsel %vm913, %v966, %v967
      %v969 = vrot.slane %v705, 2
      %v970 = vsel %vm913, %v967, %v969
      %v971 = vrot.slane %v690, 2
      %v972 = vrot.slane %v619, 2
      %v973 = vsel %vm913, %v971, %v972
      %v974 = vrot.slane %v706, 2
      %v975 = vsel %vm913, %v972, %v974
      %v976 = vrot.slane %v691, 2
      %v977 = vrot.slane %v622, 2
      %v978 = vsel %vm913, %v976, %v977
      %v979 = vrot.slane %v707, 2
      %v980 = vsel %vm913, %v977, %v979
      %v981 = vrot.slane %v692, 2
      %v982 = vrot.slane %v625, 2
      %v983 = vsel %vm913, %v981, %v982
      %v984 = vrot.slane %v708, 2
      %v985 = vsel %vm913, %v982, %v984
      %v986 = vrot.slane %v693, 2
      %v987 = vrot.slane %v628, 2
      %v988 = vsel %vm913, %v986, %v987
      %v989 = vrot.slane %v709, 2
      %v990 = vsel %vm913, %v987, %v989
      %991 = vrot.lane.b32.xlu0 %v915, 32
      %v992 = vpop.permute.xlu0 %991
      %993 = vrot.lane.b32.xlu0 %v918, 32
      %v994 = vpop.permute.xlu0 %993
      %995 = vrot.lane.b32.xlu0 %v920, 32
      %v996 = vpop.permute.xlu0 %995
      %997 = vrot.lane.b32.xlu0 %v923, 32
      %v998 = vpop.permute.xlu0 %997
      %999 = vrot.lane.b32.xlu0 %v925, 32
      %v1000 = vpop.permute.xlu0 %999
      %1001 = vrot.lane.b32.xlu0 %v928, 32
      %v1002 = vpop.permute.xlu0 %1001
      %1003 = vrot.lane.b32.xlu0 %v930, 32
      %v1004 = vpop.permute.xlu0 %1003
      %1005 = vrot.lane.b32.xlu0 %v933, 32
      %v1006 = vpop.permute.xlu0 %1005
      %1007 = vrot.lane.b32.xlu0 %v935, 32
      %v1008 = vpop.permute.xlu0 %1007
      %1009 = vrot.lane.b32.xlu0 %v938, 32
      %v1010 = vpop.permute.xlu0 %1009
      %1011 = vrot.lane.b32.xlu0 %v940, 32
      %v1012 = vpop.permute.xlu0 %1011
      %1013 = vrot.lane.b32.xlu0 %v943, 32
      %v1014 = vpop.permute.xlu0 %1013
      %1015 = vrot.lane.b32.xlu0 %v945, 32
      %v1016 = vpop.permute.xlu0 %1015
      %1017 = vrot.lane.b32.xlu0 %v948, 32
      %v1018 = vpop.permute.xlu0 %1017
      %1019 = vrot.lane.b32.xlu0 %v950, 32
      %v1020 = vpop.permute.xlu0 %1019
      %1021 = vrot.lane.b32.xlu0 %v953, 32
      %v1022 = vpop.permute.xlu0 %1021
      %1023 = vrot.lane.b32.xlu0 %v955, 32
      %v1024 = vpop.permute.xlu0 %1023
      %1025 = vrot.lane.b32.xlu0 %v958, 32
      %v1026 = vpop.permute.xlu0 %1025
      %1027 = vrot.lane.b32.xlu0 %v960, 32
      %v1028 = vpop.permute.xlu0 %1027
      %1029 = vrot.lane.b32.xlu0 %v963, 32
      %v1030 = vpop.permute.xlu0 %1029
      %1031 = vrot.lane.b32.xlu0 %v965, 32
      %v1032 = vpop.permute.xlu0 %1031
      %1033 = vrot.lane.b32.xlu0 %v968, 32
      %v1034 = vpop.permute.xlu0 %1033
      %1035 = vrot.lane.b32.xlu0 %v970, 32
      %v1036 = vpop.permute.xlu0 %1035
      %1037 = vrot.lane.b32.xlu0 %v973, 32
      %v1038 = vpop.permute.xlu0 %1037
      %1039 = vrot.lane.b32.xlu0 %v975, 32
      %v1040 = vpop.permute.xlu0 %1039
      %1041 = vrot.lane.b32.xlu0 %v978, 32
      %v1042 = vpop.permute.xlu0 %1041
      %1043 = vrot.lane.b32.xlu0 %v980, 32
      %v1044 = vpop.permute.xlu0 %1043
      %1045 = vrot.lane.b32.xlu0 %v983, 32
      %v1046 = vpop.permute.xlu0 %1045
      %1047 = vrot.lane.b32.xlu0 %v985, 32
      %v1048 = vpop.permute.xlu0 %1047
      %1049 = vrot.lane.b32.xlu0 %v988, 32
      %v1050 = vpop.permute.xlu0 %1049
      %1051 = vrot.lane.b32.xlu0 %v990, 32
      %v1052 = vpop.permute.xlu0 %1051
      %1085 = vrot.lane.b32.xlu0 %v679, 48
      %v1086 = vpop.permute.xlu0 %1085
      %1087 = vrot.lane.b32.xlu0 %v586, 48
      %v1088 = vpop.permute.xlu0 %1087
      %1089 = vrot.lane.b32.xlu0 %v680, 48
      %v1090 = vpop.permute.xlu0 %1089
      %1091 = vrot.lane.b32.xlu0 %v589, 48
      %v1092 = vpop.permute.xlu0 %1091
      %1093 = vrot.lane.b32.xlu0 %v681, 48
      %v1094 = vpop.permute.xlu0 %1093
      %1095 = vrot.lane.b32.xlu0 %v592, 48
      %v1096 = vpop.permute.xlu0 %1095
      %1097 = vrot.lane.b32.xlu0 %v682, 48
      %v1098 = vpop.permute.xlu0 %1097
      %1099 = vrot.lane.b32.xlu0 %v595, 48
      %v1100 = vpop.permute.xlu0 %1099
      %1101 = vrot.lane.b32.xlu0 %v683, 48
      %v1102 = vpop.permute.xlu0 %1101
      %1103 = vrot.lane.b32.xlu0 %v598, 48
      %v1104 = vpop.permute.xlu0 %1103
      %1105 = vrot.lane.b32.xlu0 %v684, 48
      %v1106 = vpop.permute.xlu0 %1105
      %1107 = vrot.lane.b32.xlu0 %v601, 48
      %v1108 = vpop.permute.xlu0 %1107
      %1109 = vrot.lane.b32.xlu0 %v685, 48
      %v1110 = vpop.permute.xlu0 %1109
      %1111 = vrot.lane.b32.xlu0 %v604, 48
      %v1112 = vpop.permute.xlu0 %1111
      %1113 = vrot.lane.b32.xlu0 %v686, 48
      %v1114 = vpop.permute.xlu0 %1113
      %1115 = vrot.lane.b32.xlu0 %v607, 48
      %v1116 = vpop.permute.xlu0 %1115
      %1117 = vrot.lane.b32.xlu0 %v687, 48
      %v1118 = vpop.permute.xlu0 %1117
      %1119 = vrot.lane.b32.xlu0 %v610, 48
      %v1120 = vpop.permute.xlu0 %1119
      %1121 = vrot.lane.b32.xlu0 %v688, 48
      %v1122 = vpop.permute.xlu0 %1121
      %1123 = vrot.lane.b32.xlu0 %v613, 48
      %v1124 = vpop.permute.xlu0 %1123
      %1125 = vrot.lane.b32.xlu0 %v689, 48
      %v1126 = vpop.permute.xlu0 %1125
      %1127 = vrot.lane.b32.xlu0 %v616, 48
      %v1128 = vpop.permute.xlu0 %1127
      %1129 = vrot.lane.b32.xlu0 %v690, 48
      %v1130 = vpop.permute.xlu0 %1129
      %1131 = vrot.lane.b32.xlu0 %v619, 48
      %v1132 = vpop.permute.xlu0 %1131
      %1133 = vrot.lane.b32.xlu0 %v691, 48
      %v1134 = vpop.permute.xlu0 %1133
      %1135 = vrot.lane.b32.xlu0 %v622, 48
      %v1136 = vpop.permute.xlu0 %1135
      %1137 = vrot.lane.b32.xlu0 %v692, 48
      %v1138 = vpop.permute.xlu0 %1137
      %1139 = vrot.lane.b32.xlu0 %v625, 48
      %v1140 = vpop.permute.xlu0 %1139
      %1141 = vrot.lane.b32.xlu0 %v693, 48
      %v1142 = vpop.permute.xlu0 %1141
      %1143 = vrot.lane.b32.xlu0 %v628, 48
      %v1144 = vpop.permute.xlu0 %1143
      %1145 = vrot.lane.b32.xlu0 %v694, 48
      %v1146 = vpop.permute.xlu0 %1145
      %1147 = vrot.lane.b32.xlu0 %v631, 48
      %v1148 = vpop.permute.xlu0 %1147
      %v1182 = vrot.slane %v694, 1
      %v1183 = vrot.slane %v631, 1
      %v1184 = vsel %vm742, %v1182, %v1183
      %v1185 = vrot.slane %v710, 1
      %v1186 = vsel %vm742, %v1183, %v1185
      %1187 = vrot.lane.b32.xlu0 %v747, 64
      %v1188 = vpop.permute.xlu0 %1187
      %1189 = vrot.lane.b32.xlu0 %v749, 64
      %v1190 = vpop.permute.xlu0 %1189
      %1191 = vrot.lane.b32.xlu0 %v752, 64
      %v1192 = vpop.permute.xlu0 %1191
      %1193 = vrot.lane.b32.xlu0 %v754, 64
      %v1194 = vpop.permute.xlu0 %1193
      %1195 = vrot.lane.b32.xlu0 %v757, 64
      %v1196 = vpop.permute.xlu0 %1195
      %1197 = vrot.lane.b32.xlu0 %v759, 64
      %v1198 = vpop.permute.xlu0 %1197
      %1199 = vrot.lane.b32.xlu0 %v762, 64
      %v1200 = vpop.permute.xlu0 %1199
      %1201 = vrot.lane.b32.xlu0 %v764, 64
      %v1202 = vpop.permute.xlu0 %1201
      %1203 = vrot.lane.b32.xlu0 %v767, 64
      %v1204 = vpop.permute.xlu0 %1203
      %1205 = vrot.lane.b32.xlu0 %v769, 64
      %v1206 = vpop.permute.xlu0 %1205
      %1207 = vrot.lane.b32.xlu0 %v772, 64
      %v1208 = vpop.permute.xlu0 %1207
      %1209 = vrot.lane.b32.xlu0 %v774, 64
      %v1210 = vpop.permute.xlu0 %1209
      %1211 = vrot.lane.b32.xlu0 %v777, 64
      %v1212 = vpop.permute.xlu0 %1211
      %1213 = vrot.lane.b32.xlu0 %v779, 64
      %v1214 = vpop.permute.xlu0 %1213
      %1215 = vrot.lane.b32.xlu0 %v782, 64
      %v1216 = vpop.permute.xlu0 %1215
      %1217 = vrot.lane.b32.xlu0 %v784, 64
      %v1218 = vpop.permute.xlu0 %1217
      %1219 = vrot.lane.b32.xlu0 %v787, 64
      %v1220 = vpop.permute.xlu0 %1219
      %1221 = vrot.lane.b32.xlu0 %v789, 64
      %v1222 = vpop.permute.xlu0 %1221
      %1223 = vrot.lane.b32.xlu0 %v792, 64
      %v1224 = vpop.permute.xlu0 %1223
      %1225 = vrot.lane.b32.xlu0 %v794, 64
      %v1226 = vpop.permute.xlu0 %1225
      %1227 = vrot.lane.b32.xlu0 %v797, 64
      %v1228 = vpop.permute.xlu0 %1227
      %1229 = vrot.lane.b32.xlu0 %v799, 64
      %v1230 = vpop.permute.xlu0 %1229
      %1231 = vrot.lane.b32.xlu0 %v802, 64
      %v1232 = vpop.permute.xlu0 %1231
      %1233 = vrot.lane.b32.xlu0 %v804, 64
      %v1234 = vpop.permute.xlu0 %1233
      %1235 = vrot.lane.b32.xlu0 %v807, 64
      %v1236 = vpop.permute.xlu0 %1235
      %1237 = vrot.lane.b32.xlu0 %v809, 64
      %v1238 = vpop.permute.xlu0 %1237
      %1239 = vrot.lane.b32.xlu0 %v812, 64
      %v1240 = vpop.permute.xlu0 %1239
      %1241 = vrot.lane.b32.xlu0 %v814, 64
      %v1242 = vpop.permute.xlu0 %1241
      %1243 = vrot.lane.b32.xlu0 %v817, 64
      %v1244 = vpop.permute.xlu0 %1243
      %1245 = vrot.lane.b32.xlu0 %v819, 64
      %v1246 = vpop.permute.xlu0 %1245
      %1247 = vrot.lane.b32.xlu0 %v1184, 64
      %v1248 = vpop.permute.xlu0 %1247
      %1249 = vrot.lane.b32.xlu0 %v1186, 64
      %v1250 = vpop.permute.xlu0 %1249
      %v1283 = vrot.slane %v694, 2
      %v1284 = vrot.slane %v631, 2
      %v1285 = vsel %vm913, %v1283, %v1284
      %v1286 = vrot.slane %v710, 2
      %v1287 = vsel %vm913, %v1284, %v1286
      %1288 = vrot.lane.b32.xlu0 %v918, 80
      %v1289 = vpop.permute.xlu0 %1288
      %1290 = vrot.lane.b32.xlu0 %v920, 80
      %v1291 = vpop.permute.xlu0 %1290
      %1292 = vrot.lane.b32.xlu0 %v923, 80
      %v1293 = vpop.permute.xlu0 %1292
      %1294 = vrot.lane.b32.xlu0 %v925, 80
      %v1295 = vpop.permute.xlu0 %1294
      %1296 = vrot.lane.b32.xlu0 %v928, 80
      %v1297 = vpop.permute.xlu0 %1296
      %1298 = vrot.lane.b32.xlu0 %v930, 80
      %v1299 = vpop.permute.xlu0 %1298
      %1300 = vrot.lane.b32.xlu0 %v933, 80
      %v1301 = vpop.permute.xlu0 %1300
      %1302 = vrot.lane.b32.xlu0 %v935, 80
      %v1303 = vpop.permute.xlu0 %1302
      %1304 = vrot.lane.b32.xlu0 %v938, 80
      %v1305 = vpop.permute.xlu0 %1304
      %1306 = vrot.lane.b32.xlu0 %v940, 80
      %v1307 = vpop.permute.xlu0 %1306
      %1308 = vrot.lane.b32.xlu0 %v943, 80
      %v1309 = vpop.permute.xlu0 %1308
      %1310 = vrot.lane.b32.xlu0 %v945, 80
      %v1311 = vpop.permute.xlu0 %1310
      %1312 = vrot.lane.b32.xlu0 %v948, 80
      %v1313 = vpop.permute.xlu0 %1312
      %1314 = vrot.lane.b32.xlu0 %v950, 80
      %v1315 = vpop.permute.xlu0 %1314
      %1316 = vrot.lane.b32.xlu0 %v953, 80
      %v1317 = vpop.permute.xlu0 %1316
      %1318 = vrot.lane.b32.xlu0 %v955, 80
      %v1319 = vpop.permute.xlu0 %1318
      %1320 = vrot.lane.b32.xlu0 %v958, 80
      %v1321 = vpop.permute.xlu0 %1320
      %1322 = vrot.lane.b32.xlu0 %v960, 80
      %v1323 = vpop.permute.xlu0 %1322
      %1324 = vrot.lane.b32.xlu0 %v963, 80
      %v1325 = vpop.permute.xlu0 %1324
      %1326 = vrot.lane.b32.xlu0 %v965, 80
      %v1327 = vpop.permute.xlu0 %1326
      %1328 = vrot.lane.b32.xlu0 %v968, 80
      %v1329 = vpop.permute.xlu0 %1328
      %1330 = vrot.lane.b32.xlu0 %v970, 80
      %v1331 = vpop.permute.xlu0 %1330
      %1332 = vrot.lane.b32.xlu0 %v973, 80
      %v1333 = vpop.permute.xlu0 %1332
      %1334 = vrot.lane.b32.xlu0 %v975, 80
      %v1335 = vpop.permute.xlu0 %1334
      %1336 = vrot.lane.b32.xlu0 %v978, 80
      %v1337 = vpop.permute.xlu0 %1336
      %1338 = vrot.lane.b32.xlu0 %v980, 80
      %v1339 = vpop.permute.xlu0 %1338
      %1340 = vrot.lane.b32.xlu0 %v983, 80
      %v1341 = vpop.permute.xlu0 %1340
      %1342 = vrot.lane.b32.xlu0 %v985, 80
      %v1343 = vpop.permute.xlu0 %1342
      %1344 = vrot.lane.b32.xlu0 %v988, 80
      %v1345 = vpop.permute.xlu0 %1344
      %1346 = vrot.lane.b32.xlu0 %v990, 80
      %v1347 = vpop.permute.xlu0 %1346
      %1348 = vrot.lane.b32.xlu0 %v1285, 80
      %v1349 = vpop.permute.xlu0 %1348
      %1350 = vrot.lane.b32.xlu0 %v1287, 80
      %v1351 = vpop.permute.xlu0 %1350
      %1384 = vrot.lane.b32.xlu0 %v680, 96
      %v1385 = vpop.permute.xlu0 %1384
      %1386 = vrot.lane.b32.xlu0 %v589, 96
      %v1387 = vpop.permute.xlu0 %1386
      %1388 = vrot.lane.b32.xlu0 %v681, 96
      %v1389 = vpop.permute.xlu0 %1388
      %1390 = vrot.lane.b32.xlu0 %v592, 96
      %v1391 = vpop.permute.xlu0 %1390
      %1392 = vrot.lane.b32.xlu0 %v682, 96
      %v1393 = vpop.permute.xlu0 %1392
      %1394 = vrot.lane.b32.xlu0 %v595, 96
      %v1395 = vpop.permute.xlu0 %1394
      %1396 = vrot.lane.b32.xlu0 %v683, 96
      %v1397 = vpop.permute.xlu0 %1396
      %1398 = vrot.lane.b32.xlu0 %v598, 96
      %v1399 = vpop.permute.xlu0 %1398
      %1400 = vrot.lane.b32.xlu0 %v684, 96
      %v1401 = vpop.permute.xlu0 %1400
      %1402 = vrot.lane.b32.xlu0 %v601, 96
      %v1403 = vpop.permute.xlu0 %1402
      %1404 = vrot.lane.b32.xlu0 %v685, 96
      %v1405 = vpop.permute.xlu0 %1404
      %1406 = vrot.lane.b32.xlu0 %v604, 96
      %v1407 = vpop.permute.xlu0 %1406
      %1408 = vrot.lane.b32.xlu0 %v686, 96
      %v1409 = vpop.permute.xlu0 %1408
      %1410 = vrot.lane.b32.xlu0 %v607, 96
      %v1411 = vpop.permute.xlu0 %1410
      %1412 = vrot.lane.b32.xlu0 %v687, 96
      %v1413 = vpop.permute.xlu0 %1412
      %1414 = vrot.lane.b32.xlu0 %v610, 96
      %v1415 = vpop.permute.xlu0 %1414
      %1416 = vrot.lane.b32.xlu0 %v688, 96
      %v1417 = vpop.permute.xlu0 %1416
      %1418 = vrot.lane.b32.xlu0 %v613, 96
      %v1419 = vpop.permute.xlu0 %1418
      %1420 = vrot.lane.b32.xlu0 %v689, 96
      %v1421 = vpop.permute.xlu0 %1420
      %1422 = vrot.lane.b32.xlu0 %v616, 96
      %v1423 = vpop.permute.xlu0 %1422
      %1424 = vrot.lane.b32.xlu0 %v690, 96
      %v1425 = vpop.permute.xlu0 %1424
      %1426 = vrot.lane.b32.xlu0 %v619, 96
      %v1427 = vpop.permute.xlu0 %1426
      %1428 = vrot.lane.b32.xlu0 %v691, 96
      %v1429 = vpop.permute.xlu0 %1428
      %1430 = vrot.lane.b32.xlu0 %v622, 96
      %v1431 = vpop.permute.xlu0 %1430
      %1432 = vrot.lane.b32.xlu0 %v692, 96
      %v1433 = vpop.permute.xlu0 %1432
      %1434 = vrot.lane.b32.xlu0 %v625, 96
      %v1435 = vpop.permute.xlu0 %1434
      %1436 = vrot.lane.b32.xlu0 %v693, 96
      %v1437 = vpop.permute.xlu0 %1436
      %1438 = vrot.lane.b32.xlu0 %v628, 96
      %v1439 = vpop.permute.xlu0 %1438
      %1440 = vrot.lane.b32.xlu0 %v694, 96
      %v1441 = vpop.permute.xlu0 %1440
      %1442 = vrot.lane.b32.xlu0 %v631, 96
      %v1443 = vpop.permute.xlu0 %1442
      %1444 = vrot.lane.b32.xlu0 0.0, 96
      %v1445 = vpop.permute.xlu0 %1444
      %1477 = vrot.lane.b32.xlu0 %v752, 112
      %v1478 = vpop.permute.xlu0 %1477
      %1479 = vrot.lane.b32.xlu0 %v754, 112
      %v1480 = vpop.permute.xlu0 %1479
      %1481 = vrot.lane.b32.xlu0 %v757, 112
      %v1482 = vpop.permute.xlu0 %1481
      %1483 = vrot.lane.b32.xlu0 %v759, 112
      %v1484 = vpop.permute.xlu0 %1483
      %1485 = vrot.lane.b32.xlu0 %v762, 112
      %v1486 = vpop.permute.xlu0 %1485
      %1487 = vrot.lane.b32.xlu0 %v764, 112
      %v1488 = vpop.permute.xlu0 %1487
      %1489 = vrot.lane.b32.xlu0 %v767, 112
      %v1490 = vpop.permute.xlu0 %1489
      %1491 = vrot.lane.b32.xlu0 %v769, 112
      %v1492 = vpop.permute.xlu0 %1491
      %1493 = vrot.lane.b32.xlu0 %v772, 112
      %v1494 = vpop.permute.xlu0 %1493
      %1495 = vrot.lane.b32.xlu0 %v774, 112
      %v1496 = vpop.permute.xlu0 %1495
      %1497 = vrot.lane.b32.xlu0 %v777, 112
      %v1498 = vpop.permute.xlu0 %1497
      %1499 = vrot.lane.b32.xlu0 %v779, 112
      %v1500 = vpop.permute.xlu0 %1499
      %1501 = vrot.lane.b32.xlu0 %v782, 112
      %v1502 = vpop.permute.xlu0 %1501
      %1503 = vrot.lane.b32.xlu0 %v784, 112
      %v1504 = vpop.permute.xlu0 %1503
      %1505 = vrot.lane.b32.xlu0 %v787, 112
      %v1506 = vpop.permute.xlu0 %1505
      %1507 = vrot.lane.b32.xlu0 %v789, 112
      %v1508 = vpop.permute.xlu0 %1507
      %1509 = vrot.lane.b32.xlu0 %v792, 112
      %v1510 = vpop.permute.xlu0 %1509
      %1511 = vrot.lane.b32.xlu0 %v794, 112
      %v1512 = vpop.permute.xlu0 %1511
      %1513 = vrot.lane.b32.xlu0 %v797, 112
      %v1514 = vpop.permute.xlu0 %1513
      %1515 = vrot.lane.b32.xlu0 %v799, 112
      %v1516 = vpop.permute.xlu0 %1515
      %1517 = vrot.lane.b32.xlu0 %v802, 112
      %v1518 = vpop.permute.xlu0 %1517
      %1519 = vrot.lane.b32.xlu0 %v804, 112
      %v1520 = vpop.permute.xlu0 %1519
      %1521 = vrot.lane.b32.xlu0 %v807, 112
      %v1522 = vpop.permute.xlu0 %1521
      %1523 = vrot.lane.b32.xlu0 %v809, 112
      %v1524 = vpop.permute.xlu0 %1523
      %1525 = vrot.lane.b32.xlu0 %v812, 112
      %v1526 = vpop.permute.xlu0 %1525
      %1527 = vrot.lane.b32.xlu0 %v814, 112
      %v1528 = vpop.permute.xlu0 %1527
      %1529 = vrot.lane.b32.xlu0 %v817, 112
      %v1530 = vpop.permute.xlu0 %1529
      %1531 = vrot.lane.b32.xlu0 %v819, 112
      %v1532 = vpop.permute.xlu0 %1531
      %1533 = vrot.lane.b32.xlu0 %v1184, 112
      %v1534 = vpop.permute.xlu0 %1533
      %1535 = vrot.lane.b32.xlu0 %v1186, 112
      %v1536 = vpop.permute.xlu0 %1535
      %1537 = vrot.lane.b32.xlu0 %v744, 112
      %v1538 = vpop.permute.xlu0 %1537
      %vm1570 = vcmask 130048
      %v1571 = vsel %vm1570, 0.0, %v821
      %v1572 = vsel %vm1570, %v679, %v823
      %v1573 = vsel %vm1570, %v586, %v825
      %v1574 = vsel %vm1570, %v680, %v827
      %v1575 = vsel %vm1570, %v589, %v829
      %v1576 = vsel %vm1570, %v681, %v831
      %v1577 = vsel %vm1570, %v592, %v833
      %v1578 = vsel %vm1570, %v682, %v835
      %v1579 = vsel %vm1570, %v595, %v837
      %v1580 = vsel %vm1570, %v683, %v839
      %v1581 = vsel %vm1570, %v598, %v841
      %v1582 = vsel %vm1570, %v684, %v843
      %v1583 = vsel %vm1570, %v601, %v845
      %v1584 = vsel %vm1570, %v685, %v847
      %v1585 = vsel %vm1570, %v604, %v849
      %v1586 = vsel %vm1570, %v686, %v851
      %v1587 = vsel %vm1570, %v607, %v853
      %v1588 = vsel %vm1570, %v687, %v855
      %v1589 = vsel %vm1570, %v610, %v857
      %v1590 = vsel %vm1570, %v688, %v859
      %v1591 = vsel %vm1570, %v613, %v861
      %v1592 = vsel %vm1570, %v689, %v863
      %v1593 = vsel %vm1570, %v616, %v865
      %v1594 = vsel %vm1570, %v690, %v867
      %v1595 = vsel %vm1570, %v619, %v869
      %v1596 = vsel %vm1570, %v691, %v871
      %v1597 = vsel %vm1570, %v622, %v873
      %v1598 = vsel %vm1570, %v692, %v875
      %v1599 = vsel %vm1570, %v625, %v877
      %v1600 = vsel %vm1570, %v693, %v879
      %v1601 = vsel %vm1570, %v628, %v881
      %vm1602 = vcmask 261120
      %v1603 = vsel %vm1602, %v1571, %v992
      %v1604 = vsel %vm1602, %v1572, %v994
      %v1605 = vsel %vm1602, %v1573, %v996
      %v1606 = vsel %vm1602, %v1574, %v998
      %v1607 = vsel %vm1602, %v1575, %v1000
      %v1608 = vsel %vm1602, %v1576, %v1002
      %v1609 = vsel %vm1602, %v1577, %v1004
      %v1610 = vsel %vm1602, %v1578, %v1006
      %v1611 = vsel %vm1602, %v1579, %v1008
      %v1612 = vsel %vm1602, %v1580, %v1010
      %v1613 = vsel %vm1602, %v1581, %v1012
      %v1614 = vsel %vm1602, %v1582, %v1014
      %v1615 = vsel %vm1602, %v1583, %v1016
      %v1616 = vsel %vm1602, %v1584, %v1018
      %v1617 = vsel %vm1602, %v1585, %v1020
      %v1618 = vsel %vm1602, %v1586, %v1022
      %v1619 = vsel %vm1602, %v1587, %v1024
      %v1620 = vsel %vm1602, %v1588, %v1026
      %v1621 = vsel %vm1602, %v1589, %v1028
      %v1622 = vsel %vm1602, %v1590, %v1030
      %v1623 = vsel %vm1602, %v1591, %v1032
      %v1624 = vsel %vm1602, %v1592, %v1034
      %v1625 = vsel %vm1602, %v1593, %v1036
      %v1626 = vsel %vm1602, %v1594, %v1038
      %v1627 = vsel %vm1602, %v1595, %v1040
      %v1628 = vsel %vm1602, %v1596, %v1042
      %v1629 = vsel %vm1602, %v1597, %v1044
      %v1630 = vsel %vm1602, %v1598, %v1046
      %v1631 = vsel %vm1602, %v1599, %v1048
      %v1632 = vsel %vm1602, %v1600, %v1050
      %v1633 = vsel %vm1602, %v1601, %v1052
      %vm1634 = vcmask 392192
      %v1635 = vsel %vm1634, %v1603, %v1086
      %v1636 = vsel %vm1634, %v1603, %v1088
      %v1637 = vsel %vm1634, %v1604, %v1090
      %v1638 = vsel %vm1634, %v1605, %v1092
      %v1639 = vsel %vm1634, %v1606, %v1094
      %v1640 = vsel %vm1634, %v1607, %v1096
      %v1641 = vsel %vm1634, %v1608, %v1098
      %v1642 = vsel %vm1634, %v1609, %v1100
      %v1643 = vsel %vm1634, %v1610, %v1102
      %v1644 = vsel %vm1634, %v1611, %v1104
      %v1645 = vsel %vm1634, %v1612, %v1106
      %v1646 = vsel %vm1634, %v1613, %v1108
      %v1647 = vsel %vm1634, %v1614, %v1110
      %v1648 = vsel %vm1634, %v1615, %v1112
      %v1649 = vsel %vm1634, %v1616, %v1114
      %v1650 = vsel %vm1634, %v1617, %v1116
      %v1651 = vsel %vm1634, %v1618, %v1118
      %v1652 = vsel %vm1634, %v1619, %v1120
      %v1653 = vsel %vm1634, %v1620, %v1122
      %v1654 = vsel %vm1634, %v1621, %v1124
      %v1655 = vsel %vm1634, %v1622, %v1126
      %v1656 = vsel %vm1634, %v1623, %v1128
      %v1657 = vsel %vm1634, %v1624, %v1130
      %v1658 = vsel %vm1634, %v1625, %v1132
      %v1659 = vsel %vm1634, %v1626, %v1134
      %v1660 = vsel %vm1634, %v1627, %v1136
      %v1661 = vsel %vm1634, %v1628, %v1138
      %v1662 = vsel %vm1634, %v1629, %v1140
      %v1663 = vsel %vm1634, %v1630, %v1142
      %v1664 = vsel %vm1634, %v1631, %v1144
      %v1665 = vsel %vm1634, %v1632, %v1146
      %v1666 = vsel %vm1634, %v1633, %v1148
      %vm1667 = vcmask 523264
      %v1668 = vsel %vm1667, %v1635, %v1188
      %v1669 = vsel %vm1667, %v1636, %v1190
      %v1670 = vsel %vm1667, %v1637, %v1192
      %v1671 = vsel %vm1667, %v1638, %v1194
      %v1672 = vsel %vm1667, %v1639, %v1196
      %v1673 = vsel %vm1667, %v1640, %v1198
      %v1674 = vsel %vm1667, %v1641, %v1200
      %v1675 = vsel %vm1667, %v1642, %v1202
      %v1676 = vsel %vm1667, %v1643, %v1204
      %v1677 = vsel %vm1667, %v1644, %v1206
      %v1678 = vsel %vm1667, %v1645, %v1208
      %v1679 = vsel %vm1667, %v1646, %v1210
      %v1680 = vsel %vm1667, %v1647, %v1212
      %v1681 = vsel %vm1667, %v1648, %v1214
      %v1682 = vsel %vm1667, %v1649, %v1216
      %v1683 = vsel %vm1667, %v1650, %v1218
      %v1684 = vsel %vm1667, %v1651, %v1220
      %v1685 = vsel %vm1667, %v1652, %v1222
      %v1686 = vsel %vm1667, %v1653, %v1224
      %v1687 = vsel %vm1667, %v1654, %v1226
      %v1688 = vsel %vm1667, %v1655, %v1228
      %v1689 = vsel %vm1667, %v1656, %v1230
      %v1690 = vsel %vm1667, %v1657, %v1232
      %v1691 = vsel %vm1667, %v1658, %v1234
      %v1692 = vsel %vm1667, %v1659, %v1236
      %v1693 = vsel %vm1667, %v1660, %v1238
      %v1694 = vsel %vm1667, %v1661, %v1240
      %v1695 = vsel %vm1667, %v1662, %v1242
      %v1696 = vsel %vm1667, %v1663, %v1244
      %v1697 = vsel %vm1667, %v1664, %v1246
      %v1698 = vsel %vm1667, %v1665, %v1248
      %v1699 = vsel %vm1667, %v1666, %v1250
      %vm1700 = vcmask 654336
      %v1701 = vsel %vm1700, %v1668, %v1289
      %v1702 = vsel %vm1700, %v1669, %v1291
      %v1703 = vsel %vm1700, %v1670, %v1293
      %v1704 = vsel %vm1700, %v1671, %v1295
      %v1705 = vsel %vm1700, %v1672, %v1297
      %v1706 = vsel %vm1700, %v1673, %v1299
      %v1707 = vsel %vm1700, %v1674, %v1301
      %v1708 = vsel %vm1700, %v1675, %v1303
      %v1709 = vsel %vm1700, %v1676, %v1305
      %v1710 = vsel %vm1700, %v1677, %v1307
      %v1711 = vsel %vm1700, %v1678, %v1309
      %v1712 = vsel %vm1700, %v1679, %v1311
      %v1713 = vsel %vm1700, %v1680, %v1313
      %v1714 = vsel %vm1700, %v1681, %v1315
      %v1715 = vsel %vm1700, %v1682, %v1317
      %v1716 = vsel %vm1700, %v1683, %v1319
      %v1717 = vsel %vm1700, %v1684, %v1321
      %v1718 = vsel %vm1700, %v1685, %v1323
      %v1719 = vsel %vm1700, %v1686, %v1325
      %v1720 = vsel %vm1700, %v1687, %v1327
      %v1721 = vsel %vm1700, %v1688, %v1329
      %v1722 = vsel %vm1700, %v1689, %v1331
      %v1723 = vsel %vm1700, %v1690, %v1333
      %v1724 = vsel %vm1700, %v1691, %v1335
      %v1725 = vsel %vm1700, %v1692, %v1337
      %v1726 = vsel %vm1700, %v1693, %v1339
      %v1727 = vsel %vm1700, %v1694, %v1341
      %v1728 = vsel %vm1700, %v1695, %v1343
      %v1729 = vsel %vm1700, %v1696, %v1345
      %v1730 = vsel %vm1700, %v1697, %v1347
      %v1731 = vsel %vm1700, %v1698, %v1349
      %v1732 = vsel %vm1700, %v1699, %v1351
      %vm1733 = vcmask 785408
      %v1734 = vsel %vm1733, %v1701, %v1385
      %v1735 = vsel %vm1733, %v1702, %v1387
      %v1736 = vsel %vm1733, %v1703, %v1389
      %v1737 = vsel %vm1733, %v1704, %v1391
      %v1738 = vsel %vm1733, %v1705, %v1393
      %v1739 = vsel %vm1733, %v1706, %v1395
      %v1740 = vsel %vm1733, %v1707, %v1397
      %v1741 = vsel %vm1733, %v1708, %v1399
      %v1742 = vsel %vm1733, %v1709, %v1401
      %v1743 = vsel %vm1733, %v1710, %v1403
      %v1744 = vsel %vm1733, %v1711, %v1405
      %v1745 = vsel %vm1733, %v1712, %v1407
      %v1746 = vsel %vm1733, %v1713, %v1409
      %v1747 = vsel %vm1733, %v1714, %v1411
      %v1748 = vsel %vm1733, %v1715, %v1413
      %v1749 = vsel %vm1733, %v1716, %v1415
      %v1750 = vsel %vm1733, %v1717, %v1417
      %v1751 = vsel %vm1733, %v1718, %v1419
      %v1752 = vsel %vm1733, %v1719, %v1421
      %v1753 = vsel %vm1733, %v1720, %v1423
      %v1754 = vsel %vm1733, %v1721, %v1425
      %v1755 = vsel %vm1733, %v1722, %v1427
      %v1756 = vsel %vm1733, %v1723, %v1429
      %v1757 = vsel %vm1733, %v1724, %v1431
      %v1758 = vsel %vm1733, %v1725, %v1433
      %v1759 = vsel %vm1733, %v1726, %v1435
      %v1760 = vsel %vm1733, %v1727, %v1437
      %v1761 = vsel %vm1733, %v1728, %v1439
      %v1762 = vsel %vm1733, %v1729, %v1441
      %v1763 = vsel %vm1733, %v1730, %v1443
      %v1764 = vsel %vm1733, %v1731, %v1445
      %v1765 = vsel %vm1733, %v1732, %v1445
      %vm1766 = vcmask 916480
      %v1767 = vsel %vm1766, %v1734, %v1478
      %v1768 = vsel %vm1766, %v1735, %v1480
      %v1769 = vsel %vm1766, %v1736, %v1482
      %v1770 = vsel %vm1766, %v1737, %v1484
      %v1771 = vsel %vm1766, %v1738, %v1486
      %v1772 = vsel %vm1766, %v1739, %v1488
      %v1773 = vsel %vm1766, %v1740, %v1490
      %v1774 = vsel %vm1766, %v1741, %v1492
      %v1775 = vsel %vm1766, %v1742, %v1494
      %v1776 = vsel %vm1766, %v1743, %v1496
      %v1777 = vsel %vm1766, %v1744, %v1498
      %v1778 = vsel %vm1766, %v1745, %v1500
      %v1779 = vsel %vm1766, %v1746, %v1502
      %v1780 = vsel %vm1766, %v1747, %v1504
      %v1781 = vsel %vm1766, %v1748, %v1506
      %v1782 = vsel %vm1766, %v1749, %v1508
      %v1783 = vsel %vm1766, %v1750, %v1510
      %v1784 = vsel %vm1766, %v1751, %v1512
      %v1785 = vsel %vm1766, %v1752, %v1514
      %v1786 = vsel %vm1766, %v1753, %v1516
      %v1787 = vsel %vm1766, %v1754, %v1518
      %v1788 = vsel %vm1766, %v1755, %v1520
      %v1789 = vsel %vm1766, %v1756, %v1522
      %v1790 = vsel %vm1766, %v1757, %v1524
      %v1791 = vsel %vm1766, %v1758, %v1526
      %v1792 = vsel %vm1766, %v1759, %v1528
      %v1793 = vsel %vm1766, %v1760, %v1530
      %v1794 = vsel %vm1766, %v1761, %v1532
      %v1795 = vsel %vm1766, %v1762, %v1534
      %v1796 = vsel %vm1766, %v1763, %v1536
      %v1797 = vsel %vm1766, %v1764, %v1538
      %v1798 = vsel %vm1766, %v1765, %v1538
      %v1799 = vld [vmem:[%s2] sm:$0xff]
      %v1800 = vld [vmem:[%s2 + $0x8] sm:$0xff]
      %v1801 = vld [vmem:[%s2 + $0x10] sm:$0xff]
      %v1802 = vld [vmem:[%s2 + $0x18] sm:$0xff]
      %v1803 = vld [vmem:[%s2 + $0x20] sm:$0xff]
      %v1804 = vld [vmem:[%s2 + $0x28] sm:$0xff]
      %v1805 = vld [vmem:[%s2 + $0x30] sm:$0xff]
      %v1806 = vld [vmem:[%s2 + $0x38] sm:$0xff]
      %v1807 = vld [vmem:[%s2 + $0x40] sm:$0xff]
      %v1808 = vld [vmem:[%s2 + $0x48] sm:$0xff]
      %v1809 = vld [vmem:[%s2 + $0x50] sm:$0xff]
      %v1810 = vld [vmem:[%s2 + $0x58] sm:$0xff]
      %v1811 = vld [vmem:[%s2 + $0x60] sm:$0xff]
      %v1812 = vld [vmem:[%s2 + $0x68] sm:$0xff]
      %v1813 = vld [vmem:[%s2 + $0x70] sm:$0xff]
      %v1814 = vld [vmem:[%s2 + $0x78] sm:$0xff]
      %v1815 = vld [vmem:[%s2 + $0x80] sm:$0xff]
      %v1816 = vld [vmem:[%s2 + $0x88] sm:$0xff]
      %v1817 = vsel %vm1570, %v923, 0
      %v1819 = vsel %vm1570, %v925, 0
      %v1821 = vsel %vm1570, %v928, 0
      %v1823 = vsel %vm1570, %v930, 0
      %v1825 = vsel %vm1570, %v933, 0
      %v1827 = vsel %vm1570, %v935, 0
      %v1829 = vsel %vm1570, %v938, 0
      %v1831 = vsel %vm1570, %v940, 0
      %v1833 = vsel %vm1570, %v943, 0
      %v1835 = vsel %vm1570, %v945, 0
      %v1837 = vsel %vm1570, %v948, 0
      %v1839 = vsel %vm1570, %v950, 0
      %v1841 = vsel %vm1570, %v953, 0
      %v1843 = vsel %vm1570, %v955, 0
      %v1845 = vsel %vm1570, %v958, 0
      %v1847 = vsel %vm1570, %v960, 0
      %v1849 = vsel %vm1570, %v963, 0
      %v1851 = vsel %vm1570, %v965, 0
      %v1853 = vsel %vm1570, %v968, 0
      %v1855 = vsel %vm1570, %v970, 0
      %v1857 = vsel %vm1570, %v973, 0
      %v1859 = vsel %vm1570, %v975, 0
      %v1861 = vsel %vm1570, %v978, 0
      %v1863 = vsel %vm1570, %v980, 0
      %v1865 = vsel %vm1570, %v983, 0
      %v1867 = vsel %vm1570, %v985, 0
      %v1869 = vsel %vm1570, %v988, 0
      %v1871 = vsel %vm1570, %v990, 0
      %v1873 = vsel %vm1570, %v1285, 0
      %v1875 = vsel %vm1570, %v1287, 0
      %v1877 = vsel %vm1570, %v915, 0
      %1879 = vmatpush.msra.mxu0 %v1814
      %1880 = vmatpush.msra.mxu0 %v1813
      %1881 = vmatpush.msra.mxu0 %v1812
      %1882 = vmatpush.msra.mxu0 %v1811
      %1883 = vmatpush.msra.mxu0 %v1810
      %1884 = vmatpush.msra.mxu0 %v1809
      %1885 = vmatpush.msra.mxu0 %v1808
      %1886 = vmatpush.msra.mxu0 %v1807
      %1887 = vmatpush.msra.mxu0 %v1806
      %1888 = vmatpush.msra.mxu0 %v1805
      %1889 = vmatpush.msra.mxu0 %v1804
      %1890 = vmatpush.msra.mxu0 %v1803
      %1891 = vmatpush.msra.mxu0 %v1802
      %1892 = vmatpush.msra.mxu0 %v1801
      %1893 = vmatpush.msra.mxu0 %v1800
      %1894 = vmatpush.msra.mxu0 %v1799
      %1895 = vmatmul.f32.gmra.mxu0 %v1767
      %v1896 = vpop.f32.mrf.mxu0
      %v1897 = vadd.f32 0.0, %v1896
      %1898 = vmatmul.f32.gmra.mxu0 %v1768
      %v1899 = vpop.f32.mrf.mxu0
      %v1900 = vadd.f32 0.0, %v1899
      %1901 = vmatmul.f32.gmra.mxu0 %v1769
      %v1902 = vpop.f32.mrf.mxu0
      %v1903 = vadd.f32 0.0, %v1902
      %1904 = vmatmul.f32.gmra.mxu0 %v1770
      %v1905 = vpop.f32.mrf.mxu0
      %v1906 = vadd.f32 0.0, %v1905
      %1907 = vmatmul.f32.gmra.mxu0 %v1771
      %v1908 = vpop.f32.mrf.mxu0
      %v1909 = vadd.f32 0.0, %v1908
      %1910 = vmatmul.f32.gmra.mxu0 %v1772
      %v1911 = vpop.f32.mrf.mxu0
      %v1912 = vadd.f32 0.0, %v1911
      %1913 = vmatmul.f32.gmra.mxu0 %v1773
      %v1914 = vpop.f32.mrf.mxu0
      %v1915 = vadd.f32 0.0, %v1914
      %1916 = vmatmul.f32.gmra.mxu0 %v1774
      %v1917 = vpop.f32.mrf.mxu0
      %v1918 = vadd.f32 0.0, %v1917
      %1919 = vmatmul.f32.gmra.mxu0 %v1775
      %v1920 = vpop.f32.mrf.mxu0
      %v1921 = vadd.f32 0.0, %v1920
      %1922 = vmatmul.f32.gmra.mxu0 %v1776
      %v1923 = vpop.f32.mrf.mxu0
      %v1924 = vadd.f32 0.0, %v1923
      %1925 = vmatmul.f32.gmra.mxu0 %v1777
      %v1926 = vpop.f32.mrf.mxu0
      %v1927 = vadd.f32 0.0, %v1926
      %1928 = vmatmul.f32.gmra.mxu0 %v1778
      %v1929 = vpop.f32.mrf.mxu0
      %v1930 = vadd.f32 0.0, %v1929
      %1931 = vmatmul.f32.gmra.mxu0 %v1779
      %v1932 = vpop.f32.mrf.mxu0
      %v1933 = vadd.f32 0.0, %v1932
      %1934 = vmatmul.f32.gmra.mxu0 %v1780
      %v1935 = vpop.f32.mrf.mxu0
      %v1936 = vadd.f32 0.0, %v1935
      %1937 = vmatmul.f32.gmra.mxu0 %v1781
      %v1938 = vpop.f32.mrf.mxu0
      %v1939 = vadd.f32 0.0, %v1938
      %1940 = vmatmul.f32.gmra.mxu0 %v1782
      %v1941 = vpop.f32.mrf.mxu0
      %v1942 = vadd.f32 0.0, %v1941
      %1943 = vmatmul.f32.gmra.mxu0 %v1783
      %v1944 = vpop.f32.mrf.mxu0
      %v1945 = vadd.f32 0.0, %v1944
      %1946 = vmatmul.f32.gmra.mxu0 %v1784
      %v1947 = vpop.f32.mrf.mxu0
      %v1948 = vadd.f32 0.0, %v1947
      %1949 = vmatmul.f32.gmra.mxu0 %v1785
      %v1950 = vpop.f32.mrf.mxu0
      %v1951 = vadd.f32 0.0, %v1950
      %1952 = vmatmul.f32.gmra.mxu0 %v1786
      %v1953 = vpop.f32.mrf.mxu0
      %v1954 = vadd.f32 0.0, %v1953
      %1955 = vmatmul.f32.gmra.mxu0 %v1787
      %v1956 = vpop.f32.mrf.mxu0
      %v1957 = vadd.f32 0.0, %v1956
      %1958 = vmatmul.f32.gmra.mxu0 %v1788
      %v1959 = vpop.f32.mrf.mxu0
      %v1960 = vadd.f32 0.0, %v1959
      %1961 = vmatmul.f32.gmra.mxu0 %v1789
      %v1962 = vpop.f32.mrf.mxu0
      %v1963 = vadd.f32 0.0, %v1962
      %1964 = vmatmul.f32.gmra.mxu0 %v1790
      %v1965 = vpop.f32.mrf.mxu0
      %v1966 = vadd.f32 0.0, %v1965
      %1967 = vmatmul.f32.gmra.mxu0 %v1791
      %v1968 = vpop.f32.mrf.mxu0
      %v1969 = vadd.f32 0.0, %v1968
      %1970 = vmatmul.f32.gmra.mxu0 %v1792
      %v1971 = vpop.f32.mrf.mxu0
      %v1972 = vadd.f32 0.0, %v1971
      %1973 = vmatmul.f32.gmra.mxu0 %v1793
      %v1974 = vpop.f32.mrf.mxu0
      %v1975 = vadd.f32 0.0, %v1974
      %1976 = vmatmul.f32.gmra.mxu0 %v1794
      %v1977 = vpop.f32.mrf.mxu0
      %v1978 = vadd.f32 0.0, %v1977
      %1979 = vmatmul.f32.gmra.mxu0 %v1795
      %v1980 = vpop.f32.mrf.mxu0
      %v1981 = vadd.f32 0.0, %v1980
      %1982 = vmatmul.f32.gmra.mxu0 %v1796
      %v1983 = vpop.f32.mrf.mxu0
      %v1984 = vadd.f32 0.0, %v1983
      %1985 = vmatmul.f32.gmra.mxu0 %v1797
      %v1986 = vpop.f32.mrf.mxu0
      %v1987 = vadd.f32 0.0, %v1986
      %1988 = vmatmul.f32.gmra.mxu0 %v1798
      %v1989 = vpop.f32.mrf.mxu0
      %v1990 = vadd.f32 0.0, %v1989
      %1991 = vdwg.mxu0
      %1992 = vmatpush.msra.mxu0 0.0
      %1993 = vmatpush.msra.mxu0 0.0
      %1994 = vmatpush.msra.mxu0 0.0
      %1995 = vmatpush.msra.mxu0 0.0
      %1996 = vmatpush.msra.mxu0 0.0
      %1997 = vmatpush.msra.mxu0 0.0
      %1998 = vmatpush.msra.mxu0 0.0
      %1999 = vmatpush.msra.mxu0 0.0
      %2000 = vmatpush.msra.mxu0 0.0
      %2001 = vmatpush.msra.mxu0 0.0
      %2002 = vmatpush.msra.mxu0 0.0
      %2003 = vmatpush.msra.mxu0 0.0
      %2004 = vmatpush.msra.mxu0 0.0
      %2005 = vmatpush.msra.mxu0 0.0
      %2006 = vmatpush.msra.mxu0 %v1816
      %2007 = vmatpush.msra.mxu0 %v1815
      %2008 = vmatmul.f32.gmra.mxu0 %v1817
      %v2009 = vpop.f32.mrf.mxu0
      %v2010 = vadd.f32 %v1897, %v2009
      %2011 = vmatmul.f32.gmra.mxu0 %v1819
      %v2012 = vpop.f32.mrf.mxu0
      %v2013 = vadd.f32 %v1900, %v2012
      %2014 = vmatmul.f32.gmra.mxu0 %v1821
      %v2015 = vpop.f32.mrf.mxu0
      %v2016 = vadd.f32 %v1903, %v2015
      %2017 = vmatmul.f32.gmra.mxu0 %v1823
      %v2018 = vpop.f32.mrf.mxu0
      %v2019 = vadd.f32 %v1906, %v2018
      %2020 = vmatmul.f32.gmra.mxu0 %v1825
      %v2021 = vpop.f32.mrf.mxu0
      %v2022 = vadd.f32 %v1909, %v2021
      %2023 = vmatmul.f32.gmra.mxu0 %v1827
      %v2024 = vpop.f32.mrf.mxu0
      %v2025 = vadd.f32 %v1912, %v2024
      %2026 = vmatmul.f32.gmra.mxu0 %v1829
      %v2027 = vpop.f32.mrf.mxu0
      %v2028 = vadd.f32 %v1915, %v2027
      %2029 = vmatmul.f32.gmra.mxu0 %v1831
      %v2030 = vpop.f32.mrf.mxu0
      %v2031 = vadd.f32 %v1918, %v2030
      %2032 = vmatmul.f32.gmra.mxu0 %v1833
      %v2033 = vpop.f32.mrf.mxu0
      %v2034 = vadd.f32 %v1921, %v2033
      %2035 = vmatmul.f32.gmra.mxu0 %v1835
      %v2036 = vpop.f32.mrf.mxu0
      %v2037 = vadd.f32 %v1924, %v2036
      %2038 = vmatmul.f32.gmra.mxu0 %v1837
      %v2039 = vpop.f32.mrf.mxu0
      %v2040 = vadd.f32 %v1927, %v2039
      %2041 = vmatmul.f32.gmra.mxu0 %v1839
      %v2042 = vpop.f32.mrf.mxu0
      %v2043 = vadd.f32 %v1930, %v2042
      %2044 = vmatmul.f32.gmra.mxu0 %v1841
      %v2045 = vpop.f32.mrf.mxu0
      %v2046 = vadd.f32 %v1933, %v2045
      %2047 = vmatmul.f32.gmra.mxu0 %v1843
      %v2048 = vpop.f32.mrf.mxu0
      %v2049 = vadd.f32 %v1936, %v2048
      %2050 = vmatmul.f32.gmra.mxu0 %v1845
      %v2051 = vpop.f32.mrf.mxu0
      %v2052 = vadd.f32 %v1939, %v2051
      %2053 = vmatmul.f32.gmra.mxu0 %v1847
      %v2054 = vpop.f32.mrf.mxu0
      %v2055 = vadd.f32 %v1942, %v2054
      %2056 = vmatmul.f32.gmra.mxu0 %v1849
      %v2057 = vpop.f32.mrf.mxu0
      %v2058 = vadd.f32 %v1945, %v2057
      %2059 = vmatmul.f32.gmra.mxu0 %v1851
      %v2060 = vpop.f32.mrf.mxu0
      %v2061 = vadd.f32 %v1948, %v2060
      %2062 = vmatmul.f32.gmra.mxu0 %v1853
      %v2063 = vpop.f32.mrf.mxu0
      %v2064 = vadd.f32 %v1951, %v2063
      %2065 = vmatmul.f32.gmra.mxu0 %v1855
      %v2066 = vpop.f32.mrf.mxu0
      %v2067 = vadd.f32 %v1954, %v2066
      %2068 = vmatmul.f32.gmra.mxu0 %v1857
      %v2069 = vpop.f32.mrf.mxu0
      %v2070 = vadd.f32 %v1957, %v2069
      %2071 = vmatmul.f32.gmra.mxu0 %v1859
      %v2072 = vpop.f32.mrf.mxu0
      %v2073 = vadd.f32 %v1960, %v2072
      %2074 = vmatmul.f32.gmra.mxu0 %v1861
      %v2075 = vpop.f32.mrf.mxu0
      %v2076 = vadd.f32 %v1963, %v2075
      %2077 = vmatmul.f32.gmra.mxu0 %v1863
      %v2078 = vpop.f32.mrf.mxu0
      %v2079 = vadd.f32 %v1966, %v2078
      %2080 = vmatmul.f32.gmra.mxu0 %v1865
      %v2081 = vpop.f32.mrf.mxu0
      %v2082 = vadd.f32 %v1969, %v2081
      %2083 = vmatmul.f32.gmra.mxu0 %v1867
      %v2084 = vpop.f32.mrf.mxu0
      %v2085 = vadd.f32 %v1972, %v2084
      %2086 = vmatmul.f32.gmra.mxu0 %v1869
      %v2087 = vpop.f32.mrf.mxu0
      %v2088 = vadd.f32 %v1975, %v2087
      %2089 = vmatmul.f32.gmra.mxu0 %v1871
      %v2090 = vpop.f32.mrf.mxu0
      %v2091 = vadd.f32 %v1978, %v2090
      %2092 = vmatmul.f32.gmra.mxu0 %v1873
      %v2093 = vpop.f32.mrf.mxu0
      %v2094 = vadd.f32 %v1981, %v2093
      %2095 = vmatmul.f32.gmra.mxu0 %v1875
      %v2096 = vpop.f32.mrf.mxu0
      %v2097 = vadd.f32 %v1984, %v2096
      %2098 = vmatmul.f32.gmra.mxu0 %v1877
      %v2099 = vpop.f32.mrf.mxu0
      %v2100 = vadd.f32 %v1987, %v2099
      %2101 = vmatmul.f32.gmra.mxu0 %v1877
      %v2102 = vpop.f32.mrf.mxu0
      %v2103 = vadd.f32 %v1990, %v2102
      %2104 = vdwg.mxu0
      %v2105 = vld [vmem:[%s3] sm:$0x1]
      %v2107 = vperm.slane %v2105, 0
      %v2109 = vmul.f32 %v2010, %v2107
      %v2110 = vmul.f32 %v2013, %v2107
      %v2111 = vmul.f32 %v2016, %v2107
      %v2112 = vmul.f32 %v2019, %v2107
      %v2113 = vmul.f32 %v2022, %v2107
      %v2114 = vmul.f32 %v2025, %v2107
      %v2115 = vmul.f32 %v2028, %v2107
      %v2116 = vmul.f32 %v2031, %v2107
      %v2117 = vmul.f32 %v2034, %v2107
      %v2118 = vmul.f32 %v2037, %v2107
      %v2119 = vmul.f32 %v2040, %v2107
      %v2120 = vmul.f32 %v2043, %v2107
      %v2121 = vmul.f32 %v2046, %v2107
      %v2122 = vmul.f32 %v2049, %v2107
      %v2123 = vmul.f32 %v2052, %v2107
      %v2124 = vmul.f32 %v2055, %v2107
      %v2125 = vmul.f32 %v2058, %v2107
      %v2126 = vmul.f32 %v2061, %v2107
      %v2127 = vmul.f32 %v2064, %v2107
      %v2128 = vmul.f32 %v2067, %v2107
      %v2129 = vmul.f32 %v2070, %v2107
      %v2130 = vmul.f32 %v2073, %v2107
      %v2131 = vmul.f32 %v2076, %v2107
      %v2132 = vmul.f32 %v2079, %v2107
      %v2133 = vmul.f32 %v2082, %v2107
      %v2134 = vmul.f32 %v2085, %v2107
      %v2135 = vmul.f32 %v2088, %v2107
      %v2136 = vmul.f32 %v2091, %v2107
      %v2137 = vmul.f32 %v2094, %v2107
      %v2138 = vmul.f32 %v2097, %v2107
      %v2139 = vmul.f32 %v2100, %v2107
      %v2140 = vmul.f32 %v2103, %v2107
      %v2141 = vld [vmem:[%s4] sm:$0x1]
      %v2143 = vperm.slane %v2141, 0
      %v2145 = vadd.f32 %v2109, %v2143
      %v2146 = vadd.f32 %v2110, %v2143
      %v2147 = vadd.f32 %v2111, %v2143
      %v2148 = vadd.f32 %v2112, %v2143
      %v2149 = vadd.f32 %v2113, %v2143
      %v2150 = vadd.f32 %v2114, %v2143
      %v2151 = vadd.f32 %v2115, %v2143
      %v2152 = vadd.f32 %v2116, %v2143
      %v2153 = vadd.f32 %v2117, %v2143
      %v2154 = vadd.f32 %v2118, %v2143
      %v2155 = vadd.f32 %v2119, %v2143
      %v2156 = vadd.f32 %v2120, %v2143
      %v2157 = vadd.f32 %v2121, %v2143
      %v2158 = vadd.f32 %v2122, %v2143
      %v2159 = vadd.f32 %v2123, %v2143
      %v2160 = vadd.f32 %v2124, %v2143
      %v2161 = vadd.f32 %v2125, %v2143
      %v2162 = vadd.f32 %v2126, %v2143
      %v2163 = vadd.f32 %v2127, %v2143
      %v2164 = vadd.f32 %v2128, %v2143
      %v2165 = vadd.f32 %v2129, %v2143
      %v2166 = vadd.f32 %v2130, %v2143
      %v2167 = vadd.f32 %v2131, %v2143
      %v2168 = vadd.f32 %v2132, %v2143
      %v2169 = vadd.f32 %v2133, %v2143
      %v2170 = vadd.f32 %v2134, %v2143
      %v2171 = vadd.f32 %v2135, %v2143
      %v2172 = vadd.f32 %v2136, %v2143
      %v2173 = vadd.f32 %v2137, %v2143
      %v2174 = vadd.f32 %v2138, %v2143
      %v2175 = vadd.f32 %v2139, %v2143
      %v2176 = vadd.f32 %v2140, %v2143
      %v2177 = vmax.f32 %v2145, 0.0
      %v2178 = vmax.f32 %v2146, 0.0
      %v2179 = vmax.f32 %v2147, 0.0
      %v2180 = vmax.f32 %v2148, 0.0
      %v2181 = vmax.f32 %v2149, 0.0
      %v2182 = vmax.f32 %v2150, 0.0
      %v2183 = vmax.f32 %v2151, 0.0
      %v2184 = vmax.f32 %v2152, 0.0
      %v2185 = vmax.f32 %v2153, 0.0
      %v2186 = vmax.f32 %v2154, 0.0
      %v2187 = vmax.f32 %v2155, 0.0
      %v2188 = vmax.f32 %v2156, 0.0
      %v2189 = vmax.f32 %v2157, 0.0
      %v2190 = vmax.f32 %v2158, 0.0
      %v2191 = vmax.f32 %v2159, 0.0
      %v2192 = vmax.f32 %v2160, 0.0
      %v2193 = vmax.f32 %v2161, 0.0
      %v2194 = vmax.f32 %v2162, 0.0
      %v2195 = vmax.f32 %v2163, 0.0
      %v2196 = vmax.f32 %v2164, 0.0
      %v2197 = vmax.f32 %v2165, 0.0
      %v2198 = vmax.f32 %v2166, 0.0
      %v2199 = vmax.f32 %v2167, 0.0
      %v2200 = vmax.f32 %v2168, 0.0
      %v2201 = vmax.f32 %v2169, 0.0
      %v2202 = vmax.f32 %v2170, 0.0
      %v2203 = vmax.f32 %v2171, 0.0
      %v2204 = vmax.f32 %v2172, 0.0
      %v2205 = vmax.f32 %v2173, 0.0
      %v2206 = vmax.f32 %v2174, 0.0
      %v2207 = vmax.f32 %v2175, 0.0
      %v2208 = vmax.f32 %v2176, 0.0
      %v2241 = vrot.slane %v2177, 7
      %v2242 = vrot.slane %v2178, 7
      %v2243 = vsel %vm583, %v2241, %v2242
      %v2244 = vrot.slane %v2179, 7
      %v2245 = vrot.slane %v2180, 7
      %v2246 = vsel %vm583, %v2244, %v2245
      %v2247 = vrot.slane %v2181, 7
      %v2248 = vrot.slane %v2182, 7
      %v2249 = vsel %vm583, %v2247, %v2248
      %v2250 = vrot.slane %v2183, 7
      %v2251 = vrot.slane %v2184, 7
      %v2252 = vsel %vm583, %v2250, %v2251
      %v2253 = vrot.slane %v2185, 7
      %v2254 = vrot.slane %v2186, 7
      %v2255 = vsel %vm583, %v2253, %v2254
      %v2256 = vrot.slane %v2187, 7
      %v2257 = vrot.slane %v2188, 7
      %v2258 = vsel %vm583, %v2256, %v2257
      %v2259 = vrot.slane %v2189, 7
      %v2260 = vrot.slane %v2190, 7
      %v2261 = vsel %vm583, %v2259, %v2260
      %v2262 = vrot.slane %v2191, 7
      %v2263 = vrot.slane %v2192, 7
      %v2264 = vsel %vm583, %v2262, %v2263
      %v2265 = vrot.slane %v2193, 7
      %v2266 = vrot.slane %v2194, 7
      %v2267 = vsel %vm583, %v2265, %v2266
      %v2268 = vrot.slane %v2195, 7
      %v2269 = vrot.slane %v2196, 7
      %v2270 = vsel %vm583, %v2268, %v2269
      %v2271 = vrot.slane %v2197, 7
      %v2272 = vrot.slane %v2198, 7
      %v2273 = vsel %vm583, %v2271, %v2272
      %v2274 = vrot.slane %v2199, 7
      %v2275 = vrot.slane %v2200, 7
      %v2276 = vsel %vm583, %v2274, %v2275
      %v2277 = vrot.slane %v2201, 7
      %v2278 = vrot.slane %v2202, 7
      %v2279 = vsel %vm583, %v2277, %v2278
      %v2280 = vrot.slane %v2203, 7
      %v2281 = vrot.slane %v2204, 7
      %v2282 = vsel %vm583, %v2280, %v2281
      %v2283 = vrot.slane %v2205, 7
      %v2284 = vrot.slane %v2206, 7
      %v2285 = vsel %vm583, %v2283, %v2284
      %v2286 = vrot.slane %v2207, 7
      %v2287 = vrot.slane %v2208, 7
      %v2288 = vsel %vm583, %v2286, %v2287
      %v2336 = vsel %vm583, 0.0, %v2241
      %v2337 = vsel %vm583, 0.0, %v2244
      %v2338 = vsel %vm583, 0.0, %v2247
      %v2339 = vsel %vm583, 0.0, %v2250
      %v2340 = vsel %vm583, 0.0, %v2253
      %v2341 = vsel %vm583, 0.0, %v2256
      %v2342 = vsel %vm583, 0.0, %v2259
      %v2343 = vsel %vm583, 0.0, %v2262
      %v2344 = vsel %vm583, 0.0, %v2265
      %v2345 = vsel %vm583, 0.0, %v2268
      %v2346 = vsel %vm583, 0.0, %v2271
      %v2347 = vsel %vm583, 0.0, %v2274
      %v2348 = vsel %vm583, 0.0, %v2277
      %v2349 = vsel %vm583, 0.0, %v2280
      %v2350 = vsel %vm583, 0.0, %v2283
      %v2351 = vsel %vm583, 0.0, %v2286
      %v2352 = vsel %vm583, %v2242, 0.0
      %v2353 = vsel %vm583, %v2245, 0.0
      %v2354 = vsel %vm583, %v2248, 0.0
      %v2355 = vsel %vm583, %v2251, 0.0
      %v2356 = vsel %vm583, %v2254, 0.0
      %v2357 = vsel %vm583, %v2257, 0.0
      %v2358 = vsel %vm583, %v2260, 0.0
      %v2359 = vsel %vm583, %v2263, 0.0
      %v2360 = vsel %vm583, %v2266, 0.0
      %v2361 = vsel %vm583, %v2269, 0.0
      %v2362 = vsel %vm583, %v2272, 0.0
      %v2363 = vsel %vm583, %v2275, 0.0
      %v2364 = vsel %vm583, %v2278, 0.0
      %v2365 = vsel %vm583, %v2281, 0.0
      %v2366 = vsel %vm583, %v2284, 0.0
      %v2367 = vsel %vm583, %v2287, 0.0
      %v2398 = vrot.slane %v2336, 1
      %v2399 = vrot.slane %v2243, 1
      %v2400 = vsel %vm742, %v2398, %v2399
      %v2401 = vrot.slane %v2352, 1
      %v2402 = vsel %vm742, %v2399, %v2401
      %v2403 = vrot.slane %v2337, 1
      %v2404 = vrot.slane %v2246, 1
      %v2405 = vsel %vm742, %v2403, %v2404
      %v2406 = vrot.slane %v2353, 1
      %v2407 = vsel %vm742, %v2404, %v2406
      %v2408 = vrot.slane %v2338, 1
      %v2409 = vrot.slane %v2249, 1
      %v2410 = vsel %vm742, %v2408, %v2409
      %v2411 = vrot.slane %v2354, 1
      %v2412 = vsel %vm742, %v2409, %v2411
      %v2413 = vrot.slane %v2339, 1
      %v2414 = vrot.slane %v2252, 1
      %v2415 = vsel %vm742, %v2413, %v2414
      %v2416 = vrot.slane %v2355, 1
      %v2417 = vsel %vm742, %v2414, %v2416
      %v2418 = vrot.slane %v2340, 1
      %v2419 = vrot.slane %v2255, 1
      %v2420 = vsel %vm742, %v2418, %v2419
      %v2421 = vrot.slane %v2356, 1
      %v2422 = vsel %vm742, %v2419, %v2421
      %v2423 = vrot.slane %v2341, 1
      %v2424 = vrot.slane %v2258, 1
      %v2425 = vsel %vm742, %v2423, %v2424
      %v2426 = vrot.slane %v2357, 1
      %v2427 = vsel %vm742, %v2424, %v2426
      %v2428 = vrot.slane %v2342, 1
      %v2429 = vrot.slane %v2261, 1
      %v2430 = vsel %vm742, %v2428, %v2429
      %v2431 = vrot.slane %v2358, 1
      %v2432 = vsel %vm742, %v2429, %v2431
      %v2433 = vrot.slane %v2343, 1
      %v2434 = vrot.slane %v2264, 1
      %v2435 = vsel %vm742, %v2433, %v2434
      %v2436 = vrot.slane %v2359, 1
      %v2437 = vsel %vm742, %v2434, %v2436
      %v2438 = vrot.slane %v2344, 1
      %v2439 = vrot.slane %v2267, 1
      %v2440 = vsel %vm742, %v2438, %v2439
      %v2441 = vrot.slane %v2360, 1
      %v2442 = vsel %vm742, %v2439, %v2441
      %v2443 = vrot.slane %v2345, 1
      %v2444 = vrot.slane %v2270, 1
      %v2445 = vsel %vm742, %v2443, %v2444
      %v2446 = vrot.slane %v2361, 1
      %v2447 = vsel %vm742, %v2444, %v2446
      %v2448 = vrot.slane %v2346, 1
      %v2449 = vrot.slane %v2273, 1
      %v2450 = vsel %vm742, %v2448, %v2449
      %v2451 = vrot.slane %v2362, 1
      %v2452 = vsel %vm742, %v2449, %v2451
      %v2453 = vrot.slane %v2347, 1
      %v2454 = vrot.slane %v2276, 1
      %v2455 = vsel %vm742, %v2453, %v2454
      %v2456 = vrot.slane %v2363, 1
      %v2457 = vsel %vm742, %v2454, %v2456
      %v2458 = vrot.slane %v2348, 1
      %v2459 = vrot.slane %v2279, 1
      %v2460 = vsel %vm742, %v2458, %v2459
      %v2461 = vrot.slane %v2364, 1
      %v2462 = vsel %vm742, %v2459, %v2461
      %v2463 = vrot.slane %v2349, 1
      %v2464 = vrot.slane %v2282, 1
      %v2465 = vsel %vm742, %v2463, %v2464
      %v2466 = vrot.slane %v2365, 1
      %v2467 = vsel %vm742, %v2464, %v2466
      %v2468 = vrot.slane %v2350, 1
      %v2469 = vrot.slane %v2285, 1
      %v2470 = vsel %vm742, %v2468, %v2469
      %v2471 = vrot.slane %v2366, 1
      %v2472 = vsel %vm742, %v2469, %v2471
      %2473 = vrot.lane.b32.xlu0 %v744, 8
      %v2474 = vpop.permute.xlu0 %2473
      %2475 = vrot.lane.b32.xlu0 %v2400, 8
      %v2476 = vpop.permute.xlu0 %2475
      %2477 = vrot.lane.b32.xlu0 %v2402, 8
      %v2478 = vpop.permute.xlu0 %2477
      %2479 = vrot.lane.b32.xlu0 %v2405, 8
      %v2480 = vpop.permute.xlu0 %2479
      %2481 = vrot.lane.b32.xlu0 %v2407, 8
      %v2482 = vpop.permute.xlu0 %2481
      %2483 = vrot.lane.b32.xlu0 %v2410, 8
      %v2484 = vpop.permute.xlu0 %2483
      %2485 = vrot.lane.b32.xlu0 %v2412, 8
      %v2486 = vpop.permute.xlu0 %2485
      %2487 = vrot.lane.b32.xlu0 %v2415, 8
      %v2488 = vpop.permute.xlu0 %2487
      %2489 = vrot.lane.b32.xlu0 %v2417, 8
      %v2490 = vpop.permute.xlu0 %2489
      %2491 = vrot.lane.b32.xlu0 %v2420, 8
      %v2492 = vpop.permute.xlu0 %2491
      %2493 = vrot.lane.b32.xlu0 %v2422, 8
      %v2494 = vpop.permute.xlu0 %2493
      %2495 = vrot.lane.b32.xlu0 %v2425, 8
      %v2496 = vpop.permute.xlu0 %2495
      %2497 = vrot.lane.b32.xlu0 %v2427, 8
      %v2498 = vpop.permute.xlu0 %2497
      %2499 = vrot.lane.b32.xlu0 %v2430, 8
      %v2500 = vpop.permute.xlu0 %2499
      %2501 = vrot.lane.b32.xlu0 %v2432, 8
      %v2502 = vpop.permute.xlu0 %2501
      %2503 = vrot.lane.b32.xlu0 %v2435, 8
      %v2504 = vpop.permute.xlu0 %2503
      %2505 = vrot.lane.b32.xlu0 %v2437, 8
      %v2506 = vpop.permute.xlu0 %2505
      %2507 = vrot.lane.b32.xlu0 %v2440, 8
      %v2508 = vpop.permute.xlu0 %2507
      %2509 = vrot.lane.b32.xlu0 %v2442, 8
      %v2510 = vpop.permute.xlu0 %2509
      %2511 = vrot.lane.b32.xlu0 %v2445, 8
      %v2512 = vpop.permute.xlu0 %2511
      %2513 = vrot.lane.b32.xlu0 %v2447, 8
      %v2514 = vpop.permute.xlu0 %2513
      %2515 = vrot.lane.b32.xlu0 %v2450, 8
      %v2516 = vpop.permute.xlu0 %2515
      %2517 = vrot.lane.b32.xlu0 %v2452, 8
      %v2518 = vpop.permute.xlu0 %2517
      %2519 = vrot.lane.b32.xlu0 %v2455, 8
      %v2520 = vpop.permute.xlu0 %2519
      %2521 = vrot.lane.b32.xlu0 %v2457, 8
      %v2522 = vpop.permute.xlu0 %2521
      %2523 = vrot.lane.b32.xlu0 %v2460, 8
      %v2524 = vpop.permute.xlu0 %2523
      %2525 = vrot.lane.b32.xlu0 %v2462, 8
      %v2526 = vpop.permute.xlu0 %2525
      %2527 = vrot.lane.b32.xlu0 %v2465, 8
      %v2528 = vpop.permute.xlu0 %2527
      %2529 = vrot.lane.b32.xlu0 %v2467, 8
      %v2530 = vpop.permute.xlu0 %2529
      %2531 = vrot.lane.b32.xlu0 %v2470, 8
      %v2532 = vpop.permute.xlu0 %2531
      %2533 = vrot.lane.b32.xlu0 %v2472, 8
      %v2534 = vpop.permute.xlu0 %2533
      %v2566 = vrot.slane %v2336, 2
      %v2567 = vrot.slane %v2243, 2
      %v2568 = vsel %vm913, %v2566, %v2567
      %v2569 = vrot.slane %v2352, 2
      %v2570 = vsel %vm913, %v2567, %v2569
      %v2571 = vrot.slane %v2337, 2
      %v2572 = vrot.slane %v2246, 2
      %v2573 = vsel %vm913, %v2571, %v2572
      %v2574 = vrot.slane %v2353, 2
      %v2575 = vsel %vm913, %v2572, %v2574
      %v2576 = vrot.slane %v2338, 2
      %v2577 = vrot.slane %v2249, 2
      %v2578 = vsel %vm913, %v2576, %v2577
      %v2579 = vrot.slane %v2354, 2
      %v2580 = vsel %vm913, %v2577, %v2579
      %v2581 = vrot.slane %v2339, 2
      %v2582 = vrot.slane %v2252, 2
      %v2583 = vsel %vm913, %v2581, %v2582
      %v2584 = vrot.slane %v2355, 2
      %v2585 = vsel %vm913, %v2582, %v2584
      %v2586 = vrot.slane %v2340, 2
      %v2587 = vrot.slane %v2255, 2
      %v2588 = vsel %vm913, %v2586, %v2587
      %v2589 = vrot.slane %v2356, 2
      %v2590 = vsel %vm913, %v2587, %v2589
      %v2591 = vrot.slane %v2341, 2
      %v2592 = vrot.slane %v2258, 2
      %v2593 = vsel %vm913, %v2591, %v2592
      %v2594 = vrot.slane %v2357, 2
      %v2595 = vsel %vm913, %v2592, %v2594
      %v2596 = vrot.slane %v2342, 2
      %v2597 = vrot.slane %v2261, 2
      %v2598 = vsel %vm913, %v2596, %v2597
      %v2599 = vrot.slane %v2358, 2
      %v2600 = vsel %vm913, %v2597, %v2599
      %v2601 = vrot.slane %v2343, 2
      %v2602 = vrot.slane %v2264, 2
      %v2603 = vsel %vm913, %v2601, %v2602
      %v2604 = vrot.slane %v2359, 2
      %v2605 = vsel %vm913, %v2602, %v2604
      %v2606 = vrot.slane %v2344, 2
      %v2607 = vrot.slane %v2267, 2
      %v2608 = vsel %vm913, %v2606, %v2607
      %v2609 = vrot.slane %v2360, 2
      %v2610 = vsel %vm913, %v2607, %v2609
      %v2611 = vrot.slane %v2345, 2
      %v2612 = vrot.slane %v2270, 2
      %v2613 = vsel %vm913, %v2611, %v2612
      %v2614 = vrot.slane %v2361, 2
      %v2615 = vsel %vm913, %v2612, %v2614
      %v2616 = vrot.slane %v2346, 2
      %v2617 = vrot.slane %v2273, 2
      %v2618 = vsel %vm913, %v2616, %v2617
      %v2619 = vrot.slane %v2362, 2
      %v2620 = vsel %vm913, %v2617, %v2619
      %v2621 = vrot.slane %v2347, 2
      %v2622 = vrot.slane %v2276, 2
      %v2623 = vsel %vm913, %v2621, %v2622
      %v2624 = vrot.slane %v2363, 2
      %v2625 = vsel %vm913, %v2622, %v2624
      %v2626 = vrot.slane %v2348, 2
      %v2627 = vrot.slane %v2279, 2
      %v2628 = vsel %vm913, %v2626, %v2627
      %v2629 = vrot.slane %v2364, 2
      %v2630 = vsel %vm913, %v2627, %v2629
      %v2631 = vrot.slane %v2349, 2
      %v2632 = vrot.slane %v2282, 2
      %v2633 = vsel %vm913, %v2631, %v2632
      %v2634 = vrot.slane %v2365, 2
      %v2635 = vsel %vm913, %v2632, %v2634
      %v2636 = vrot.slane %v2350, 2
      %v2637 = vrot.slane %v2285, 2
      %v2638 = vsel %vm913, %v2636, %v2637
      %v2639 = vrot.slane %v2366, 2
      %v2640 = vsel %vm913, %v2637, %v2639
      %2641 = vrot.lane.b32.xlu0 %v915, 16
      %v2642 = vpop.permute.xlu0 %2641
      %2643 = vrot.lane.b32.xlu0 %v2568, 16
      %v2644 = vpop.permute.xlu0 %2643
      %2645 = vrot.lane.b32.xlu0 %v2570, 16
      %v2646 = vpop.permute.xlu0 %2645
      %2647 = vrot.lane.b32.xlu0 %v2573, 16
      %v2648 = vpop.permute.xlu0 %2647
      %2649 = vrot.lane.b32.xlu0 %v2575, 16
      %v2650 = vpop.permute.xlu0 %2649
      %2651 = vrot.lane.b32.xlu0 %v2578, 16
      %v2652 = vpop.permute.xlu0 %2651
      %2653 = vrot.lane.b32.xlu0 %v2580, 16
      %v2654 = vpop.permute.xlu0 %2653
      %2655 = vrot.lane.b32.xlu0 %v2583, 16
      %v2656 = vpop.permute.xlu0 %2655
      %2657 = vrot.lane.b32.xlu0 %v2585, 16
      %v2658 = vpop.permute.xlu0 %2657
      %2659 = vrot.lane.b32.xlu0 %v2588, 16
      %v2660 = vpop.permute.xlu0 %2659
      %2661 = vrot.lane.b32.xlu0 %v2590, 16
      %v2662 = vpop.permute.xlu0 %2661
      %2663 = vrot.lane.b32.xlu0 %v2593, 16
      %v2664 = vpop.permute.xlu0 %2663
      %2665 = vrot.lane.b32.xlu0 %v2595, 16
      %v2666 = vpop.permute.xlu0 %2665
      %2667 = vrot.lane.b32.xlu0 %v2598, 16
      %v2668 = vpop.permute.xlu0 %2667
      %2669 = vrot.lane.b32.xlu0 %v2600, 16
      %v2670 = vpop.permute.xlu0 %2669
      %2671 = vrot.lane.b32.xlu0 %v2603, 16
      %v2672 = vpop.permute.xlu0 %2671
      %2673 = vrot.lane.b32.xlu0 %v2605, 16
      %v2674 = vpop.permute.xlu0 %2673
      %2675 = vrot.lane.b32.xlu0 %v2608, 16
      %v2676 = vpop.permute.xlu0 %2675
      %2677 = vrot.lane.b32.xlu0 %v2610, 16
      %v2678 = vpop.permute.xlu0 %2677
      %2679 = vrot.lane.b32.xlu0 %v2613, 16
      %v2680 = vpop.permute.xlu0 %2679
      %2681 = vrot.lane.b32.xlu0 %v2615, 16
      %v2682 = vpop.permute.xlu0 %2681
      %2683 = vrot.lane.b32.xlu0 %v2618, 16
      %v2684 = vpop.permute.xlu0 %2683
      %2685 = vrot.lane.b32.xlu0 %v2620, 16
      %v2686 = vpop.permute.xlu0 %2685
      %2687 = vrot.lane.b32.xlu0 %v2623, 16
      %v2688 = vpop.permute.xlu0 %2687
      %2689 = vrot.lane.b32.xlu0 %v2625, 16
      %v2690 = vpop.permute.xlu0 %2689
      %2691 = vrot.lane.b32.xlu0 %v2628, 16
      %v2692 = vpop.permute.xlu0 %2691
      %2693 = vrot.lane.b32.xlu0 %v2630, 16
      %v2694 = vpop.permute.xlu0 %2693
      %2695 = vrot.lane.b32.xlu0 %v2633, 16
      %v2696 = vpop.permute.xlu0 %2695
      %2697 = vrot.lane.b32.xlu0 %v2635, 16
      %v2698 = vpop.permute.xlu0 %2697
      %2699 = vrot.lane.b32.xlu0 %v2638, 16
      %v2700 = vpop.permute.xlu0 %2699
      %2701 = vrot.lane.b32.xlu0 %v2640, 16
      %v2702 = vpop.permute.xlu0 %2701
      %2735 = vrot.lane.b32.xlu0 %v2336, 24
      %v2736 = vpop.permute.xlu0 %2735
      %2737 = vrot.lane.b32.xlu0 %v2243, 24
      %v2738 = vpop.permute.xlu0 %2737
      %2739 = vrot.lane.b32.xlu0 %v2337, 24
      %v2740 = vpop.permute.xlu0 %2739
      %2741 = vrot.lane.b32.xlu0 %v2246, 24
      %v2742 = vpop.permute.xlu0 %2741
      %2743 = vrot.lane.b32.xlu0 %v2338, 24
      %v2744 = vpop.permute.xlu0 %2743
      %2745 = vrot.lane.b32.xlu0 %v2249, 24
      %v2746 = vpop.permute.xlu0 %2745
      %2747 = vrot.lane.b32.xlu0 %v2339, 24
      %v2748 = vpop.permute.xlu0 %2747
      %2749 = vrot.lane.b32.xlu0 %v2252, 24
      %v2750 = vpop.permute.xlu0 %2749
      %2751 = vrot.lane.b32.xlu0 %v2340, 24
      %v2752 = vpop.permute.xlu0 %2751
      %2753 = vrot.lane.b32.xlu0 %v2255, 24
      %v2754 = vpop.permute.xlu0 %2753
      %2755 = vrot.lane.b32.xlu0 %v2341, 24
      %v2756 = vpop.permute.xlu0 %2755
      %2757 = vrot.lane.b32.xlu0 %v2258, 24
      %v2758 = vpop.permute.xlu0 %2757
      %2759 = vrot.lane.b32.xlu0 %v2342, 24
      %v2760 = vpop.permute.xlu0 %2759
      %2761 = vrot.lane.b32.xlu0 %v2261, 24
      %v2762 = vpop.permute.xlu0 %2761
      %2763 = vrot.lane.b32.xlu0 %v2343, 24
      %v2764 = vpop.permute.xlu0 %2763
      %2765 = vrot.lane.b32.xlu0 %v2264, 24
      %v2766 = vpop.permute.xlu0 %2765
      %2767 = vrot.lane.b32.xlu0 %v2344, 24
      %v2768 = vpop.permute.xlu0 %2767
      %2769 = vrot.lane.b32.xlu0 %v2267, 24
      %v2770 = vpop.permute.xlu0 %2769
      %2771 = vrot.lane.b32.xlu0 %v2345, 24
      %v2772 = vpop.permute.xlu0 %2771
      %2773 = vrot.lane.b32.xlu0 %v2270, 24
      %v2774 = vpop.permute.xlu0 %2773
      %2775 = vrot.lane.b32.xlu0 %v2346, 24
      %v2776 = vpop.permute.xlu0 %2775
      %2777 = vrot.lane.b32.xlu0 %v2273, 24
      %v2778 = vpop.permute.xlu0 %2777
      %2779 = vrot.lane.b32.xlu0 %v2347, 24
      %v2780 = vpop.permute.xlu0 %2779
      %2781 = vrot.lane.b32.xlu0 %v2276, 24
      %v2782 = vpop.permute.xlu0 %2781
      %2783 = vrot.lane.b32.xlu0 %v2348, 24
      %v2784 = vpop.permute.xlu0 %2783
      %2785 = vrot.lane.b32.xlu0 %v2279, 24
      %v2786 = vpop.permute.xlu0 %2785
      %2787 = vrot.lane.b32.xlu0 %v2349, 24
      %v2788 = vpop.permute.xlu0 %2787
      %2789 = vrot.lane.b32.xlu0 %v2282, 24
      %v2790 = vpop.permute.xlu0 %2789
      %2791 = vrot.lane.b32.xlu0 %v2350, 24
      %v2792 = vpop.permute.xlu0 %2791
      %2793 = vrot.lane.b32.xlu0 %v2285, 24
      %v2794 = vpop.permute.xlu0 %2793
      %2795 = vrot.lane.b32.xlu0 %v2351, 24
      %v2796 = vpop.permute.xlu0 %2795
      %2797 = vrot.lane.b32.xlu0 %v2288, 24
      %v2798 = vpop.permute.xlu0 %2797
      %v2832 = vrot.slane %v2351, 1
      %v2833 = vrot.slane %v2288, 1
      %v2834 = vsel %vm742, %v2832, %v2833
      %v2835 = vrot.slane %v2367, 1
      %v2836 = vsel %vm742, %v2833, %v2835
      %2837 = vrot.lane.b32.xlu0 %v2400, 32
      %v2838 = vpop.permute.xlu0 %2837
      %2839 = vrot.lane.b32.xlu0 %v2402, 32
      %v2840 = vpop.permute.xlu0 %2839
      %2841 = vrot.lane.b32.xlu0 %v2405, 32
      %v2842 = vpop.permute.xlu0 %2841
      %2843 = vrot.lane.b32.xlu0 %v2407, 32
      %v2844 = vpop.permute.xlu0 %2843
      %2845 = vrot.lane.b32.xlu0 %v2410, 32
      %v2846 = vpop.permute.xlu0 %2845
      %2847 = vrot.lane.b32.xlu0 %v2412, 32
      %v2848 = vpop.permute.xlu0 %2847
      %2849 = vrot.lane.b32.xlu0 %v2415, 32
      %v2850 = vpop.permute.xlu0 %2849
      %2851 = vrot.lane.b32.xlu0 %v2417, 32
      %v2852 = vpop.permute.xlu0 %2851
      %2853 = vrot.lane.b32.xlu0 %v2420, 32
      %v2854 = vpop.permute.xlu0 %2853
      %2855 = vrot.lane.b32.xlu0 %v2422, 32
      %v2856 = vpop.permute.xlu0 %2855
      %2857 = vrot.lane.b32.xlu0 %v2425, 32
      %v2858 = vpop.permute.xlu0 %2857
      %2859 = vrot.lane.b32.xlu0 %v2427, 32
      %v2860 = vpop.permute.xlu0 %2859
      %2861 = vrot.lane.b32.xlu0 %v2430, 32
      %v2862 = vpop.permute.xlu0 %2861
      %2863 = vrot.lane.b32.xlu0 %v2432, 32
      %v2864 = vpop.permute.xlu0 %2863
      %2865 = vrot.lane.b32.xlu0 %v2435, 32
      %v2866 = vpop.permute.xlu0 %2865
      %2867 = vrot.lane.b32.xlu0 %v2437, 32
      %v2868 = vpop.permute.xlu0 %2867
      %2869 = vrot.lane.b32.xlu0 %v2440, 32
      %v2870 = vpop.permute.xlu0 %2869
      %2871 = vrot.lane.b32.xlu0 %v2442, 32
      %v2872 = vpop.permute.xlu0 %2871
      %2873 = vrot.lane.b32.xlu0 %v2445, 32
      %v2874 = vpop.permute.xlu0 %2873
      %2875 = vrot.lane.b32.xlu0 %v2447, 32
      %v2876 = vpop.permute.xlu0 %2875
      %2877 = vrot.lane.b32.xlu0 %v2450, 32
      %v2878 = vpop.permute.xlu0 %2877
      %2879 = vrot.lane.b32.xlu0 %v2452, 32
      %v2880 = vpop.permute.xlu0 %2879
      %2881 = vrot.lane.b32.xlu0 %v2455, 32
      %v2882 = vpop.permute.xlu0 %2881
      %2883 = vrot.lane.b32.xlu0 %v2457, 32
      %v2884 = vpop.permute.xlu0 %2883
      %2885 = vrot.lane.b32.xlu0 %v2460, 32
      %v2886 = vpop.permute.xlu0 %2885
      %2887 = vrot.lane.b32.xlu0 %v2462, 32
      %v2888 = vpop.permute.xlu0 %2887
      %2889 = vrot.lane.b32.xlu0 %v2465, 32
      %v2890 = vpop.permute.xlu0 %2889
      %2891 = vrot.lane.b32.xlu0 %v2467, 32
      %v2892 = vpop.permute.xlu0 %2891
      %2893 = vrot.lane.b32.xlu0 %v2470, 32
      %v2894 = vpop.permute.xlu0 %2893
      %2895 = vrot.lane.b32.xlu0 %v2472, 32
      %v2896 = vpop.permute.xlu0 %2895
      %2897 = vrot.lane.b32.xlu0 %v2834, 32
      %v2898 = vpop.permute.xlu0 %2897
      %2899 = vrot.lane.b32.xlu0 %v2836, 32
      %v2900 = vpop.permute.xlu0 %2899
      %v2933 = vrot.slane %v2351, 2
      %v2934 = vrot.slane %v2288, 2
      %v2935 = vsel %vm913, %v2933, %v2934
      %v2936 = vrot.slane %v2367, 2
      %v2937 = vsel %vm913, %v2934, %v2936
      %2938 = vrot.lane.b32.xlu0 %v2568, 40
      %v2939 = vpop.permute.xlu0 %2938
      %2940 = vrot.lane.b32.xlu0 %v2570, 40
      %v2941 = vpop.permute.xlu0 %2940
      %2942 = vrot.lane.b32.xlu0 %v2573, 40
      %v2943 = vpop.permute.xlu0 %2942
      %2944 = vrot.lane.b32.xlu0 %v2575, 40
      %v2945 = vpop.permute.xlu0 %2944
      %2946 = vrot.lane.b32.xlu0 %v2578, 40
      %v2947 = vpop.permute.xlu0 %2946
      %2948 = vrot.lane.b32.xlu0 %v2580, 40
      %v2949 = vpop.permute.xlu0 %2948
      %2950 = vrot.lane.b32.xlu0 %v2583, 40
      %v2951 = vpop.permute.xlu0 %2950
      %2952 = vrot.lane.b32.xlu0 %v2585, 40
      %v2953 = vpop.permute.xlu0 %2952
      %2954 = vrot.lane.b32.xlu0 %v2588, 40
      %v2955 = vpop.permute.xlu0 %2954
      %2956 = vrot.lane.b32.xlu0 %v2590, 40
      %v2957 = vpop.permute.xlu0 %2956
      %2958 = vrot.lane.b32.xlu0 %v2593, 40
      %v2959 = vpop.permute.xlu0 %2958
      %2960 = vrot.lane.b32.xlu0 %v2595, 40
      %v2961 = vpop.permute.xlu0 %2960
      %2962 = vrot.lane.b32.xlu0 %v2598, 40
      %v2963 = vpop.permute.xlu0 %2962
      %2964 = vrot.lane.b32.xlu0 %v2600, 40
      %v2965 = vpop.permute.xlu0 %2964
      %2966 = vrot.lane.b32.xlu0 %v2603, 40
      %v2967 = vpop.permute.xlu0 %2966
      %2968 = vrot.lane.b32.xlu0 %v2605, 40
      %v2969 = vpop.permute.xlu0 %2968
      %2970 = vrot.lane.b32.xlu0 %v2608, 40
      %v2971 = vpop.permute.xlu0 %2970
      %2972 = vrot.lane.b32.xlu0 %v2610, 40
      %v2973 = vpop.permute.xlu0 %2972
      %2974 = vrot.lane.b32.xlu0 %v2613, 40
      %v2975 = vpop.permute.xlu0 %2974
      %2976 = vrot.lane.b32.xlu0 %v2615, 40
      %v2977 = vpop.permute.xlu0 %2976
      %2978 = vrot.lane.b32.xlu0 %v2618, 40
      %v2979 = vpop.permute.xlu0 %2978
      %2980 = vrot.lane.b32.xlu0 %v2620, 40
      %v2981 = vpop.permute.xlu0 %2980
      %2982 = vrot.lane.b32.xlu0 %v2623, 40
      %v2983 = vpop.permute.xlu0 %2982
      %2984 = vrot.lane.b32.xlu0 %v2625, 40
      %v2985 = vpop.permute.xlu0 %2984
      %2986 = vrot.lane.b32.xlu0 %v2628, 40
      %v2987 = vpop.permute.xlu0 %2986
      %2988 = vrot.lane.b32.xlu0 %v2630, 40
      %v2989 = vpop.permute.xlu0 %2988
      %2990 = vrot.lane.b32.xlu0 %v2633, 40
      %v2991 = vpop.permute.xlu0 %2990
      %2992 = vrot.lane.b32.xlu0 %v2635, 40
      %v2993 = vpop.permute.xlu0 %2992
      %2994 = vrot.lane.b32.xlu0 %v2638, 40
      %v2995 = vpop.permute.xlu0 %2994
      %2996 = vrot.lane.b32.xlu0 %v2640, 40
      %v2997 = vpop.permute.xlu0 %2996
      %2998 = vrot.lane.b32.xlu0 %v2935, 40
      %v2999 = vpop.permute.xlu0 %2998
      %3000 = vrot.lane.b32.xlu0 %v2937, 40
      %v3001 = vpop.permute.xlu0 %3000
      %3034 = vrot.lane.b32.xlu0 %v2337, 48
      %v3035 = vpop.permute.xlu0 %3034
      %3036 = vrot.lane.b32.xlu0 %v2246, 48
      %v3037 = vpop.permute.xlu0 %3036
      %3038 = vrot.lane.b32.xlu0 %v2338, 48
      %v3039 = vpop.permute.xlu0 %3038
      %3040 = vrot.lane.b32.xlu0 %v2249, 48
      %v3041 = vpop.permute.xlu0 %3040
      %3042 = vrot.lane.b32.xlu0 %v2339, 48
      %v3043 = vpop.permute.xlu0 %3042
      %3044 = vrot.lane.b32.xlu0 %v2252, 48
      %v3045 = vpop.permute.xlu0 %3044
      %3046 = vrot.lane.b32.xlu0 %v2340, 48
      %v3047 = vpop.permute.xlu0 %3046
      %3048 = vrot.lane.b32.xlu0 %v2255, 48
      %v3049 = vpop.permute.xlu0 %3048
      %3050 = vrot.lane.b32.xlu0 %v2341, 48
      %v3051 = vpop.permute.xlu0 %3050
      %3052 = vrot.lane.b32.xlu0 %v2258, 48
      %v3053 = vpop.permute.xlu0 %3052
      %3054 = vrot.lane.b32.xlu0 %v2342, 48
      %v3055 = vpop.permute.xlu0 %3054
      %3056 = vrot.lane.b32.xlu0 %v2261, 48
      %v3057 = vpop.permute.xlu0 %3056
      %3058 = vrot.lane.b32.xlu0 %v2343, 48
      %v3059 = vpop.permute.xlu0 %3058
      %3060 = vrot.lane.b32.xlu0 %v2264, 48
      %v3061 = vpop.permute.xlu0 %3060
      %3062 = vrot.lane.b32.xlu0 %v2344, 48
      %v3063 = vpop.permute.xlu0 %3062
      %3064 = vrot.lane.b32.xlu0 %v2267, 48
      %v3065 = vpop.permute.xlu0 %3064
      %3066 = vrot.lane.b32.xlu0 %v2345, 48
      %v3067 = vpop.permute.xlu0 %3066
      %3068 = vrot.lane.b32.xlu0 %v2270, 48
      %v3069 = vpop.permute.xlu0 %3068
      %3070 = vrot.lane.b32.xlu0 %v2346, 48
      %v3071 = vpop.permute.xlu0 %3070
      %3072 = vrot.lane.b32.xlu0 %v2273, 48
      %v3073 = vpop.permute.xlu0 %3072
      %3074 = vrot.lane.b32.xlu0 %v2347, 48
      %v3075 = vpop.permute.xlu0 %3074
      %3076 = vrot.lane.b32.xlu0 %v2276, 48
      %v3077 = vpop.permute.xlu0 %3076
      %3078 = vrot.lane.b32.xlu0 %v2348, 48
      %v3079 = vpop.permute.xlu0 %3078
      %3080 = vrot.lane.b32.xlu0 %v2279, 48
      %v3081 = vpop.permute.xlu0 %3080
      %3082 = vrot.lane.b32.xlu0 %v2349, 48
      %v3083 = vpop.permute.xlu0 %3082
      %3084 = vrot.lane.b32.xlu0 %v2282, 48
      %v3085 = vpop.permute.xlu0 %3084
      %3086 = vrot.lane.b32.xlu0 %v2350, 48
      %v3087 = vpop.permute.xlu0 %3086
      %3088 = vrot.lane.b32.xlu0 %v2285, 48
      %v3089 = vpop.permute.xlu0 %3088
      %3090 = vrot.lane.b32.xlu0 %v2351, 48
      %v3091 = vpop.permute.xlu0 %3090
      %3092 = vrot.lane.b32.xlu0 %v2288, 48
      %v3093 = vpop.permute.xlu0 %3092
      %3094 = vrot.lane.b32.xlu0 0.0, 48
      %v3095 = vpop.permute.xlu0 %3094
      %3127 = vrot.lane.b32.xlu0 %v2405, 56
      %v3128 = vpop.permute.xlu0 %3127
      %3129 = vrot.lane.b32.xlu0 %v2407, 56
      %v3130 = vpop.permute.xlu0 %3129
      %3131 = vrot.lane.b32.xlu0 %v2410, 56
      %v3132 = vpop.permute.xlu0 %3131
      %3133 = vrot.lane.b32.xlu0 %v2412, 56
      %v3134 = vpop.permute.xlu0 %3133
      %3135 = vrot.lane.b32.xlu0 %v2415, 56
      %v3136 = vpop.permute.xlu0 %3135
      %3137 = vrot.lane.b32.xlu0 %v2417, 56
      %v3138 = vpop.permute.xlu0 %3137
      %3139 = vrot.lane.b32.xlu0 %v2420, 56
      %v3140 = vpop.permute.xlu0 %3139
      %3141 = vrot.lane.b32.xlu0 %v2422, 56
      %v3142 = vpop.permute.xlu0 %3141
      %3143 = vrot.lane.b32.xlu0 %v2425, 56
      %v3144 = vpop.permute.xlu0 %3143
      %3145 = vrot.lane.b32.xlu0 %v2427, 56
      %v3146 = vpop.permute.xlu0 %3145
      %3147 = vrot.lane.b32.xlu0 %v2430, 56
      %v3148 = vpop.permute.xlu0 %3147
      %3149 = vrot.lane.b32.xlu0 %v2432, 56
      %v3150 = vpop.permute.xlu0 %3149
      %3151 = vrot.lane.b32.xlu0 %v2435, 56
      %v3152 = vpop.permute.xlu0 %3151
      %3153 = vrot.lane.b32.xlu0 %v2437, 56
      %v3154 = vpop.permute.xlu0 %3153
      %3155 = vrot.lane.b32.xlu0 %v2440, 56
      %v3156 = vpop.permute.xlu0 %3155
      %3157 = vrot.lane.b32.xlu0 %v2442, 56
      %v3158 = vpop.permute.xlu0 %3157
      %3159 = vrot.lane.b32.xlu0 %v2445, 56
      %v3160 = vpop.permute.xlu0 %3159
      %3161 = vrot.lane.b32.xlu0 %v2447, 56
      %v3162 = vpop.permute.xlu0 %3161
      %3163 = vrot.lane.b32.xlu0 %v2450, 56
      %v3164 = vpop.permute.xlu0 %3163
      %3165 = vrot.lane.b32.xlu0 %v2452, 56
      %v3166 = vpop.permute.xlu0 %3165
      %3167 = vrot.lane.b32.xlu0 %v2455, 56
      %v3168 = vpop.permute.xlu0 %3167
      %3169 = vrot.lane.b32.xlu0 %v2457, 56
      %v3170 = vpop.permute.xlu0 %3169
      %3171 = vrot.lane.b32.xlu0 %v2460, 56
      %v3172 = vpop.permute.xlu0 %3171
      %3173 = vrot.lane.b32.xlu0 %v2462, 56
      %v3174 = vpop.permute.xlu0 %3173
      %3175 = vrot.lane.b32.xlu0 %v2465, 56
      %v3176 = vpop.permute.xlu0 %3175
      %3177 = vrot.lane.b32.xlu0 %v2467, 56
      %v3178 = vpop.permute.xlu0 %3177
      %3179 = vrot.lane.b32.xlu0 %v2470, 56
      %v3180 = vpop.permute.xlu0 %3179
      %3181 = vrot.lane.b32.xlu0 %v2472, 56
      %v3182 = vpop.permute.xlu0 %3181
      %3183 = vrot.lane.b32.xlu0 %v2834, 56
      %v3184 = vpop.permute.xlu0 %3183
      %3185 = vrot.lane.b32.xlu0 %v2836, 56
      %v3186 = vpop.permute.xlu0 %3185
      %3187 = vrot.lane.b32.xlu0 %v744, 56
      %v3188 = vpop.permute.xlu0 %3187
      %3220 = vrot.lane.b32.xlu0 %v2573, 64
      %v3221 = vpop.permute.xlu0 %3220
      %3222 = vrot.lane.b32.xlu0 %v2575, 64
      %v3223 = vpop.permute.xlu0 %3222
      %3224 = vrot.lane.b32.xlu0 %v2578, 64
      %v3225 = vpop.permute.xlu0 %3224
      %3226 = vrot.lane.b32.xlu0 %v2580, 64
      %v3227 = vpop.permute.xlu0 %3226
      %3228 = vrot.lane.b32.xlu0 %v2583, 64
      %v3229 = vpop.permute.xlu0 %3228
      %3230 = vrot.lane.b32.xlu0 %v2585, 64
      %v3231 = vpop.permute.xlu0 %3230
      %3232 = vrot.lane.b32.xlu0 %v2588, 64
      %v3233 = vpop.permute.xlu0 %3232
      %3234 = vrot.lane.b32.xlu0 %v2590, 64
      %v3235 = vpop.permute.xlu0 %3234
      %3236 = vrot.lane.b32.xlu0 %v2593, 64
      %v3237 = vpop.permute.xlu0 %3236
      %3238 = vrot.lane.b32.xlu0 %v2595, 64
      %v3239 = vpop.permute.xlu0 %3238
      %3240 = vrot.lane.b32.xlu0 %v2598, 64
      %v3241 = vpop.permute.xlu0 %3240
      %3242 = vrot.lane.b32.xlu0 %v2600, 64
      %v3243 = vpop.permute.xlu0 %3242
      %3244 = vrot.lane.b32.xlu0 %v2603, 64
      %v3245 = vpop.permute.xlu0 %3244
      %3246 = vrot.lane.b32.xlu0 %v2605, 64
      %v3247 = vpop.permute.xlu0 %3246
      %3248 = vrot.lane.b32.xlu0 %v2608, 64
      %v3249 = vpop.permute.xlu0 %3248
      %3250 = vrot.lane.b32.xlu0 %v2610, 64
      %v3251 = vpop.permute.xlu0 %3250
      %3252 = vrot.lane.b32.xlu0 %v2613, 64
      %v3253 = vpop.permute.xlu0 %3252
      %3254 = vrot.lane.b32.xlu0 %v2615, 64
      %v3255 = vpop.permute.xlu0 %3254
      %3256 = vrot.lane.b32.xlu0 %v2618, 64
      %v3257 = vpop.permute.xlu0 %3256
      %3258 = vrot.lane.b32.xlu0 %v2620, 64
      %v3259 = vpop.permute.xlu0 %3258
      %3260 = vrot.lane.b32.xlu0 %v2623, 64
      %v3261 = vpop.permute.xlu0 %3260
      %3262 = vrot.lane.b32.xlu0 %v2625, 64
      %v3263 = vpop.permute.xlu0 %3262
      %3264 = vrot.lane.b32.xlu0 %v2628, 64
      %v3265 = vpop.permute.xlu0 %3264
      %3266 = vrot.lane.b32.xlu0 %v2630, 64
      %v3267 = vpop.permute.xlu0 %3266
      %3268 = vrot.lane.b32.xlu0 %v2633, 64
      %v3269 = vpop.permute.xlu0 %3268
      %3270 = vrot.lane.b32.xlu0 %v2635, 64
      %v3271 = vpop.permute.xlu0 %3270
      %3272 = vrot.lane.b32.xlu0 %v2638, 64
      %v3273 = vpop.permute.xlu0 %3272
      %3274 = vrot.lane.b32.xlu0 %v2640, 64
      %v3275 = vpop.permute.xlu0 %3274
      %3276 = vrot.lane.b32.xlu0 %v2935, 64
      %v3277 = vpop.permute.xlu0 %3276
      %3278 = vrot.lane.b32.xlu0 %v2937, 64
      %v3279 = vpop.permute.xlu0 %3278
      %3280 = vrot.lane.b32.xlu0 %v915, 64
      %v3281 = vpop.permute.xlu0 %3280
      %v3313 = vsel %vm518, 0.0, %v2474
      %v3314 = vsel %vm518, %v2336, %v2476
      %v3315 = vsel %vm518, %v2243, %v2478
      %v3316 = vsel %vm518, %v2337, %v2480
      %v3317 = vsel %vm518, %v2246, %v2482
      %v3318 = vsel %vm518, %v2338, %v2484
      %v3319 = vsel %vm518, %v2249, %v2486
      %v3320 = vsel %vm518, %v2339, %v2488
      %v3321 = vsel %vm518, %v2252, %v2490
      %v3322 = vsel %vm518, %v2340, %v2492
      %v3323 = vsel %vm518, %v2255, %v2494
      %v3324 = vsel %vm518, %v2341, %v2496
      %v3325 = vsel %vm518, %v2258, %v2498
      %v3326 = vsel %vm518, %v2342, %v2500
      %v3327 = vsel %vm518, %v2261, %v2502
      %v3328 = vsel %vm518, %v2343, %v2504
      %v3329 = vsel %vm518, %v2264, %v2506
      %v3330 = vsel %vm518, %v2344, %v2508
      %v3331 = vsel %vm518, %v2267, %v2510
      %v3332 = vsel %vm518, %v2345, %v2512
      %v3333 = vsel %vm518, %v2270, %v2514
      %v3334 = vsel %vm518, %v2346, %v2516
      %v3335 = vsel %vm518, %v2273, %v2518
      %v3336 = vsel %vm518, %v2347, %v2520
      %v3337 = vsel %vm518, %v2276, %v2522
      %v3338 = vsel %vm518, %v2348, %v2524
      %v3339 = vsel %vm518, %v2279, %v2526
      %v3340 = vsel %vm518, %v2349, %v2528
      %v3341 = vsel %vm518, %v2282, %v2530
      %v3342 = vsel %vm518, %v2350, %v2532
      %v3343 = vsel %vm518, %v2285, %v2534
      %v3344 = vsel %vm1570, %v3313, %v2642
      %v3345 = vsel %vm1570, %v3314, %v2644
      %v3346 = vsel %vm1570, %v3315, %v2646
      %v3347 = vsel %vm1570, %v3316, %v2648
      %v3348 = vsel %vm1570, %v3317, %v2650
      %v3349 = vsel %vm1570, %v3318, %v2652
      %v3350 = vsel %vm1570, %v3319, %v2654
      %v3351 = vsel %vm1570, %v3320, %v2656
      %v3352 = vsel %vm1570, %v3321, %v2658
      %v3353 = vsel %vm1570, %v3322, %v2660
      %v3354 = vsel %vm1570, %v3323, %v2662
      %v3355 = vsel %vm1570, %v3324, %v2664
      %v3356 = vsel %vm1570, %v3325, %v2666
      %v3357 = vsel %vm1570, %v3326, %v2668
      %v3358 = vsel %vm1570, %v3327, %v2670
      %v3359 = vsel %vm1570, %v3328, %v2672
      %v3360 = vsel %vm1570, %v3329, %v2674
      %v3361 = vsel %vm1570, %v3330, %v2676
      %v3362 = vsel %vm1570, %v3331, %v2678
      %v3363 = vsel %vm1570, %v3332, %v2680
      %v3364 = vsel %vm1570, %v3333, %v2682
      %v3365 = vsel %vm1570, %v3334, %v2684
      %v3366 = vsel %vm1570, %v3335, %v2686
      %v3367 = vsel %vm1570, %v3336, %v2688
      %v3368 = vsel %vm1570, %v3337, %v2690
      %v3369 = vsel %vm1570, %v3338, %v2692
      %v3370 = vsel %vm1570, %v3339, %v2694
      %v3371 = vsel %vm1570, %v3340, %v2696
      %v3372 = vsel %vm1570, %v3341, %v2698
      %v3373 = vsel %vm1570, %v3342, %v2700
      %v3374 = vsel %vm1570, %v3343, %v2702
      %vm3375 = vcmask 195584
      %v3376 = vsel %vm3375, %v3344, %v2736
      %v3377 = vsel %vm3375, %v3344, %v2738
      %v3378 = vsel %vm3375, %v3345, %v2740
      %v3379 = vsel %vm3375, %v3346, %v2742
      %v3380 = vsel %vm3375, %v3347, %v2744
      %v3381 = vsel %vm3375, %v3348, %v2746
      %v3382 = vsel %vm3375, %v3349, %v2748
      %v3383 = vsel %vm3375, %v3350, %v2750
      %v3384 = vsel %vm3375, %v3351, %v2752
      %v3385 = vsel %vm3375, %v3352, %v2754
      %v3386 = vsel %vm3375, %v3353, %v2756
      %v3387 = vsel %vm3375, %v3354, %v2758
      %v3388 = vsel %vm3375, %v3355, %v2760
      %v3389 = vsel %vm3375, %v3356, %v2762
      %v3390 = vsel %vm3375, %v3357, %v2764
      %v3391 = vsel %vm3375, %v3358, %v2766
      %v3392 = vsel %vm3375, %v3359, %v2768
      %v3393 = vsel %vm3375, %v3360, %v2770
      %v3394 = vsel %vm3375, %v3361, %v2772
      %v3395 = vsel %vm3375, %v3362, %v2774
      %v3396 = vsel %vm3375, %v3363, %v2776
      %v3397 = vsel %vm3375, %v3364, %v2778
      %v3398 = vsel %vm3375, %v3365, %v2780
      %v3399 = vsel %vm3375, %v3366, %v2782
      %v3400 = vsel %vm3375, %v3367, %v2784
      %v3401 = vsel %vm3375, %v3368, %v2786
      %v3402 = vsel %vm3375, %v3369, %v2788
      %v3403 = vsel %vm3375, %v3370, %v2790
      %v3404 = vsel %vm3375, %v3371, %v2792
      %v3405 = vsel %vm3375, %v3372, %v2794
      %v3406 = vsel %vm3375, %v3373, %v2796
      %v3407 = vsel %vm3375, %v3374, %v2798
      %v3408 = vsel %vm1602, %v3376, %v2838
      %v3409 = vsel %vm1602, %v3377, %v2840
      %v3410 = vsel %vm1602, %v3378, %v2842
      %v3411 = vsel %vm1602, %v3379, %v2844
      %v3412 = vsel %vm1602, %v3380, %v2846
      %v3413 = vsel %vm1602, %v3381, %v2848
      %v3414 = vsel %vm1602, %v3382, %v2850
      %v3415 = vsel %vm1602, %v3383, %v2852
      %v3416 = vsel %vm1602, %v3384, %v2854
      %v3417 = vsel %vm1602, %v3385, %v2856
      %v3418 = vsel %vm1602, %v3386, %v2858
      %v3419 = vsel %vm1602, %v3387, %v2860
      %v3420 = vsel %vm1602, %v3388, %v2862
      %v3421 = vsel %vm1602, %v3389, %v2864
      %v3422 = vsel %vm1602, %v3390, %v2866
      %v3423 = vsel %vm1602, %v3391, %v2868
      %v3424 = vsel %vm1602, %v3392, %v2870
      %v3425 = vsel %vm1602, %v3393, %v2872
      %v3426 = vsel %vm1602, %v3394, %v2874
      %v3427 = vsel %vm1602, %v3395, %v2876
      %v3428 = vsel %vm1602, %v3396, %v2878
      %v3429 = vsel %vm1602, %v3397, %v2880
      %v3430 = vsel %vm1602, %v3398, %v2882
      %v3431 = vsel %vm1602, %v3399, %v2884
      %v3432 = vsel %vm1602, %v3400, %v2886
      %v3433 = vsel %vm1602, %v3401, %v2888
      %v3434 = vsel %vm1602, %v3402, %v2890
      %v3435 = vsel %vm1602, %v3403, %v2892
      %v3436 = vsel %vm1602, %v3404, %v2894
      %v3437 = vsel %vm1602, %v3405, %v2896
      %v3438 = vsel %vm1602, %v3406, %v2898
      %v3439 = vsel %vm1602, %v3407, %v2900
      %vm3440 = vcmask 326656
      %v3441 = vsel %vm3440, %v3408, %v2939
      %v3442 = vsel %vm3440, %v3409, %v2941
      %v3443 = vsel %vm3440, %v3410, %v2943
      %v3444 = vsel %vm3440, %v3411, %v2945
      %v3445 = vsel %vm3440, %v3412, %v2947
      %v3446 = vsel %vm3440, %v3413, %v2949
      %v3447 = vsel %vm3440, %v3414, %v2951
      %v3448 = vsel %vm3440, %v3415, %v2953
      %v3449 = vsel %vm3440, %v3416, %v2955
      %v3450 = vsel %vm3440, %v3417, %v2957
      %v3451 = vsel %vm3440, %v3418, %v2959
      %v3452 = vsel %vm3440, %v3419, %v2961
      %v3453 = vsel %vm3440, %v3420, %v2963
      %v3454 = vsel %vm3440, %v3421, %v2965
      %v3455 = vsel %vm3440, %v3422, %v2967
      %v3456 = vsel %vm3440, %v3423, %v2969
      %v3457 = vsel %vm3440, %v3424, %v2971
      %v3458 = vsel %vm3440, %v3425, %v2973
      %v3459 = vsel %vm3440, %v3426, %v2975
      %v3460 = vsel %vm3440, %v3427, %v2977
      %v3461 = vsel %vm3440, %v3428, %v2979
      %v3462 = vsel %vm3440, %v3429, %v2981
      %v3463 = vsel %vm3440, %v3430, %v2983
      %v3464 = vsel %vm3440, %v3431, %v2985
      %v3465 = vsel %vm3440, %v3432, %v2987
      %v3466 = vsel %vm3440, %v3433, %v2989
      %v3467 = vsel %vm3440, %v3434, %v2991
      %v3468 = vsel %vm3440, %v3435, %v2993
      %v3469 = vsel %vm3440, %v3436, %v2995
      %v3470 = vsel %vm3440, %v3437, %v2997
      %v3471 = vsel %vm3440, %v3438, %v2999
      %v3472 = vsel %vm3440, %v3439, %v3001
      %v3473 = vsel %vm1634, %v3441, %v3035
      %v3474 = vsel %vm1634, %v3442, %v3037
      %v3475 = vsel %vm1634, %v3443, %v3039
      %v3476 = vsel %vm1634, %v3444, %v3041
      %v3477 = vsel %vm1634, %v3445, %v3043
      %v3478 = vsel %vm1634, %v3446, %v3045
      %v3479 = vsel %vm1634, %v3447, %v3047
      %v3480 = vsel %vm1634, %v3448, %v3049
      %v3481 = vsel %vm1634, %v3449, %v3051
      %v3482 = vsel %vm1634, %v3450, %v3053
      %v3483 = vsel %vm1634, %v3451, %v3055
      %v3484 = vsel %vm1634, %v3452, %v3057
      %v3485 = vsel %vm1634, %v3453, %v3059
      %v3486 = vsel %vm1634, %v3454, %v3061
      %v3487 = vsel %vm1634, %v3455, %v3063
      %v3488 = vsel %vm1634, %v3456, %v3065
      %v3489 = vsel %vm1634, %v3457, %v3067
      %v3490 = vsel %vm1634, %v3458, %v3069
      %v3491 = vsel %vm1634, %v3459, %v3071
      %v3492 = vsel %vm1634, %v3460, %v3073
      %v3493 = vsel %vm1634, %v3461, %v3075
      %v3494 = vsel %vm1634, %v3462, %v3077
      %v3495 = vsel %vm1634, %v3463, %v3079
      %v3496 = vsel %vm1634, %v3464, %v3081
      %v3497 = vsel %vm1634, %v3465, %v3083
      %v3498 = vsel %vm1634, %v3466, %v3085
      %v3499 = vsel %vm1634, %v3467, %v3087
      %v3500 = vsel %vm1634, %v3468, %v3089
      %v3501 = vsel %vm1634, %v3469, %v3091
      %v3502 = vsel %vm1634, %v3470, %v3093
      %v3503 = vsel %vm1634, %v3471, %v3095
      %v3504 = vsel %vm1634, %v3472, %v3095
      %vm3505 = vcmask 457728
      %v3506 = vsel %vm3505, %v3473, %v3128
      %v3507 = vsel %vm3505, %v3474, %v3130
      %v3508 = vsel %vm3505, %v3475, %v3132
      %v3509 = vsel %vm3505, %v3476, %v3134
      %v3510 = vsel %vm3505, %v3477, %v3136
      %v3511 = vsel %vm3505, %v3478, %v3138
      %v3512 = vsel %vm3505, %v3479, %v3140
      %v3513 = vsel %vm3505, %v3480, %v3142
      %v3514 = vsel %vm3505, %v3481, %v3144
      %v3515 = vsel %vm3505, %v3482, %v3146
      %v3516 = vsel %vm3505, %v3483, %v3148
      %v3517 = vsel %vm3505, %v3484, %v3150
      %v3518 = vsel %vm3505, %v3485, %v3152
      %v3519 = vsel %vm3505, %v3486, %v3154
      %v3520 = vsel %vm3505, %v3487, %v3156
      %v3521 = vsel %vm3505, %v3488, %v3158
      %v3522 = vsel %vm3505, %v3489, %v3160
      %v3523 = vsel %vm3505, %v3490, %v3162
      %v3524 = vsel %vm3505, %v3491, %v3164
      %v3525 = vsel %vm3505, %v3492, %v3166
      %v3526 = vsel %vm3505, %v3493, %v3168
      %v3527 = vsel %vm3505, %v3494, %v3170
      %v3528 = vsel %vm3505, %v3495, %v3172
      %v3529 = vsel %vm3505, %v3496, %v3174
      %v3530 = vsel %vm3505, %v3497, %v3176
      %v3531 = vsel %vm3505, %v3498, %v3178
      %v3532 = vsel %vm3505, %v3499, %v3180
      %v3533 = vsel %vm3505, %v3500, %v3182
      %v3534 = vsel %vm3505, %v3501, %v3184
      %v3535 = vsel %vm3505, %v3502, %v3186
      %v3536 = vsel %vm3505, %v3503, %v3188
      %v3537 = vsel %vm3505, %v3504, %v3188
      %v3538 = vsel %vm1667, %v3506, %v3221
      %v3539 = vsel %vm1667, %v3507, %v3223
      %v3540 = vsel %vm1667, %v3508, %v3225
      %v3541 = vsel %vm1667, %v3509, %v3227
      %v3542 = vsel %vm1667, %v3510, %v3229
      %v3543 = vsel %vm1667, %v3511, %v3231
      %v3544 = vsel %vm1667, %v3512, %v3233
      %v3545 = vsel %vm1667, %v3513, %v3235
      %v3546 = vsel %vm1667, %v3514, %v3237
      %v3547 = vsel %vm1667, %v3515, %v3239
      %v3548 = vsel %vm1667, %v3516, %v3241
      %v3549 = vsel %vm1667, %v3517, %v3243
      %v3550 = vsel %vm1667, %v3518, %v3245
      %v3551 = vsel %vm1667, %v3519, %v3247
      %v3552 = vsel %vm1667, %v3520, %v3249
      %v3553 = vsel %vm1667, %v3521, %v3251
      %v3554 = vsel %vm1667, %v3522, %v3253
      %v3555 = vsel %vm1667, %v3523, %v3255
      %v3556 = vsel %vm1667, %v3524, %v3257
      %v3557 = vsel %vm1667, %v3525, %v3259
      %v3558 = vsel %vm1667, %v3526, %v3261
      %v3559 = vsel %vm1667, %v3527, %v3263
      %v3560 = vsel %vm1667, %v3528, %v3265
      %v3561 = vsel %vm1667, %v3529, %v3267
      %v3562 = vsel %vm1667, %v3530, %v3269
      %v3563 = vsel %vm1667, %v3531, %v3271
      %v3564 = vsel %vm1667, %v3532, %v3273
      %v3565 = vsel %vm1667, %v3533, %v3275
      %v3566 = vsel %vm1667, %v3534, %v3277
      %v3567 = vsel %vm1667, %v3535, %v3279
      %v3568 = vsel %vm1667, %v3536, %v3281
      %v3569 = vsel %vm1667, %v3537, %v3281
      %v3570 = vld [vmem:[%s5] sm:$0xff]
      %v3571 = vld [vmem:[%s5 + $0x8] sm:$0xff]
      %v3572 = vld [vmem:[%s5 + $0x10] sm:$0xff]
      %v3573 = vld [vmem:[%s5 + $0x18] sm:$0xff]
      %v3574 = vld [vmem:[%s5 + $0x20] sm:$0xff]
      %v3575 = vld [vmem:[%s5 + $0x28] sm:$0xff]
      %v3576 = vld [vmem:[%s5 + $0x30] sm:$0xff]
      %v3577 = vld [vmem:[%s5 + $0x38] sm:$0xff]
      %v3578 = vld [vmem:[%s5 + $0x40] sm:$0xff]
      %vm3579 = vcmask 588800
      %v3581 = vsel %vm3579, %v3538, 0
      %v3584 = vsel %vm3579, %v3539, 0
      %v3587 = vsel %vm3579, %v3540, 0
      %v3590 = vsel %vm3579, %v3541, 0
      %v3593 = vsel %vm3579, %v3542, 0
      %v3596 = vsel %vm3579, %v3543, 0
      %v3599 = vsel %vm3579, %v3544, 0
      %v3602 = vsel %vm3579, %v3545, 0
      %v3605 = vsel %vm3579, %v3546, 0
      %v3608 = vsel %vm3579, %v3547, 0
      %v3611 = vsel %vm3579, %v3548, 0
      %v3614 = vsel %vm3579, %v3549, 0
      %v3617 = vsel %vm3579, %v3550, 0
      %v3620 = vsel %vm3579, %v3551, 0
      %v3623 = vsel %vm3579, %v3552, 0
      %v3626 = vsel %vm3579, %v3553, 0
      %v3629 = vsel %vm3579, %v3554, 0
      %v3632 = vsel %vm3579, %v3555, 0
      %v3635 = vsel %vm3579, %v3556, 0
      %v3638 = vsel %vm3579, %v3557, 0
      %v3641 = vsel %vm3579, %v3558, 0
      %v3644 = vsel %vm3579, %v3559, 0
      %v3647 = vsel %vm3579, %v3560, 0
      %v3650 = vsel %vm3579, %v3561, 0
      %v3653 = vsel %vm3579, %v3562, 0
      %v3656 = vsel %vm3579, %v3563, 0
      %v3659 = vsel %vm3579, %v3564, 0
      %v3662 = vsel %vm3579, %v3565, 0
      %v3665 = vsel %vm3579, %v3566, 0
      %v3668 = vsel %vm3579, %v3567, 0
      %v3671 = vsel %vm3579, %v3568, 0
      %v3674 = vsel %vm3579, %v3569, 0
      %3676 = vmatpush.msra.mxu0 0.0
      %3677 = vmatpush.msra.mxu0 0.0
      %3678 = vmatpush.msra.mxu0 0.0
      %3679 = vmatpush.msra.mxu0 0.0
      %3680 = vmatpush.msra.mxu0 0.0
      %3681 = vmatpush.msra.mxu0 0.0
      %3682 = vmatpush.msra.mxu0 0.0
      %3683 = vmatpush.msra.mxu0 %v3578
      %3684 = vmatpush.msra.mxu0 %v3577
      %3685 = vmatpush.msra.mxu0 %v3576
      %3686 = vmatpush.msra.mxu0 %v3575
      %3687 = vmatpush.msra.mxu0 %v3574
      %3688 = vmatpush.msra.mxu0 %v3573
      %3689 = vmatpush.msra.mxu0 %v3572
      %3690 = vmatpush.msra.mxu0 %v3571
      %3691 = vmatpush.msra.mxu0 %v3570
      %3692 = vmatmul.f32.gmra.mxu0 %v3581
      %v3693 = vpop.f32.mrf.mxu0
      %v3694 = vadd.f32 0.0, %v3693
      %3695 = vmatmul.f32.gmra.mxu0 %v3584
      %v3696 = vpop.f32.mrf.mxu0
      %v3697 = vadd.f32 0.0, %v3696
      %3698 = vmatmul.f32.gmra.mxu0 %v3587
      %v3699 = vpop.f32.mrf.mxu0
      %v3700 = vadd.f32 0.0, %v3699
      %3701 = vmatmul.f32.gmra.mxu0 %v3590
      %v3702 = vpop.f32.mrf.mxu0
      %v3703 = vadd.f32 0.0, %v3702
      %3704 = vmatmul.f32.gmra.mxu0 %v3593
      %v3705 = vpop.f32.mrf.mxu0
      %v3706 = vadd.f32 0.0, %v3705
      %3707 = vmatmul.f32.gmra.mxu0 %v3596
      %v3708 = vpop.f32.mrf.mxu0
      %v3709 = vadd.f32 0.0, %v3708
      %3710 = vmatmul.f32.gmra.mxu0 %v3599
      %v3711 = vpop.f32.mrf.mxu0
      %v3712 = vadd.f32 0.0, %v3711
      %3713 = vmatmul.f32.gmra.mxu0 %v3602
      %v3714 = vpop.f32.mrf.mxu0
      %v3715 = vadd.f32 0.0, %v3714
      %3716 = vmatmul.f32.gmra.mxu0 %v3605
      %v3717 = vpop.f32.mrf.mxu0
      %v3718 = vadd.f32 0.0, %v3717
      %3719 = vmatmul.f32.gmra.mxu0 %v3608
      %v3720 = vpop.f32.mrf.mxu0
      %v3721 = vadd.f32 0.0, %v3720
      %3722 = vmatmul.f32.gmra.mxu0 %v3611
      %v3723 = vpop.f32.mrf.mxu0
      %v3724 = vadd.f32 0.0, %v3723
      %3725 = vmatmul.f32.gmra.mxu0 %v3614
      %v3726 = vpop.f32.mrf.mxu0
      %v3727 = vadd.f32 0.0, %v3726
      %3728 = vmatmul.f32.gmra.mxu0 %v3617
      %v3729 = vpop.f32.mrf.mxu0
      %v3730 = vadd.f32 0.0, %v3729
      %3731 = vmatmul.f32.gmra.mxu0 %v3620
      %v3732 = vpop.f32.mrf.mxu0
      %v3733 = vadd.f32 0.0, %v3732
      %3734 = vmatmul.f32.gmra.mxu0 %v3623
      %v3735 = vpop.f32.mrf.mxu0
      %v3736 = vadd.f32 0.0, %v3735
      %3737 = vmatmul.f32.gmra.mxu0 %v3626
      %v3738 = vpop.f32.mrf.mxu0
      %v3739 = vadd.f32 0.0, %v3738
      %3740 = vmatmul.f32.gmra.mxu0 %v3629
      %v3741 = vpop.f32.mrf.mxu0
      %v3742 = vadd.f32 0.0, %v3741
      %3743 = vmatmul.f32.gmra.mxu0 %v3632
      %v3744 = vpop.f32.mrf.mxu0
      %v3745 = vadd.f32 0.0, %v3744
      %3746 = vmatmul.f32.gmra.mxu0 %v3635
      %v3747 = vpop.f32.mrf.mxu0
      %v3748 = vadd.f32 0.0, %v3747
      %3749 = vmatmul.f32.gmra.mxu0 %v3638
      %v3750 = vpop.f32.mrf.mxu0
      %v3751 = vadd.f32 0.0, %v3750
      %3752 = vmatmul.f32.gmra.mxu0 %v3641
      %v3753 = vpop.f32.mrf.mxu0
      %v3754 = vadd.f32 0.0, %v3753
      %3755 = vmatmul.f32.gmra.mxu0 %v3644
      %v3756 = vpop.f32.mrf.mxu0
      %v3757 = vadd.f32 0.0, %v3756
      %3758 = vmatmul.f32.gmra.mxu0 %v3647
      %v3759 = vpop.f32.mrf.mxu0
      %v3760 = vadd.f32 0.0, %v3759
      %3761 = vmatmul.f32.gmra.mxu0 %v3650
      %v3762 = vpop.f32.mrf.mxu0
      %v3763 = vadd.f32 0.0, %v3762
      %3764 = vmatmul.f32.gmra.mxu0 %v3653
      %v3765 = vpop.f32.mrf.mxu0
      %v3766 = vadd.f32 0.0, %v3765
      %3767 = vmatmul.f32.gmra.mxu0 %v3656
      %v3768 = vpop.f32.mrf.mxu0
      %v3769 = vadd.f32 0.0, %v3768
      %3770 = vmatmul.f32.gmra.mxu0 %v3659
      %v3771 = vpop.f32.mrf.mxu0
      %v3772 = vadd.f32 0.0, %v3771
      %3773 = vmatmul.f32.gmra.mxu0 %v3662
      %v3774 = vpop.f32.mrf.mxu0
      %v3775 = vadd.f32 0.0, %v3774
      %3776 = vmatmul.f32.gmra.mxu0 %v3665
      %v3777 = vpop.f32.mrf.mxu0
      %v3778 = vadd.f32 0.0, %v3777
      %3779 = vmatmul.f32.gmra.mxu0 %v3668
      %v3780 = vpop.f32.mrf.mxu0
      %v3781 = vadd.f32 0.0, %v3780
      %3782 = vmatmul.f32.gmra.mxu0 %v3671
      %v3783 = vpop.f32.mrf.mxu0
      %v3784 = vadd.f32 0.0, %v3783
      %3785 = vmatmul.f32.gmra.mxu0 %v3674
      %v3786 = vpop.f32.mrf.mxu0
      %v3787 = vadd.f32 0.0, %v3786
      %3788 = vdwg.mxu0
      %v3789 = vld [vmem:[%s6] sm:$0x1]
      %v3791 = vperm.slane %v3789, 0
      %v3793 = vmul.f32 %v3694, %v3791
      %v3794 = vmul.f32 %v3697, %v3791
      %v3795 = vmul.f32 %v3700, %v3791
      %v3796 = vmul.f32 %v3703, %v3791
      %v3797 = vmul.f32 %v3706, %v3791
      %v3798 = vmul.f32 %v3709, %v3791
      %v3799 = vmul.f32 %v3712, %v3791
      %v3800 = vmul.f32 %v3715, %v3791
      %v3801 = vmul.f32 %v3718, %v3791
      %v3802 = vmul.f32 %v3721, %v3791
      %v3803 = vmul.f32 %v3724, %v3791
      %v3804 = vmul.f32 %v3727, %v3791
      %v3805 = vmul.f32 %v3730, %v3791
      %v3806 = vmul.f32 %v3733, %v3791
      %v3807 = vmul.f32 %v3736, %v3791
      %v3808 = vmul.f32 %v3739, %v3791
      %v3809 = vmul.f32 %v3742, %v3791
      %v3810 = vmul.f32 %v3745, %v3791
      %v3811 = vmul.f32 %v3748, %v3791
      %v3812 = vmul.f32 %v3751, %v3791
      %v3813 = vmul.f32 %v3754, %v3791
      %v3814 = vmul.f32 %v3757, %v3791
      %v3815 = vmul.f32 %v3760, %v3791
      %v3816 = vmul.f32 %v3763, %v3791
      %v3817 = vmul.f32 %v3766, %v3791
      %v3818 = vmul.f32 %v3769, %v3791
      %v3819 = vmul.f32 %v3772, %v3791
      %v3820 = vmul.f32 %v3775, %v3791
      %v3821 = vmul.f32 %v3778, %v3791
      %v3822 = vmul.f32 %v3781, %v3791
      %v3823 = vmul.f32 %v3784, %v3791
      %v3824 = vmul.f32 %v3787, %v3791
      %v3825 = vld [vmem:[%s7] sm:$0x1]
      %v3827 = vperm.slane %v3825, 0
      %v3829 = vadd.f32 %v3793, %v3827
      %v3830 = vadd.f32 %v3794, %v3827
      %v3831 = vadd.f32 %v3795, %v3827
      %v3832 = vadd.f32 %v3796, %v3827
      %v3833 = vadd.f32 %v3797, %v3827
      %v3834 = vadd.f32 %v3798, %v3827
      %v3835 = vadd.f32 %v3799, %v3827
      %v3836 = vadd.f32 %v3800, %v3827
      %v3837 = vadd.f32 %v3801, %v3827
      %v3838 = vadd.f32 %v3802, %v3827
      %v3839 = vadd.f32 %v3803, %v3827
      %v3840 = vadd.f32 %v3804, %v3827
      %v3841 = vadd.f32 %v3805, %v3827
      %v3842 = vadd.f32 %v3806, %v3827
      %v3843 = vadd.f32 %v3807, %v3827
      %v3844 = vadd.f32 %v3808, %v3827
      %v3845 = vadd.f32 %v3809, %v3827
      %v3846 = vadd.f32 %v3810, %v3827
      %v3847 = vadd.f32 %v3811, %v3827
      %v3848 = vadd.f32 %v3812, %v3827
      %v3849 = vadd.f32 %v3813, %v3827
      %v3850 = vadd.f32 %v3814, %v3827
      %v3851 = vadd.f32 %v3815, %v3827
      %v3852 = vadd.f32 %v3816, %v3827
      %v3853 = vadd.f32 %v3817, %v3827
      %v3854 = vadd.f32 %v3818, %v3827
      %v3855 = vadd.f32 %v3819, %v3827
      %v3856 = vadd.f32 %v3820, %v3827
      %v3857 = vadd.f32 %v3821, %v3827
      %v3858 = vadd.f32 %v3822, %v3827
      %v3859 = vadd.f32 %v3823, %v3827
      %v3860 = vadd.f32 %v3824, %v3827
      %v3861 = vmax.f32 %v3829, 0.0
      %v3862 = vmax.f32 %v3830, 0.0
      %v3863 = vmax.f32 %v3831, 0.0
      %v3864 = vmax.f32 %v3832, 0.0
      %v3865 = vmax.f32 %v3833, 0.0
      %v3866 = vmax.f32 %v3834, 0.0
      %v3867 = vmax.f32 %v3835, 0.0
      %v3868 = vmax.f32 %v3836, 0.0
      %v3869 = vmax.f32 %v3837, 0.0
      %v3870 = vmax.f32 %v3838, 0.0
      %v3871 = vmax.f32 %v3839, 0.0
      %v3872 = vmax.f32 %v3840, 0.0
      %v3873 = vmax.f32 %v3841, 0.0
      %v3874 = vmax.f32 %v3842, 0.0
      %v3875 = vmax.f32 %v3843, 0.0
      %v3876 = vmax.f32 %v3844, 0.0
      %v3877 = vmax.f32 %v3845, 0.0
      %v3878 = vmax.f32 %v3846, 0.0
      %v3879 = vmax.f32 %v3847, 0.0
      %v3880 = vmax.f32 %v3848, 0.0
      %v3881 = vmax.f32 %v3849, 0.0
      %v3882 = vmax.f32 %v3850, 0.0
      %v3883 = vmax.f32 %v3851, 0.0
      %v3884 = vmax.f32 %v3852, 0.0
      %v3885 = vmax.f32 %v3853, 0.0
      %v3886 = vmax.f32 %v3854, 0.0
      %v3887 = vmax.f32 %v3855, 0.0
      %v3888 = vmax.f32 %v3856, 0.0
      %v3889 = vmax.f32 %v3857, 0.0
      %v3890 = vmax.f32 %v3858, 0.0
      %v3891 = vmax.f32 %v3859, 0.0
      %v3892 = vmax.f32 %v3860, 0.0
      %vm3893 = vcmask 31744
      %3894 = vst.msk [vmem:[%s325] sm:$0xff] %vm3893, %v3861
      %3895 = vst.msk [vmem:[%s325 + $0x8] sm:$0xff] %vm3893, %v3862
      %3896 = vst.msk [vmem:[%s325 + $0x10] sm:$0xff] %vm3893, %v3863
      %3897 = vst.msk [vmem:[%s325 + $0x18] sm:$0xff] %vm3893, %v3864
      %3898 = vst.msk [vmem:[%s325 + $0x20] sm:$0xff] %vm3893, %v3865
      %3899 = vst.msk [vmem:[%s325 + $0x28] sm:$0xff] %vm3893, %v3866
      %3900 = vst.msk [vmem:[%s325 + $0x30] sm:$0xff] %vm3893, %v3867
      %3901 = vst.msk [vmem:[%s325 + $0x38] sm:$0xff] %vm3893, %v3868
      %3902 = vst.msk [vmem:[%s325 + $0x40] sm:$0xff] %vm3893, %v3869
      %3903 = vst.msk [vmem:[%s325 + $0x48] sm:$0xff] %vm3893, %v3870
      %3904 = vst.msk [vmem:[%s325 + $0x50] sm:$0xff] %vm3893, %v3871
      %3905 = vst.msk [vmem:[%s325 + $0x58] sm:$0xff] %vm3893, %v3872
      %3906 = vst.msk [vmem:[%s325 + $0x60] sm:$0xff] %vm3893, %v3873
      %3907 = vst.msk [vmem:[%s325 + $0x68] sm:$0xff] %vm3893, %v3874
      %3908 = vst.msk [vmem:[%s325 + $0x70] sm:$0xff] %vm3893, %v3875
      %3909 = vst.msk [vmem:[%s325 + $0x78] sm:$0xff] %vm3893, %v3876
      %3910 = vst.msk [vmem:[%s325 + $0x80] sm:$0xff] %vm3893, %v3877
      %3911 = vst.msk [vmem:[%s325 + $0x88] sm:$0xff] %vm3893, %v3878
      %3912 = vst.msk [vmem:[%s325 + $0x90] sm:$0xff] %vm3893, %v3879
      %3913 = vst.msk [vmem:[%s325 + $0x98] sm:$0xff] %vm3893, %v3880
      %3914 = vst.msk [vmem:[%s325 + $0xa0] sm:$0xff] %vm3893, %v3881
      %3915 = vst.msk [vmem:[%s325 + $0xa8] sm:$0xff] %vm3893, %v3882
      %3916 = vst.msk [vmem:[%s325 + $0xb0] sm:$0xff] %vm3893, %v3883
      %3917 = vst.msk [vmem:[%s325 + $0xb8] sm:$0xff] %vm3893, %v3884
      %3918 = vst.msk [vmem:[%s325 + $0xc0] sm:$0xff] %vm3893, %v3885
      %3919 = vst.msk [vmem:[%s325 + $0xc8] sm:$0xff] %vm3893, %v3886
      %3920 = vst.msk [vmem:[%s325 + $0xd0] sm:$0xff] %vm3893, %v3887
      %3921 = vst.msk [vmem:[%s325 + $0xd8] sm:$0xff] %vm3893, %v3888
      %3922 = vst.msk [vmem:[%s325 + $0xe0] sm:$0xff] %vm3893, %v3889
      %3923 = vst.msk [vmem:[%s325 + $0xe8] sm:$0xff] %vm3893, %v3890
      %3924 = vst.msk [vmem:[%s325 + $0xf0] sm:$0xff] %vm3893, %v3891
      %3925 = vst.msk [vmem:[%s325 + $0xf8] sm:$0xff] %vm3893, %v3892
      %p3926 = scmp.lt.s32.totalorder %s19, 1
      %s3927 = scalar_select %p3926, %s19, 1
      %s3928 = smul.addr %s3927, 32
      %s3929 = smul.addr %s3928, 8
      %s3930 = scalar_lea.vmem %s8, %s3929
      // Predicated region
      $region53: #{up_block_forward.3} parent=51 // pred_check
        %p3931 = pneg %p215
      $region54: #{up_block_forward.3} parent=51 // pred_check_branch
        %3933 = sbr.rel (%p3931) target = $region56
      $region55: #{up_block_forward.3} parent=51 // pred_region
        _
      $region56: #{up_block_forward.3} parent=51 // pred_fallthru
        _
    $region52: #{up_block_forward.3} parent=5 // pred_fallthru
      _
    %p3934 = scmp.le.s32.totalorder 2, %s14
    // Predicated region
    $region57: #{up_block_forward.3} parent=5 // pred_check
      %p3935 = pneg %p3934
    $region58: #{up_block_forward.3} parent=5 // pred_check_branch
      %3937 = sbr.rel (%p3935) target = $region60
    $region59: #{up_block_forward.3} parent=5 // pred_region
      %s3938 = ssub.s32 %s14, 2
      // Predicated region
      $region61: #{up_block_forward.3} parent=59 // pred_check
        %p3939 = pneg %p221
      $region62: #{up_block_forward.3} parent=59 // pred_check_branch
        %3941 = sbr.rel (%p3939) target = $region64
      $region63: #{up_block_forward.3} parent=59 // pred_region
        %p3942 = scmp.lt.s32.totalorder %s20, 1
        %s3943 = scalar_select %p3942, %s20, 1
        %s3944 = smul.addr %s3943, 32
        %s3945 = smul.addr %s3944, 8
        %s3946 = scalar_lea.vmem %s8, %s3945
      $region64: #{up_block_forward.3} parent=59 // pred_fallthru
        _
    $region60: #{up_block_forward.3} parent=5 // pred_fallthru
      _
  $region6: #{up_block_forward.3} parent=0 // loop_footer
    %s18 = sadd.s32 1, %s14
  $region7: #{up_block_forward.3} parent=0 // loop_footer_branch
    %13 = sbr.rel target = $region3
  $region8: #{up_block_forward.3} parent=0 // loop_exit
    _

</llo_original>
